<compile_context>
chip_gen: v5e
topology: v5e:2x2
jax: 0.10.0
libtpu: 0.0.40
codegen_flags: <defaults>
</compile_context>

<pallas_src>
import math
from functools import partial

import numpy as np
import jax
import jax.numpy as jnp
from jax import lax
from jax.experimental import pallas as pl
from jax.experimental.pallas import tpu as pltpu


# ----------------------------------------------------------------------------
# helpers
# ----------------------------------------------------------------------------
def _gelu(x):
    # tanh approximation of GELU (see TODO above).
    c = 0.7978845608028654  # sqrt(2/pi)
    return 0.5 * x * (1.0 + jnp.tanh(c * (x + 0.044715 * x * x * x)))


def make_tap_masks(H, W):
    """(9, 1, N) float mask: mask[k, 0, n] == 1 iff tap k of pixel n is in-bounds."""
    N = H * W
    m = np.zeros((9, 1, N), np.float32)
    for kh in range(3):
        for kw in range(3):
            dh_, dw_ = kh - 1, kw - 1
            for n in range(N):
                h, w = divmod(n, W)
                if 0 <= h + dh_ < H and 0 <= w + dw_ < W:
                    m[kh * 3 + kw, 0, n] = 1.0
    return jnp.asarray(m)


def _dw_conv3x3(x_cn, w_ref, mask_ref, W):
    """Masked 3x3 depthwise conv with zero padding on (C, N=H*W) data.

    w_ref    : (9, C, 1) per-tap per-channel weights (BN scale already folded).
    mask_ref : (9, 1, N) shared boundary mask.
    Per tap:  acc += roll(x, -s) * w[k] * mask[k]   (two VPU broadcast muls;
    the XLU roll and VPU muls run in separate bundle slots).
    """
    N = x_cn.shape[-1]
    acc = None
    for kh in range(3):
        for kw in range(3):
            k = kh * 3 + kw
            s = (kh - 1) * W + (kw - 1)
            rolled = x_cn if s == 0 else pltpu.roll(x_cn, shift=(-s) % N, axis=1)
            term = rolled * w_ref[k] * mask_ref[k]        # (C,N)*(C,1)*(1,N)
            acc = term if acc is None else acc + term
    return acc


# ----------------------------------------------------------------------------
# Fused kernel: DWPWConv + SAttention + residual + GELU   (one batch sample)
# ----------------------------------------------------------------------------
def gfm_kernel(x_ref, d_ref,
               wdwx_ref, wdwd_ref, mask_ref,
               pww_ref, wqkv_ref, lcw_ref, wp_ref, bias_ref,
               out_ref,
               *, W, num_heads):
    f32 = jnp.float32
    bf16 = jnp.bfloat16

    x = x_ref[0]                                          # (C, N) f32
    d = d_ref[0]                                          # (C, N) f32
    C, N = x.shape
    dh = C // num_heads
    scale = dh ** (-0.5)

    # packed biases: [dwb_x | dwb_d | pwb | bqkv(3C) | lcb | bp]  -> (8C, 1)
    b_all = bias_ref[...]
    dwb_x = b_all[0 * C:1 * C]
    dwb_d = b_all[1 * C:2 * C]
    pwb = b_all[2 * C:3 * C]
    bqkv = b_all[3 * C:6 * C]
    lcb = b_all[6 * C:7 * C]
    bp = b_all[7 * C:8 * C]

    # ---------------- DWPWConv(2C -> C) ----------------
    # depthwise 3x3 on cat([x, d]) split into its two channel halves (no
    # materialized concat); BN1 scale folded into the tap weights.
    h1x = _gelu(_dw_conv3x3(x, wdwx_ref, mask_ref, W) + dwb_x)
    h1d = _gelu(_dw_conv3x3(d, wdwd_ref, mask_ref, W) + dwb_d)
    # single pointwise 1x1 matmul over the concatenated 2C channels
    # (BN2 scale folded into pww); bf16 MXU operands, f32 accumulate.
    h1 = jnp.concatenate([h1x, h1d], axis=0).astype(bf16)          # (2C, N)
    xr = _gelu(jnp.dot(pww_ref[...], h1, preferred_element_type=f32) + pwb)

    # ---------------- SAttention ----------------
    # fused Q/K/V projection: one (3C, C) @ (C, N) MXU matmul
    qkv = jnp.dot(wqkv_ref[...], xr.astype(bf16),
                  preferred_element_type=f32) + bqkv                # (3C, N)
    q = qkv[0:C]
    k = qkv[C:2 * C]
    v = qkv[2 * C:3 * C]

    # fold the softmax scale into q once (cheaper than scaling (N,N) scores),
    # cast MXU operands to bf16.
    q_bf = (q * scale).astype(bf16)
    k_bf = k.astype(bf16)

    # per-head fused scores -> softmax -> P.V  (peak live score tensor: one
    # (N, N) block instead of (heads*N, N)); outputs gathered as values.
    o_list = []
    for h in range(num_heads):
        q_h = q_bf[h * dh:(h + 1) * dh]                   # (dh, N) bf16
        k_h = k_bf[h * dh:(h + 1) * dh]                   # (dh, N) bf16
        s_h = lax.dot_general(q_h, k_h, (((0,), (0,)), ((), ())),
                              preferred_element_type=f32)            # (N, N)
        s_h = s_h - jnp.max(s_h, axis=-1, keepdims=True)
        e = jnp.exp(s_h)
        p_h = e * pl.reciprocal(jnp.sum(e, axis=-1, keepdims=True), approx=True)
        v_h = v[h * dh:(h + 1) * dh].astype(bf16)         # (dh, N) bf16
        o_h = lax.dot_general(v_h, p_h.astype(bf16), (((1,), (1,)), ((), ())),
                              preferred_element_type=f32)            # (dh, N)
        o_list.append(o_h)
    attn_out = jnp.concatenate(o_list, axis=0)            # (C, N) f32

    # local depthwise 3x3 conv on the full v
    lc = _dw_conv3x3(v, lcw_ref, mask_ref, W) + lcb

    # fused output projection: proj(attn_out + local_conv) = Wp @ (o + lc) + bp
    y = (attn_out + lc).astype(bf16)
    z = jnp.dot(wp_ref[...], y, preferred_element_type=f32) + bp

    # residual with the original x, final GELU
    out_ref[0] = _gelu(z + x)


# ----------------------------------------------------------------------------
# Parameters (deterministic, synthetic; shapes follow the PyTorch __init__)
# ----------------------------------------------------------------------------
def init_params(key, C):
    C2 = 2 * C
    eps = 1e-5
    ks = jax.random.split(key, 10)

    # --- DWPWConv(2C -> C) ---
    dw_w = jax.random.normal(ks[0], (9, C2), jnp.float32) * math.sqrt(2.0 / 9.0)
    pw_w = jax.random.normal(ks[1], (C, C2), jnp.float32) * math.sqrt(2.0 / C)   # (out, in)
    # BN (inference mode, synthetic running stats), conv biases zero (module init)
    bn1_m = 0.1 * jax.random.normal(ks[2], (C2,), jnp.float32)
    bn1_v = jax.random.uniform(ks[3], (C2,), jnp.float32, 0.5, 1.5)
    bn2_m = 0.1 * jax.random.normal(ks[4], (C,), jnp.float32)
    bn2_v = jax.random.uniform(ks[5], (C,), jnp.float32, 0.5, 1.5)
    dw_scale = 1.0 / jnp.sqrt(bn1_v + eps)
    dw_bias = (0.0 - bn1_m) * dw_scale
    pw_scale = 1.0 / jnp.sqrt(bn2_v + eps)
    pw_bias = (0.0 - bn2_m) * pw_scale

    # --- SAttention(dim=C, heads=8) ---
    Wq = jax.random.normal(ks[6], (C, C), jnp.float32) * 0.02      # (out, in)
    bq = jnp.zeros((C,), jnp.float32)
    Wkv = jax.random.normal(ks[7], (2 * C, C), jnp.float32) * 0.02
    bkv = jnp.zeros((2 * C,), jnp.float32)
    lc_w = jax.random.normal(ks[8], (9, C), jnp.float32) * math.sqrt(2.0 / 9.0)
    lc_b = jnp.zeros((C,), jnp.float32)
    Wp = jax.random.normal(ks[9], (C, C), jnp.float32) * 0.02
    bp = jnp.zeros((C,), jnp.float32)

    return dict(dw_w=dw_w, dw_scale=dw_scale, dw_bias=dw_bias,
                pw_w=pw_w, pw_scale=pw_scale, pw_bias=pw_bias,
                Wq=Wq, bq=bq, Wkv=Wkv, bkv=bkv,
                lc_w=lc_w, lc_b=lc_b, Wp=Wp, bp=bp)


# ----------------------------------------------------------------------------
# Pallas wrapper (GFM.forward, expend_ratio == 2)
# ----------------------------------------------------------------------------
def gfm_pallas(x, d, P, num_heads=8):
    B, C, H, W = x.shape
    N = H * W
    assert C % num_heads == 0
    f32 = jnp.float32
    bf16 = jnp.bfloat16

    xf = x.reshape(B, C, N).astype(f32)
    df = d.reshape(B, C, N).astype(f32)

    mask = make_tap_masks(H, W)                            # (9, 1, N) shared mask

    # ---- fold BN1 scale into depthwise taps (NOT pre-broadcast over N) ----
    dw_scaled = P['dw_w'] * P['dw_scale'][None, :]         # (9, 2C)
    wdwx = dw_scaled[:, :C, None]                          # (9, C, 1)
    wdwd = dw_scaled[:, C:, None]                          # (9, C, 1)

    # ---- fold BN2 scale into the (single) pointwise weight ----
    pww = (P['pw_scale'][:, None] * P['pw_w']).astype(bf16)   # (C, 2C)

    # ---- fused QKV weight ----
    wqkv = jnp.concatenate([P['Wq'], P['Wkv']], axis=0).astype(bf16)   # (3C, C)

    # ---- local conv taps (per-channel, mask applied in-kernel) ----
    lcw = P['lc_w'][:, :, None]                            # (9, C, 1)
    wp = P['Wp'].astype(bf16)                              # (C, C)

    # ---- all small biases packed into one (8C, 1) stream ----
    biases = jnp.concatenate(
        [P['dw_bias'][:C], P['dw_bias'][C:], P['pw_bias'],
         P['bq'], P['bkv'], P['lc_b'], P['bp']], axis=0).reshape(8 * C, 1)

    def const_spec(shape):
        nd = len(shape)
        return pl.BlockSpec(shape, lambda b, nd=nd: (0,) * nd)

    grid_spec = pltpu.PrefetchScalarGridSpec(
        num_scalar_prefetch=0,
        grid=(B,),
        in_specs=[
            pl.BlockSpec((1, C, N), lambda b: (b, 0, 0)),   # x
            pl.BlockSpec((1, C, N), lambda b: (b, 0, 0)),   # d
            const_spec((9, C, 1)),     # wdwx (dw taps * BN scale, x half)
            const_spec((9, C, 1)),     # wdwd (dw taps * BN scale, d half)
            const_spec((9, 1, N)),     # shared boundary mask
            const_spec((C, 2 * C)),    # pww  (bf16, BN2 folded)
            const_spec((3 * C, C)),    # wqkv (bf16)
            const_spec((9, C, 1)),     # lcw  (local conv taps)
            const_spec((C, C)),        # wp   (bf16)
            const_spec((8 * C, 1)),    # packed biases
        ],
        out_specs=pl.BlockSpec((1, C, N), lambda b: (b, 0, 0)),
    )

    out = pl.pallas_call(
        partial(gfm_kernel, W=W, num_heads=num_heads),
        out_shape=jax.ShapeDtypeStruct((B, C, N), f32),
        grid_spec=grid_spec,
        compiler_params=pltpu.CompilerParams(
            dimension_semantics=("parallel",)),
    )(xf, df, wdwx, wdwd, mask, pww, wqkv, lcw, wp, biases)

    return out.reshape(B, C, H, W)


# ----------------------------------------------------------------------------
# Pure-JAX reference (token/NHWC formulation) for verification
# ----------------------------------------------------------------------------
def gfm_reference(x, d, P, num_heads=8):
    B, C, H, W = x.shape
    N = H * W
    C2 = 2 * C
    DH = C // num_heads

    xn = jnp.transpose(x, (0, 2, 3, 1))
    dn = jnp.transpose(d, (0, 2, 3, 1))
    cat = jnp.concatenate([xn, dn], -1)                       # (B,H,W,2C)
    catp = jnp.pad(cat, ((0, 0), (1, 1), (1, 1), (0, 0)))
    dw = jnp.zeros((B, H, W, C2), jnp.float32)
    for i in range(3):
        for j in range(3):
            dw = dw + catp[:, i:i + H, j:j + W, :] * P['dw_w'][i * 3 + j]
    h1 = _gelu(dw * P['dw_scale'] + P['dw_bias']).reshape(B, N, C2)
    h2 = jnp.einsum('bnc,oc->bno', h1, P['pw_w'])
    h2 = _gelu(h2 * P['pw_scale'] + P['pw_bias'])             # (B,N,C)

    q = jnp.einsum('bnc,oc->bno', h2, P['Wq']) + P['bq']
    kv = jnp.einsum('bnc,oc->bno', h2, P['Wkv']) + P['bkv']
    kt, vt = kv[..., :C], kv[..., C:]
    qh = q.reshape(B, N, num_heads, DH).transpose(0, 2, 1, 3)
    kh = kt.reshape(B, N, num_heads, DH).transpose(0, 2, 1, 3)
    vh = vt.reshape(B, N, num_heads, DH).transpose(0, 2, 1, 3)
    att = jnp.einsum('bhqd,bhkd->bhqk', qh, kh) * (DH ** -0.5)
    att = jax.nn.softmax(att, axis=-1)
    oa = jnp.einsum('bhqk,bhkd->bhqd', att, vh).transpose(0, 2, 1, 3).reshape(B, N, C)

    vimg = vt.reshape(B, H, W, C)
    vp = jnp.pad(vimg, ((0, 0), (1, 1), (1, 1), (0, 0)))
    lc = jnp.zeros((B, H, W, C), jnp.float32)
    for i in range(3):
        for j in range(3):
            lc = lc + vp[:, i:i + H, j:j + W, :] * P['lc_w'][i * 3 + j]
    lc = lc.reshape(B, N, C) + P['lc_b']

    y = oa + lc
    z = jnp.einsum('bnc,oc->bno', y, P['Wp']) + P['bp']
    out = _gelu(z + xn.reshape(B, N, C))
    return out.reshape(B, H, W, C).transpose(0, 3, 1, 2)


# ----------------------------------------------------------------------------
if __name__ == "__main__":
    # B=2 keeps both v7x TensorCores busy via the parallel batch grid axis.
    B, C, H, W = 2, 32, 8, 16      # C divisible by 8 heads; N = H*W = 128 lanes
    key = jax.random.PRNGKey(0)
    kx, kd, kp = jax.random.split(key, 3)
    x = jax.random.normal(kx, (B, C, H, W), jnp.float32)
    d = jax.random.normal(kd, (B, C, H, W), jnp.float32)
    P = init_params(kp, C)

    out = jax.jit(lambda a, b: gfm_pallas(a, b, P))(x, d)
    out = jax.block_until_ready(out)

    ref = gfm_reference(x, d, P)
    err = float(jnp.max(jnp.abs(out - ref)))
    assert out.shape == (B, C, H, W), out.shape
    # bf16 MXU operands + approx reciprocal give ~1e-3-level abs error vs the
    # f32 reference; 2e-2 tolerance documents that budget explicitly.
    assert err < 2e-2, f"max abs err vs reference: {err}"
    print("KERNEL_OK")
</pallas_src>

<mosaic_0001>
module attributes {stable_mosaic.version = 11 : i64} {
  func.func @gfm_kernel(%arg0: i32, %arg1: memref<1x32x128xf32, #tpu.memory_space<vmem>>, %arg2: memref<1x32x128xf32, #tpu.memory_space<vmem>>, %arg3: memref<9x32x1xf32, #tpu.memory_space<vmem>>, %arg4: memref<9x32x1xf32, #tpu.memory_space<vmem>>, %arg5: memref<9x1x128xf32, #tpu.memory_space<vmem>>, %arg6: memref<32x64xbf16, #tpu.memory_space<vmem>>, %arg7: memref<96x32xbf16, #tpu.memory_space<vmem>>, %arg8: memref<9x32x1xf32, #tpu.memory_space<vmem>>, %arg9: memref<32x32xbf16, #tpu.memory_space<vmem>>, %arg10: memref<256x1xf32, #tpu.memory_space<vmem>>, %arg11: memref<1x32x128xf32, #tpu.memory_space<vmem>>) attributes {dimension_semantics = [#tpu.dimension_semantics<parallel>], iteration_bounds = array<i64: 2>, scalar_prefetch = 0 : i64, scratch_operands = 0 : i64, tpu.core_type = #tpu.core_type<tc>, window_params = [{transform_indices = @transform_0, window_bounds = array<i64: 1, 32, 128>}, {transform_indices = @transform_1, window_bounds = array<i64: 1, 32, 128>}, {pipeline_mode = #tpu.pipeline_mode<synchronous>, transform_indices = @transform_2, window_bounds = array<i64: 9, 32, 1>}, {pipeline_mode = #tpu.pipeline_mode<synchronous>, transform_indices = @transform_3, window_bounds = array<i64: 9, 32, 1>}, {pipeline_mode = #tpu.pipeline_mode<synchronous>, transform_indices = @transform_4, window_bounds = array<i64: 9, 1, 128>}, {pipeline_mode = #tpu.pipeline_mode<synchronous>, transform_indices = @transform_5, window_bounds = array<i64: 32, 64>}, {pipeline_mode = #tpu.pipeline_mode<synchronous>, transform_indices = @transform_6, window_bounds = array<i64: 96, 32>}, {pipeline_mode = #tpu.pipeline_mode<synchronous>, transform_indices = @transform_7, window_bounds = array<i64: 9, 32, 1>}, {pipeline_mode = #tpu.pipeline_mode<synchronous>, transform_indices = @transform_8, window_bounds = array<i64: 32, 32>}, {pipeline_mode = #tpu.pipeline_mode<synchronous>, transform_indices = @transform_9, window_bounds = array<i64: 256, 1>}, {transform_indices = @transform_10, window_bounds = array<i64: 1, 32, 128>}]} {
    %c0 = arith.constant 0 : index
    %c0_0 = arith.constant 0 : index
    %c0_1 = arith.constant 0 : index
    %0 = vector.load %arg1[%c0, %c0_0, %c0_1] : memref<1x32x128xf32, #tpu.memory_space<vmem>>, vector<1x32x128xf32>
    %1 = vector.shape_cast %0 : vector<1x32x128xf32> to vector<32x128xf32>
    %c0_2 = arith.constant 0 : index
    %c0_3 = arith.constant 0 : index
    %c0_4 = arith.constant 0 : index
    %2 = vector.load %arg2[%c0_2, %c0_3, %c0_4] : memref<1x32x128xf32, #tpu.memory_space<vmem>>, vector<1x32x128xf32>
    %3 = vector.shape_cast %2 : vector<1x32x128xf32> to vector<32x128xf32>
    %c0_5 = arith.constant 0 : index
    %c0_6 = arith.constant 0 : index
    %4 = vector.load %arg10[%c0_5, %c0_6] : memref<256x1xf32, #tpu.memory_space<vmem>>, vector<256x1xf32>
    %5 = vector.extract_strided_slice %4 {offsets = [0, 0], sizes = [32, 1], strides = [1, 1]} : vector<256x1xf32> to vector<32x1xf32>
    %6 = vector.extract_strided_slice %4 {offsets = [32, 0], sizes = [32, 1], strides = [1, 1]} : vector<256x1xf32> to vector<32x1xf32>
    %7 = vector.extract_strided_slice %4 {offsets = [64, 0], sizes = [32, 1], strides = [1, 1]} : vector<256x1xf32> to vector<32x1xf32>
    %8 = vector.extract_strided_slice %4 {offsets = [96, 0], sizes = [96, 1], strides = [1, 1]} : vector<256x1xf32> to vector<96x1xf32>
    %9 = vector.extract_strided_slice %4 {offsets = [192, 0], sizes = [32, 1], strides = [1, 1]} : vector<256x1xf32> to vector<32x1xf32>
    %10 = vector.extract_strided_slice %4 {offsets = [224, 0], sizes = [32, 1], strides = [1, 1]} : vector<256x1xf32> to vector<32x1xf32>
    %c17_i32 = arith.constant 17 : i32
    %11 = tpu.dynamic_rotate %1 by %c17_i32 dim 1 : vector<32x128xf32>, i32 -> vector<32x128xf32>
    %c0_7 = arith.constant 0 : index
    %c0_8 = arith.constant 0 : index
    %c0_9 = arith.constant 0 : index
    %12 = vector.load %arg3[%c0_7, %c0_8, %c0_9] : memref<9x32x1xf32, #tpu.memory_space<vmem>>, vector<1x32x1xf32>
    %13 = vector.shape_cast %12 : vector<1x32x1xf32> to vector<32x1xf32>
    %14 = vector.broadcast %13 : vector<32x1xf32> to vector<32x128xf32>
    %15 = arith.mulf %11, %14 : vector<32x128xf32>
    %c0_10 = arith.constant 0 : index
    %c0_11 = arith.constant 0 : index
    %c0_12 = arith.constant 0 : index
    %16 = vector.load %arg5[%c0_10, %c0_11, %c0_12] : memref<9x1x128xf32, #tpu.memory_space<vmem>>, vector<1x1x128xf32>
    %17 = vector.shape_cast %16 : vector<1x1x128xf32> to vector<1x128xf32>
    %18 = vector.broadcast %17 : vector<1x128xf32> to vector<32x128xf32>
    %19 = arith.mulf %15, %18 : vector<32x128xf32>
    %c16_i32 = arith.constant 16 : i32
    %20 = tpu.dynamic_rotate %1 by %c16_i32 dim 1 : vector<32x128xf32>, i32 -> vector<32x128xf32>
    %c1 = arith.constant 1 : index
    %c0_13 = arith.constant 0 : index
    %c0_14 = arith.constant 0 : index
    %21 = vector.load %arg3[%c1, %c0_13, %c0_14] : memref<9x32x1xf32, #tpu.memory_space<vmem>>, vector<1x32x1xf32>
    %22 = vector.shape_cast %21 : vector<1x32x1xf32> to vector<32x1xf32>
    %23 = vector.broadcast %22 : vector<32x1xf32> to vector<32x128xf32>
    %24 = arith.mulf %20, %23 : vector<32x128xf32>
    %c1_15 = arith.constant 1 : index
    %c0_16 = arith.constant 0 : index
    %c0_17 = arith.constant 0 : index
    %25 = vector.load %arg5[%c1_15, %c0_16, %c0_17] : memref<9x1x128xf32, #tpu.memory_space<vmem>>, vector<1x1x128xf32>
    %26 = vector.shape_cast %25 : vector<1x1x128xf32> to vector<1x128xf32>
    %27 = vector.broadcast %26 : vector<1x128xf32> to vector<32x128xf32>
    %28 = arith.mulf %24, %27 : vector<32x128xf32>
    %29 = arith.addf %19, %28 : vector<32x128xf32>
    %c15_i32 = arith.constant 15 : i32
    %30 = tpu.dynamic_rotate %1 by %c15_i32 dim 1 : vector<32x128xf32>, i32 -> vector<32x128xf32>
    %c2 = arith.constant 2 : index
    %c0_18 = arith.constant 0 : index
    %c0_19 = arith.constant 0 : index
    %31 = vector.load %arg3[%c2, %c0_18, %c0_19] : memref<9x32x1xf32, #tpu.memory_space<vmem>>, vector<1x32x1xf32>
    %32 = vector.shape_cast %31 : vector<1x32x1xf32> to vector<32x1xf32>
    %33 = vector.broadcast %32 : vector<32x1xf32> to vector<32x128xf32>
    %34 = arith.mulf %30, %33 : vector<32x128xf32>
    %c2_20 = arith.constant 2 : index
    %c0_21 = arith.constant 0 : index
    %c0_22 = arith.constant 0 : index
    %35 = vector.load %arg5[%c2_20, %c0_21, %c0_22] : memref<9x1x128xf32, #tpu.memory_space<vmem>>, vector<1x1x128xf32>
    %36 = vector.shape_cast %35 : vector<1x1x128xf32> to vector<1x128xf32>
    %37 = vector.broadcast %36 : vector<1x128xf32> to vector<32x128xf32>
    %38 = arith.mulf %34, %37 : vector<32x128xf32>
    %39 = arith.addf %29, %38 : vector<32x128xf32>
    %c1_i32 = arith.constant 1 : i32
    %40 = tpu.dynamic_rotate %1 by %c1_i32 dim 1 : vector<32x128xf32>, i32 -> vector<32x128xf32>
    %c3 = arith.constant 3 : index
    %c0_23 = arith.constant 0 : index
    %c0_24 = arith.constant 0 : index
    %41 = vector.load %arg3[%c3, %c0_23, %c0_24] : memref<9x32x1xf32, #tpu.memory_space<vmem>>, vector<1x32x1xf32>
    %42 = vector.shape_cast %41 : vector<1x32x1xf32> to vector<32x1xf32>
    %43 = vector.broadcast %42 : vector<32x1xf32> to vector<32x128xf32>
    %44 = arith.mulf %40, %43 : vector<32x128xf32>
    %c3_25 = arith.constant 3 : index
    %c0_26 = arith.constant 0 : index
    %c0_27 = arith.constant 0 : index
    %45 = vector.load %arg5[%c3_25, %c0_26, %c0_27] : memref<9x1x128xf32, #tpu.memory_space<vmem>>, vector<1x1x128xf32>
    %46 = vector.shape_cast %45 : vector<1x1x128xf32> to vector<1x128xf32>
    %47 = vector.broadcast %46 : vector<1x128xf32> to vector<32x128xf32>
    %48 = arith.mulf %44, %47 : vector<32x128xf32>
    %49 = arith.addf %39, %48 : vector<32x128xf32>
    %c4 = arith.constant 4 : index
    %c0_28 = arith.constant 0 : index
    %c0_29 = arith.constant 0 : index
    %50 = vector.load %arg3[%c4, %c0_28, %c0_29] : memref<9x32x1xf32, #tpu.memory_space<vmem>>, vector<1x32x1xf32>
    %51 = vector.shape_cast %50 : vector<1x32x1xf32> to vector<32x1xf32>
    %52 = vector.broadcast %51 : vector<32x1xf32> to vector<32x128xf32>
    %53 = arith.mulf %1, %52 : vector<32x128xf32>
    %c4_30 = arith.constant 4 : index
    %c0_31 = arith.constant 0 : index
    %c0_32 = arith.constant 0 : index
    %54 = vector.load %arg5[%c4_30, %c0_31, %c0_32] : memref<9x1x128xf32, #tpu.memory_space<vmem>>, vector<1x1x128xf32>
    %55 = vector.shape_cast %54 : vector<1x1x128xf32> to vector<1x128xf32>
    %56 = vector.broadcast %55 : vector<1x128xf32> to vector<32x128xf32>
    %57 = arith.mulf %53, %56 : vector<32x128xf32>
    %58 = arith.addf %49, %57 : vector<32x128xf32>
    %c127_i32 = arith.constant 127 : i32
    %59 = tpu.dynamic_rotate %1 by %c127_i32 dim 1 : vector<32x128xf32>, i32 -> vector<32x128xf32>
    %c5 = arith.constant 5 : index
    %c0_33 = arith.constant 0 : index
    %c0_34 = arith.constant 0 : index
    %60 = vector.load %arg3[%c5, %c0_33, %c0_34] : memref<9x32x1xf32, #tpu.memory_space<vmem>>, vector<1x32x1xf32>
    %61 = vector.shape_cast %60 : vector<1x32x1xf32> to vector<32x1xf32>
    %62 = vector.broadcast %61 : vector<32x1xf32> to vector<32x128xf32>
    %63 = arith.mulf %59, %62 : vector<32x128xf32>
    %c5_35 = arith.constant 5 : index
    %c0_36 = arith.constant 0 : index
    %c0_37 = arith.constant 0 : index
    %64 = vector.load %arg5[%c5_35, %c0_36, %c0_37] : memref<9x1x128xf32, #tpu.memory_space<vmem>>, vector<1x1x128xf32>
    %65 = vector.shape_cast %64 : vector<1x1x128xf32> to vector<1x128xf32>
    %66 = vector.broadcast %65 : vector<1x128xf32> to vector<32x128xf32>
    %67 = arith.mulf %63, %66 : vector<32x128xf32>
    %68 = arith.addf %58, %67 : vector<32x128xf32>
    %c113_i32 = arith.constant 113 : i32
    %69 = tpu.dynamic_rotate %1 by %c113_i32 dim 1 : vector<32x128xf32>, i32 -> vector<32x128xf32>
    %c6 = arith.constant 6 : index
    %c0_38 = arith.constant 0 : index
    %c0_39 = arith.constant 0 : index
    %70 = vector.load %arg3[%c6, %c0_38, %c0_39] : memref<9x32x1xf32, #tpu.memory_space<vmem>>, vector<1x32x1xf32>
    %71 = vector.shape_cast %70 : vector<1x32x1xf32> to vector<32x1xf32>
    %72 = vector.broadcast %71 : vector<32x1xf32> to vector<32x128xf32>
    %73 = arith.mulf %69, %72 : vector<32x128xf32>
    %c6_40 = arith.constant 6 : index
    %c0_41 = arith.constant 0 : index
    %c0_42 = arith.constant 0 : index
    %74 = vector.load %arg5[%c6_40, %c0_41, %c0_42] : memref<9x1x128xf32, #tpu.memory_space<vmem>>, vector<1x1x128xf32>
    %75 = vector.shape_cast %74 : vector<1x1x128xf32> to vector<1x128xf32>
    %76 = vector.broadcast %75 : vector<1x128xf32> to vector<32x128xf32>
    %77 = arith.mulf %73, %76 : vector<32x128xf32>
    %78 = arith.addf %68, %77 : vector<32x128xf32>
    %c112_i32 = arith.constant 112 : i32
    %79 = tpu.dynamic_rotate %1 by %c112_i32 dim 1 : vector<32x128xf32>, i32 -> vector<32x128xf32>
    %c7 = arith.constant 7 : index
    %c0_43 = arith.constant 0 : index
    %c0_44 = arith.constant 0 : index
    %80 = vector.load %arg3[%c7, %c0_43, %c0_44] : memref<9x32x1xf32, #tpu.memory_space<vmem>>, vector<1x32x1xf32>
    %81 = vector.shape_cast %80 : vector<1x32x1xf32> to vector<32x1xf32>
    %82 = vector.broadcast %81 : vector<32x1xf32> to vector<32x128xf32>
    %83 = arith.mulf %79, %82 : vector<32x128xf32>
    %c7_45 = arith.constant 7 : index
    %c0_46 = arith.constant 0 : index
    %c0_47 = arith.constant 0 : index
    %84 = vector.load %arg5[%c7_45, %c0_46, %c0_47] : memref<9x1x128xf32, #tpu.memory_space<vmem>>, vector<1x1x128xf32>
    %85 = vector.shape_cast %84 : vector<1x1x128xf32> to vector<1x128xf32>
    %86 = vector.broadcast %85 : vector<1x128xf32> to vector<32x128xf32>
    %87 = arith.mulf %83, %86 : vector<32x128xf32>
    %88 = arith.addf %78, %87 : vector<32x128xf32>
    %c111_i32 = arith.constant 111 : i32
    %89 = tpu.dynamic_rotate %1 by %c111_i32 dim 1 : vector<32x128xf32>, i32 -> vector<32x128xf32>
    %c8 = arith.constant 8 : index
    %c0_48 = arith.constant 0 : index
    %c0_49 = arith.constant 0 : index
    %90 = vector.load %arg3[%c8, %c0_48, %c0_49] : memref<9x32x1xf32, #tpu.memory_space<vmem>>, vector<1x32x1xf32>
    %91 = vector.shape_cast %90 : vector<1x32x1xf32> to vector<32x1xf32>
    %92 = vector.broadcast %91 : vector<32x1xf32> to vector<32x128xf32>
    %93 = arith.mulf %89, %92 : vector<32x128xf32>
    %c8_50 = arith.constant 8 : index
    %c0_51 = arith.constant 0 : index
    %c0_52 = arith.constant 0 : index
    %94 = vector.load %arg5[%c8_50, %c0_51, %c0_52] : memref<9x1x128xf32, #tpu.memory_space<vmem>>, vector<1x1x128xf32>
    %95 = vector.shape_cast %94 : vector<1x1x128xf32> to vector<1x128xf32>
    %96 = vector.broadcast %95 : vector<1x128xf32> to vector<32x128xf32>
    %97 = arith.mulf %93, %96 : vector<32x128xf32>
    %98 = arith.addf %88, %97 : vector<32x128xf32>
    %99 = vector.broadcast %5 : vector<32x1xf32> to vector<32x128xf32>
    %100 = arith.addf %98, %99 : vector<32x128xf32>
    %cst = arith.constant 5.000000e-01 : f32
    %101 = vector.broadcast %cst : f32 to vector<32x128xf32>
    %102 = arith.mulf %101, %100 : vector<32x128xf32>
    %cst_53 = arith.constant 4.471500e-02 : f32
    %103 = vector.broadcast %cst_53 : f32 to vector<32x128xf32>
    %104 = arith.mulf %103, %100 : vector<32x128xf32>
    %105 = arith.mulf %104, %100 : vector<32x128xf32>
    %106 = arith.mulf %105, %100 : vector<32x128xf32>
    %107 = arith.addf %100, %106 : vector<32x128xf32>
    %cst_54 = arith.constant 0.797884583 : f32
    %108 = vector.broadcast %cst_54 : f32 to vector<32x128xf32>
    %109 = arith.mulf %108, %107 : vector<32x128xf32>
    %110 = math.tanh %109 : vector<32x128xf32>
    %cst_55 = arith.constant 1.000000e+00 : f32
    %111 = vector.broadcast %cst_55 : f32 to vector<32x128xf32>
    %112 = arith.addf %111, %110 : vector<32x128xf32>
    %113 = arith.mulf %102, %112 : vector<32x128xf32>
    %c17_i32_56 = arith.constant 17 : i32
    %114 = tpu.dynamic_rotate %3 by %c17_i32_56 dim 1 : vector<32x128xf32>, i32 -> vector<32x128xf32>
    %c0_57 = arith.constant 0 : index
    %c0_58 = arith.constant 0 : index
    %c0_59 = arith.constant 0 : index
    %115 = vector.load %arg4[%c0_57, %c0_58, %c0_59] : memref<9x32x1xf32, #tpu.memory_space<vmem>>, vector<1x32x1xf32>
    %116 = vector.shape_cast %115 : vector<1x32x1xf32> to vector<32x1xf32>
    %117 = vector.broadcast %116 : vector<32x1xf32> to vector<32x128xf32>
    %118 = arith.mulf %114, %117 : vector<32x128xf32>
    %c0_60 = arith.constant 0 : index
    %c0_61 = arith.constant 0 : index
    %c0_62 = arith.constant 0 : index
    %119 = vector.load %arg5[%c0_60, %c0_61, %c0_62] : memref<9x1x128xf32, #tpu.memory_space<vmem>>, vector<1x1x128xf32>
    %120 = vector.shape_cast %119 : vector<1x1x128xf32> to vector<1x128xf32>
    %121 = vector.broadcast %120 : vector<1x128xf32> to vector<32x128xf32>
    %122 = arith.mulf %118, %121 : vector<32x128xf32>
    %c16_i32_63 = arith.constant 16 : i32
    %123 = tpu.dynamic_rotate %3 by %c16_i32_63 dim 1 : vector<32x128xf32>, i32 -> vector<32x128xf32>
    %c1_64 = arith.constant 1 : index
    %c0_65 = arith.constant 0 : index
    %c0_66 = arith.constant 0 : index
    %124 = vector.load %arg4[%c1_64, %c0_65, %c0_66] : memref<9x32x1xf32, #tpu.memory_space<vmem>>, vector<1x32x1xf32>
    %125 = vector.shape_cast %124 : vector<1x32x1xf32> to vector<32x1xf32>
    %126 = vector.broadcast %125 : vector<32x1xf32> to vector<32x128xf32>
    %127 = arith.mulf %123, %126 : vector<32x128xf32>
    %c1_67 = arith.constant 1 : index
    %c0_68 = arith.constant 0 : index
    %c0_69 = arith.constant 0 : index
    %128 = vector.load %arg5[%c1_67, %c0_68, %c0_69] : memref<9x1x128xf32, #tpu.memory_space<vmem>>, vector<1x1x128xf32>
    %129 = vector.shape_cast %128 : vector<1x1x128xf32> to vector<1x128xf32>
    %130 = vector.broadcast %129 : vector<1x128xf32> to vector<32x128xf32>
    %131 = arith.mulf %127, %130 : vector<32x128xf32>
    %132 = arith.addf %122, %131 : vector<32x128xf32>
    %c15_i32_70 = arith.constant 15 : i32
    %133 = tpu.dynamic_rotate %3 by %c15_i32_70 dim 1 : vector<32x128xf32>, i32 -> vector<32x128xf32>
    %c2_71 = arith.constant 2 : index
    %c0_72 = arith.constant 0 : index
    %c0_73 = arith.constant 0 : index
    %134 = vector.load %arg4[%c2_71, %c0_72, %c0_73] : memref<9x32x1xf32, #tpu.memory_space<vmem>>, vector<1x32x1xf32>
    %135 = vector.shape_cast %134 : vector<1x32x1xf32> to vector<32x1xf32>
    %136 = vector.broadcast %135 : vector<32x1xf32> to vector<32x128xf32>
    %137 = arith.mulf %133, %136 : vector<32x128xf32>
    %c2_74 = arith.constant 2 : index
    %c0_75 = arith.constant 0 : index
    %c0_76 = arith.constant 0 : index
    %138 = vector.load %arg5[%c2_74, %c0_75, %c0_76] : memref<9x1x128xf32, #tpu.memory_space<vmem>>, vector<1x1x128xf32>
    %139 = vector.shape_cast %138 : vector<1x1x128xf32> to vector<1x128xf32>
    %140 = vector.broadcast %139 : vector<1x128xf32> to vector<32x128xf32>
    %141 = arith.mulf %137, %140 : vector<32x128xf32>
    %142 = arith.addf %132, %141 : vector<32x128xf32>
    %c1_i32_77 = arith.constant 1 : i32
    %143 = tpu.dynamic_rotate %3 by %c1_i32_77 dim 1 : vector<32x128xf32>, i32 -> vector<32x128xf32>
    %c3_78 = arith.constant 3 : index
    %c0_79 = arith.constant 0 : index
    %c0_80 = arith.constant 0 : index
    %144 = vector.load %arg4[%c3_78, %c0_79, %c0_80] : memref<9x32x1xf32, #tpu.memory_space<vmem>>, vector<1x32x1xf32>
    %145 = vector.shape_cast %144 : vector<1x32x1xf32> to vector<32x1xf32>
    %146 = vector.broadcast %145 : vector<32x1xf32> to vector<32x128xf32>
    %147 = arith.mulf %143, %146 : vector<32x128xf32>
    %c3_81 = arith.constant 3 : index
    %c0_82 = arith.constant 0 : index
    %c0_83 = arith.constant 0 : index
    %148 = vector.load %arg5[%c3_81, %c0_82, %c0_83] : memref<9x1x128xf32, #tpu.memory_space<vmem>>, vector<1x1x128xf32>
    %149 = vector.shape_cast %148 : vector<1x1x128xf32> to vector<1x128xf32>
    %150 = vector.broadcast %149 : vector<1x128xf32> to vector<32x128xf32>
    %151 = arith.mulf %147, %150 : vector<32x128xf32>
    %152 = arith.addf %142, %151 : vector<32x128xf32>
    %c4_84 = arith.constant 4 : index
    %c0_85 = arith.constant 0 : index
    %c0_86 = arith.constant 0 : index
    %153 = vector.load %arg4[%c4_84, %c0_85, %c0_86] : memref<9x32x1xf32, #tpu.memory_space<vmem>>, vector<1x32x1xf32>
    %154 = vector.shape_cast %153 : vector<1x32x1xf32> to vector<32x1xf32>
    %155 = vector.broadcast %154 : vector<32x1xf32> to vector<32x128xf32>
    %156 = arith.mulf %3, %155 : vector<32x128xf32>
    %c4_87 = arith.constant 4 : index
    %c0_88 = arith.constant 0 : index
    %c0_89 = arith.constant 0 : index
    %157 = vector.load %arg5[%c4_87, %c0_88, %c0_89] : memref<9x1x128xf32, #tpu.memory_space<vmem>>, vector<1x1x128xf32>
    %158 = vector.shape_cast %157 : vector<1x1x128xf32> to vector<1x128xf32>
    %159 = vector.broadcast %158 : vector<1x128xf32> to vector<32x128xf32>
    %160 = arith.mulf %156, %159 : vector<32x128xf32>
    %161 = arith.addf %152, %160 : vector<32x128xf32>
    %c127_i32_90 = arith.constant 127 : i32
    %162 = tpu.dynamic_rotate %3 by %c127_i32_90 dim 1 : vector<32x128xf32>, i32 -> vector<32x128xf32>
    %c5_91 = arith.constant 5 : index
    %c0_92 = arith.constant 0 : index
    %c0_93 = arith.constant 0 : index
    %163 = vector.load %arg4[%c5_91, %c0_92, %c0_93] : memref<9x32x1xf32, #tpu.memory_space<vmem>>, vector<1x32x1xf32>
    %164 = vector.shape_cast %163 : vector<1x32x1xf32> to vector<32x1xf32>
    %165 = vector.broadcast %164 : vector<32x1xf32> to vector<32x128xf32>
    %166 = arith.mulf %162, %165 : vector<32x128xf32>
    %c5_94 = arith.constant 5 : index
    %c0_95 = arith.constant 0 : index
    %c0_96 = arith.constant 0 : index
    %167 = vector.load %arg5[%c5_94, %c0_95, %c0_96] : memref<9x1x128xf32, #tpu.memory_space<vmem>>, vector<1x1x128xf32>
    %168 = vector.shape_cast %167 : vector<1x1x128xf32> to vector<1x128xf32>
    %169 = vector.broadcast %168 : vector<1x128xf32> to vector<32x128xf32>
    %170 = arith.mulf %166, %169 : vector<32x128xf32>
    %171 = arith.addf %161, %170 : vector<32x128xf32>
    %c113_i32_97 = arith.constant 113 : i32
    %172 = tpu.dynamic_rotate %3 by %c113_i32_97 dim 1 : vector<32x128xf32>, i32 -> vector<32x128xf32>
    %c6_98 = arith.constant 6 : index
    %c0_99 = arith.constant 0 : index
    %c0_100 = arith.constant 0 : index
    %173 = vector.load %arg4[%c6_98, %c0_99, %c0_100] : memref<9x32x1xf32, #tpu.memory_space<vmem>>, vector<1x32x1xf32>
    %174 = vector.shape_cast %173 : vector<1x32x1xf32> to vector<32x1xf32>
    %175 = vector.broadcast %174 : vector<32x1xf32> to vector<32x128xf32>
    %176 = arith.mulf %172, %175 : vector<32x128xf32>
    %c6_101 = arith.constant 6 : index
    %c0_102 = arith.constant 0 : index
    %c0_103 = arith.constant 0 : index
    %177 = vector.load %arg5[%c6_101, %c0_102, %c0_103] : memref<9x1x128xf32, #tpu.memory_space<vmem>>, vector<1x1x128xf32>
    %178 = vector.shape_cast %177 : vector<1x1x128xf32> to vector<1x128xf32>
    %179 = vector.broadcast %178 : vector<1x128xf32> to vector<32x128xf32>
    %180 = arith.mulf %176, %179 : vector<32x128xf32>
    %181 = arith.addf %171, %180 : vector<32x128xf32>
    %c112_i32_104 = arith.constant 112 : i32
    %182 = tpu.dynamic_rotate %3 by %c112_i32_104 dim 1 : vector<32x128xf32>, i32 -> vector<32x128xf32>
    %c7_105 = arith.constant 7 : index
    %c0_106 = arith.constant 0 : index
    %c0_107 = arith.constant 0 : index
    %183 = vector.load %arg4[%c7_105, %c0_106, %c0_107] : memref<9x32x1xf32, #tpu.memory_space<vmem>>, vector<1x32x1xf32>
    %184 = vector.shape_cast %183 : vector<1x32x1xf32> to vector<32x1xf32>
    %185 = vector.broadcast %184 : vector<32x1xf32> to vector<32x128xf32>
    %186 = arith.mulf %182, %185 : vector<32x128xf32>
    %c7_108 = arith.constant 7 : index
    %c0_109 = arith.constant 0 : index
    %c0_110 = arith.constant 0 : index
    %187 = vector.load %arg5[%c7_108, %c0_109, %c0_110] : memref<9x1x128xf32, #tpu.memory_space<vmem>>, vector<1x1x128xf32>
    %188 = vector.shape_cast %187 : vector<1x1x128xf32> to vector<1x128xf32>
    %189 = vector.broadcast %188 : vector<1x128xf32> to vector<32x128xf32>
    %190 = arith.mulf %186, %189 : vector<32x128xf32>
    %191 = arith.addf %181, %190 : vector<32x128xf32>
    %c111_i32_111 = arith.constant 111 : i32
    %192 = tpu.dynamic_rotate %3 by %c111_i32_111 dim 1 : vector<32x128xf32>, i32 -> vector<32x128xf32>
    %c8_112 = arith.constant 8 : index
    %c0_113 = arith.constant 0 : index
    %c0_114 = arith.constant 0 : index
    %193 = vector.load %arg4[%c8_112, %c0_113, %c0_114] : memref<9x32x1xf32, #tpu.memory_space<vmem>>, vector<1x32x1xf32>
    %194 = vector.shape_cast %193 : vector<1x32x1xf32> to vector<32x1xf32>
    %195 = vector.broadcast %194 : vector<32x1xf32> to vector<32x128xf32>
    %196 = arith.mulf %192, %195 : vector<32x128xf32>
    %c8_115 = arith.constant 8 : index
    %c0_116 = arith.constant 0 : index
    %c0_117 = arith.constant 0 : index
    %197 = vector.load %arg5[%c8_115, %c0_116, %c0_117] : memref<9x1x128xf32, #tpu.memory_space<vmem>>, vector<1x1x128xf32>
    %198 = vector.shape_cast %197 : vector<1x1x128xf32> to vector<1x128xf32>
    %199 = vector.broadcast %198 : vector<1x128xf32> to vector<32x128xf32>
    %200 = arith.mulf %196, %199 : vector<32x128xf32>
    %201 = arith.addf %191, %200 : vector<32x128xf32>
    %202 = vector.broadcast %6 : vector<32x1xf32> to vector<32x128xf32>
    %203 = arith.addf %201, %202 : vector<32x128xf32>
    %cst_118 = arith.constant 5.000000e-01 : f32
    %204 = vector.broadcast %cst_118 : f32 to vector<32x128xf32>
    %205 = arith.mulf %204, %203 : vector<32x128xf32>
    %cst_119 = arith.constant 4.471500e-02 : f32
    %206 = vector.broadcast %cst_119 : f32 to vector<32x128xf32>
    %207 = arith.mulf %206, %203 : vector<32x128xf32>
    %208 = arith.mulf %207, %203 : vector<32x128xf32>
    %209 = arith.mulf %208, %203 : vector<32x128xf32>
    %210 = arith.addf %203, %209 : vector<32x128xf32>
    %cst_120 = arith.constant 0.797884583 : f32
    %211 = vector.broadcast %cst_120 : f32 to vector<32x128xf32>
    %212 = arith.mulf %211, %210 : vector<32x128xf32>
    %213 = math.tanh %212 : vector<32x128xf32>
    %cst_121 = arith.constant 1.000000e+00 : f32
    %214 = vector.broadcast %cst_121 : f32 to vector<32x128xf32>
    %215 = arith.addf %214, %213 : vector<32x128xf32>
    %216 = arith.mulf %205, %215 : vector<32x128xf32>
    %217 = tpu.concatenate %113, %216 in 0 : vector<32x128xf32>, vector<32x128xf32> -> vector<64x128xf32>
    %218 = arith.truncf %217 : vector<64x128xf32> to vector<64x128xbf16>
    %c0_122 = arith.constant 0 : index
    %c0_123 = arith.constant 0 : index
    %219 = vector.load %arg6[%c0_122, %c0_123] : memref<32x64xbf16, #tpu.memory_space<vmem>>, vector<32x64xbf16>
    %cst_124 = arith.constant dense<0.000000e+00> : vector<32x128xf32>
    %220 = tpu.matmul %219, %218, %cst_124 {dimension_numbers = #tpu.dot_dimension_numbers<[1], [0], [0], [1], [0, 0, 1, 1], [], []>} : vector<32x64xbf16>, vector<64x128xbf16>, vector<32x128xf32> -> vector<32x128xf32>
    %221 = vector.broadcast %7 : vector<32x1xf32> to vector<32x128xf32>
    %222 = arith.addf %220, %221 : vector<32x128xf32>
    %cst_125 = arith.constant 5.000000e-01 : f32
    %223 = vector.broadcast %cst_125 : f32 to vector<32x128xf32>
    %224 = arith.mulf %223, %222 : vector<32x128xf32>
    %cst_126 = arith.constant 4.471500e-02 : f32
    %225 = vector.broadcast %cst_126 : f32 to vector<32x128xf32>
    %226 = arith.mulf %225, %222 : vector<32x128xf32>
    %227 = arith.mulf %226, %222 : vector<32x128xf32>
    %228 = arith.mulf %227, %222 : vector<32x128xf32>
    %229 = arith.addf %222, %228 : vector<32x128xf32>
    %cst_127 = arith.constant 0.797884583 : f32
    %230 = vector.broadcast %cst_127 : f32 to vector<32x128xf32>
    %231 = arith.mulf %230, %229 : vector<32x128xf32>
    %232 = math.tanh %231 : vector<32x128xf32>
    %cst_128 = arith.constant 1.000000e+00 : f32
    %233 = vector.broadcast %cst_128 : f32 to vector<32x128xf32>
    %234 = arith.addf %233, %232 : vector<32x128xf32>
    %235 = arith.mulf %224, %234 : vector<32x128xf32>
    %c0_129 = arith.constant 0 : index
    %c0_130 = arith.constant 0 : index
    %236 = vector.load %arg7[%c0_129, %c0_130] : memref<96x32xbf16, #tpu.memory_space<vmem>>, vector<96x32xbf16>
    %237 = arith.truncf %235 : vector<32x128xf32> to vector<32x128xbf16>
    %cst_131 = arith.constant dense<0.000000e+00> : vector<96x128xf32>
    %238 = tpu.matmul %236, %237, %cst_131 {dimension_numbers = #tpu.dot_dimension_numbers<[1], [0], [0], [1], [0, 0, 1, 1], [], []>} : vector<96x32xbf16>, vector<32x128xbf16>, vector<96x128xf32> -> vector<96x128xf32>
    %239 = vector.broadcast %8 : vector<96x1xf32> to vector<96x128xf32>
    %240 = arith.addf %238, %239 : vector<96x128xf32>
    %241 = vector.extract_strided_slice %240 {offsets = [0, 0], sizes = [32, 128], strides = [1, 1]} : vector<96x128xf32> to vector<32x128xf32>
    %242 = vector.extract_strided_slice %240 {offsets = [32, 0], sizes = [32, 128], strides = [1, 1]} : vector<96x128xf32> to vector<32x128xf32>
    %243 = vector.extract_strided_slice %240 {offsets = [64, 0], sizes = [32, 128], strides = [1, 1]} : vector<96x128xf32> to vector<32x128xf32>
    %cst_132 = arith.constant 5.000000e-01 : f32
    %244 = vector.broadcast %cst_132 : f32 to vector<32x128xf32>
    %245 = arith.mulf %241, %244 : vector<32x128xf32>
    %246 = arith.truncf %245 : vector<32x128xf32> to vector<32x128xbf16>
    %247 = arith.truncf %242 : vector<32x128xf32> to vector<32x128xbf16>
    %248 = vector.extract_strided_slice %246 {offsets = [0, 0], sizes = [4, 128], strides = [1, 1]} : vector<32x128xbf16> to vector<4x128xbf16>
    %249 = vector.extract_strided_slice %247 {offsets = [0, 0], sizes = [4, 128], strides = [1, 1]} : vector<32x128xbf16> to vector<4x128xbf16>
    %cst_133 = arith.constant dense<0.000000e+00> : vector<128x128xf32>
    %250 = tpu.matmul %248, %249, %cst_133 {dimension_numbers = #tpu.dot_dimension_numbers<[0], [0], [1], [1], [0, 1, 1, 1], [], []>} : vector<4x128xbf16>, vector<4x128xbf16>, vector<128x128xf32> -> vector<128x128xf32>
    %cst_134 = arith.constant dense<0xFF800000> : vector<128xf32>
    %251 = vector.multi_reduction <maximumf>, %250, %cst_134 [1] : vector<128x128xf32> to vector<128xf32>
    %252 = vector.shape_cast %251 : vector<128xf32> to vector<128x1xf32>
    %253 = vector.broadcast %252 : vector<128x1xf32> to vector<128x128xf32>
    %254 = arith.subf %250, %253 : vector<128x128xf32>
    %255 = math.exp %254 : vector<128x128xf32>
    %cst_135 = arith.constant dense<0.000000e+00> : vector<128xf32>
    %256 = vector.multi_reduction <add>, %255, %cst_135 [1] : vector<128x128xf32> to vector<128xf32>
    %257 = vector.shape_cast %256 : vector<128xf32> to vector<128x1xf32>
    %258 = tpu.reciprocal %257 {approx = true} : vector<128x1xf32> -> vector<128x1xf32>
    %259 = vector.broadcast %258 : vector<128x1xf32> to vector<128x128xf32>
    %260 = arith.mulf %255, %259 : vector<128x128xf32>
    %261 = vector.extract_strided_slice %243 {offsets = [0, 0], sizes = [4, 128], strides = [1, 1]} : vector<32x128xf32> to vector<4x128xf32>
    %262 = arith.truncf %261 : vector<4x128xf32> to vector<4x128xbf16>
    %263 = arith.truncf %260 : vector<128x128xf32> to vector<128x128xbf16>
    %cst_136 = arith.constant dense<0.000000e+00> : vector<4x128xf32>
    %264 = tpu.matmul %262, %263, %cst_136 {dimension_numbers = #tpu.dot_dimension_numbers<[1], [1], [0], [0], [0, 0, 1, 0], [], []>} : vector<4x128xbf16>, vector<128x128xbf16>, vector<4x128xf32> -> vector<4x128xf32>
    %265 = vector.extract_strided_slice %246 {offsets = [4, 0], sizes = [4, 128], strides = [1, 1]} : vector<32x128xbf16> to vector<4x128xbf16>
    %266 = vector.extract_strided_slice %247 {offsets = [4, 0], sizes = [4, 128], strides = [1, 1]} : vector<32x128xbf16> to vector<4x128xbf16>
    %cst_137 = arith.constant dense<0.000000e+00> : vector<128x128xf32>
    %267 = tpu.matmul %265, %266, %cst_137 {dimension_numbers = #tpu.dot_dimension_numbers<[0], [0], [1], [1], [0, 1, 1, 1], [], []>} : vector<4x128xbf16>, vector<4x128xbf16>, vector<128x128xf32> -> vector<128x128xf32>
    %cst_138 = arith.constant dense<0xFF800000> : vector<128xf32>
    %268 = vector.multi_reduction <maximumf>, %267, %cst_138 [1] : vector<128x128xf32> to vector<128xf32>
    %269 = vector.shape_cast %268 : vector<128xf32> to vector<128x1xf32>
    %270 = vector.broadcast %269 : vector<128x1xf32> to vector<128x128xf32>
    %271 = arith.subf %267, %270 : vector<128x128xf32>
    %272 = math.exp %271 : vector<128x128xf32>
    %cst_139 = arith.constant dense<0.000000e+00> : vector<128xf32>
    %273 = vector.multi_reduction <add>, %272, %cst_139 [1] : vector<128x128xf32> to vector<128xf32>
    %274 = vector.shape_cast %273 : vector<128xf32> to vector<128x1xf32>
    %275 = tpu.reciprocal %274 {approx = true} : vector<128x1xf32> -> vector<128x1xf32>
    %276 = vector.broadcast %275 : vector<128x1xf32> to vector<128x128xf32>
    %277 = arith.mulf %272, %276 : vector<128x128xf32>
    %278 = vector.extract_strided_slice %243 {offsets = [4, 0], sizes = [4, 128], strides = [1, 1]} : vector<32x128xf32> to vector<4x128xf32>
    %279 = arith.truncf %278 : vector<4x128xf32> to vector<4x128xbf16>
    %280 = arith.truncf %277 : vector<128x128xf32> to vector<128x128xbf16>
    %cst_140 = arith.constant dense<0.000000e+00> : vector<4x128xf32>
    %281 = tpu.matmul %279, %280, %cst_140 {dimension_numbers = #tpu.dot_dimension_numbers<[1], [1], [0], [0], [0, 0, 1, 0], [], []>} : vector<4x128xbf16>, vector<128x128xbf16>, vector<4x128xf32> -> vector<4x128xf32>
    %282 = vector.extract_strided_slice %246 {offsets = [8, 0], sizes = [4, 128], strides = [1, 1]} : vector<32x128xbf16> to vector<4x128xbf16>
    %283 = vector.extract_strided_slice %247 {offsets = [8, 0], sizes = [4, 128], strides = [1, 1]} : vector<32x128xbf16> to vector<4x128xbf16>
    %cst_141 = arith.constant dense<0.000000e+00> : vector<128x128xf32>
    %284 = tpu.matmul %282, %283, %cst_141 {dimension_numbers = #tpu.dot_dimension_numbers<[0], [0], [1], [1], [0, 1, 1, 1], [], []>} : vector<4x128xbf16>, vector<4x128xbf16>, vector<128x128xf32> -> vector<128x128xf32>
    %cst_142 = arith.constant dense<0xFF800000> : vector<128xf32>
    %285 = vector.multi_reduction <maximumf>, %284, %cst_142 [1] : vector<128x128xf32> to vector<128xf32>
    %286 = vector.shape_cast %285 : vector<128xf32> to vector<128x1xf32>
    %287 = vector.broadcast %286 : vector<128x1xf32> to vector<128x128xf32>
    %288 = arith.subf %284, %287 : vector<128x128xf32>
    %289 = math.exp %288 : vector<128x128xf32>
    %cst_143 = arith.constant dense<0.000000e+00> : vector<128xf32>
    %290 = vector.multi_reduction <add>, %289, %cst_143 [1] : vector<128x128xf32> to vector<128xf32>
    %291 = vector.shape_cast %290 : vector<128xf32> to vector<128x1xf32>
    %292 = tpu.reciprocal %291 {approx = true} : vector<128x1xf32> -> vector<128x1xf32>
    %293 = vector.broadcast %292 : vector<128x1xf32> to vector<128x128xf32>
    %294 = arith.mulf %289, %293 : vector<128x128xf32>
    %295 = vector.extract_strided_slice %243 {offsets = [8, 0], sizes = [4, 128], strides = [1, 1]} : vector<32x128xf32> to vector<4x128xf32>
    %296 = arith.truncf %295 : vector<4x128xf32> to vector<4x128xbf16>
    %297 = arith.truncf %294 : vector<128x128xf32> to vector<128x128xbf16>
    %cst_144 = arith.constant dense<0.000000e+00> : vector<4x128xf32>
    %298 = tpu.matmul %296, %297, %cst_144 {dimension_numbers = #tpu.dot_dimension_numbers<[1], [1], [0], [0], [0, 0, 1, 0], [], []>} : vector<4x128xbf16>, vector<128x128xbf16>, vector<4x128xf32> -> vector<4x128xf32>
    %299 = vector.extract_strided_slice %246 {offsets = [12, 0], sizes = [4, 128], strides = [1, 1]} : vector<32x128xbf16> to vector<4x128xbf16>
    %300 = vector.extract_strided_slice %247 {offsets = [12, 0], sizes = [4, 128], strides = [1, 1]} : vector<32x128xbf16> to vector<4x128xbf16>
    %cst_145 = arith.constant dense<0.000000e+00> : vector<128x128xf32>
    %301 = tpu.matmul %299, %300, %cst_145 {dimension_numbers = #tpu.dot_dimension_numbers<[0], [0], [1], [1], [0, 1, 1, 1], [], []>} : vector<4x128xbf16>, vector<4x128xbf16>, vector<128x128xf32> -> vector<128x128xf32>
    %cst_146 = arith.constant dense<0xFF800000> : vector<128xf32>
    %302 = vector.multi_reduction <maximumf>, %301, %cst_146 [1] : vector<128x128xf32> to vector<128xf32>
    %303 = vector.shape_cast %302 : vector<128xf32> to vector<128x1xf32>
    %304 = vector.broadcast %303 : vector<128x1xf32> to vector<128x128xf32>
    %305 = arith.subf %301, %304 : vector<128x128xf32>
    %306 = math.exp %305 : vector<128x128xf32>
    %cst_147 = arith.constant dense<0.000000e+00> : vector<128xf32>
    %307 = vector.multi_reduction <add>, %306, %cst_147 [1] : vector<128x128xf32> to vector<128xf32>
    %308 = vector.shape_cast %307 : vector<128xf32> to vector<128x1xf32>
    %309 = tpu.reciprocal %308 {approx = true} : vector<128x1xf32> -> vector<128x1xf32>
    %310 = vector.broadcast %309 : vector<128x1xf32> to vector<128x128xf32>
    %311 = arith.mulf %306, %310 : vector<128x128xf32>
    %312 = vector.extract_strided_slice %243 {offsets = [12, 0], sizes = [4, 128], strides = [1, 1]} : vector<32x128xf32> to vector<4x128xf32>
    %313 = arith.truncf %312 : vector<4x128xf32> to vector<4x128xbf16>
    %314 = arith.truncf %311 : vector<128x128xf32> to vector<128x128xbf16>
    %cst_148 = arith.constant dense<0.000000e+00> : vector<4x128xf32>
    %315 = tpu.matmul %313, %314, %cst_148 {dimension_numbers = #tpu.dot_dimension_numbers<[1], [1], [0], [0], [0, 0, 1, 0], [], []>} : vector<4x128xbf16>, vector<128x128xbf16>, vector<4x128xf32> -> vector<4x128xf32>
    %316 = vector.extract_strided_slice %246 {offsets = [16, 0], sizes = [4, 128], strides = [1, 1]} : vector<32x128xbf16> to vector<4x128xbf16>
    %317 = vector.extract_strided_slice %247 {offsets = [16, 0], sizes = [4, 128], strides = [1, 1]} : vector<32x128xbf16> to vector<4x128xbf16>
    %cst_149 = arith.constant dense<0.000000e+00> : vector<128x128xf32>
    %318 = tpu.matmul %316, %317, %cst_149 {dimension_numbers = #tpu.dot_dimension_numbers<[0], [0], [1], [1], [0, 1, 1, 1], [], []>} : vector<4x128xbf16>, vector<4x128xbf16>, vector<128x128xf32> -> vector<128x128xf32>
    %cst_150 = arith.constant dense<0xFF800000> : vector<128xf32>
    %319 = vector.multi_reduction <maximumf>, %318, %cst_150 [1] : vector<128x128xf32> to vector<128xf32>
    %320 = vector.shape_cast %319 : vector<128xf32> to vector<128x1xf32>
    %321 = vector.broadcast %320 : vector<128x1xf32> to vector<128x128xf32>
    %322 = arith.subf %318, %321 : vector<128x128xf32>
    %323 = math.exp %322 : vector<128x128xf32>
    %cst_151 = arith.constant dense<0.000000e+00> : vector<128xf32>
    %324 = vector.multi_reduction <add>, %323, %cst_151 [1] : vector<128x128xf32> to vector<128xf32>
    %325 = vector.shape_cast %324 : vector<128xf32> to vector<128x1xf32>
    %326 = tpu.reciprocal %325 {approx = true} : vector<128x1xf32> -> vector<128x1xf32>
    %327 = vector.broadcast %326 : vector<128x1xf32> to vector<128x128xf32>
    %328 = arith.mulf %323, %327 : vector<128x128xf32>
    %329 = vector.extract_strided_slice %243 {offsets = [16, 0], sizes = [4, 128], strides = [1, 1]} : vector<32x128xf32> to vector<4x128xf32>
    %330 = arith.truncf %329 : vector<4x128xf32> to vector<4x128xbf16>
    %331 = arith.truncf %328 : vector<128x128xf32> to vector<128x128xbf16>
    %cst_152 = arith.constant dense<0.000000e+00> : vector<4x128xf32>
    %332 = tpu.matmul %330, %331, %cst_152 {dimension_numbers = #tpu.dot_dimension_numbers<[1], [1], [0], [0], [0, 0, 1, 0], [], []>} : vector<4x128xbf16>, vector<128x128xbf16>, vector<4x128xf32> -> vector<4x128xf32>
    %333 = vector.extract_strided_slice %246 {offsets = [20, 0], sizes = [4, 128], strides = [1, 1]} : vector<32x128xbf16> to vector<4x128xbf16>
    %334 = vector.extract_strided_slice %247 {offsets = [20, 0], sizes = [4, 128], strides = [1, 1]} : vector<32x128xbf16> to vector<4x128xbf16>
    %cst_153 = arith.constant dense<0.000000e+00> : vector<128x128xf32>
    %335 = tpu.matmul %333, %334, %cst_153 {dimension_numbers = #tpu.dot_dimension_numbers<[0], [0], [1], [1], [0, 1, 1, 1], [], []>} : vector<4x128xbf16>, vector<4x128xbf16>, vector<128x128xf32> -> vector<128x128xf32>
    %cst_154 = arith.constant dense<0xFF800000> : vector<128xf32>
    %336 = vector.multi_reduction <maximumf>, %335, %cst_154 [1] : vector<128x128xf32> to vector<128xf32>
    %337 = vector.shape_cast %336 : vector<128xf32> to vector<128x1xf32>
    %338 = vector.broadcast %337 : vector<128x1xf32> to vector<128x128xf32>
    %339 = arith.subf %335, %338 : vector<128x128xf32>
    %340 = math.exp %339 : vector<128x128xf32>
    %cst_155 = arith.constant dense<0.000000e+00> : vector<128xf32>
    %341 = vector.multi_reduction <add>, %340, %cst_155 [1] : vector<128x128xf32> to vector<128xf32>
    %342 = vector.shape_cast %341 : vector<128xf32> to vector<128x1xf32>
    %343 = tpu.reciprocal %342 {approx = true} : vector<128x1xf32> -> vector<128x1xf32>
    %344 = vector.broadcast %343 : vector<128x1xf32> to vector<128x128xf32>
    %345 = arith.mulf %340, %344 : vector<128x128xf32>
    %346 = vector.extract_strided_slice %243 {offsets = [20, 0], sizes = [4, 128], strides = [1, 1]} : vector<32x128xf32> to vector<4x128xf32>
    %347 = arith.truncf %346 : vector<4x128xf32> to vector<4x128xbf16>
    %348 = arith.truncf %345 : vector<128x128xf32> to vector<128x128xbf16>
    %cst_156 = arith.constant dense<0.000000e+00> : vector<4x128xf32>
    %349 = tpu.matmul %347, %348, %cst_156 {dimension_numbers = #tpu.dot_dimension_numbers<[1], [1], [0], [0], [0, 0, 1, 0], [], []>} : vector<4x128xbf16>, vector<128x128xbf16>, vector<4x128xf32> -> vector<4x128xf32>
    %350 = vector.extract_strided_slice %246 {offsets = [24, 0], sizes = [4, 128], strides = [1, 1]} : vector<32x128xbf16> to vector<4x128xbf16>
    %351 = vector.extract_strided_slice %247 {offsets = [24, 0], sizes = [4, 128], strides = [1, 1]} : vector<32x128xbf16> to vector<4x128xbf16>
    %cst_157 = arith.constant dense<0.000000e+00> : vector<128x128xf32>
    %352 = tpu.matmul %350, %351, %cst_157 {dimension_numbers = #tpu.dot_dimension_numbers<[0], [0], [1], [1], [0, 1, 1, 1], [], []>} : vector<4x128xbf16>, vector<4x128xbf16>, vector<128x128xf32> -> vector<128x128xf32>
    %cst_158 = arith.constant dense<0xFF800000> : vector<128xf32>
    %353 = vector.multi_reduction <maximumf>, %352, %cst_158 [1] : vector<128x128xf32> to vector<128xf32>
    %354 = vector.shape_cast %353 : vector<128xf32> to vector<128x1xf32>
    %355 = vector.broadcast %354 : vector<128x1xf32> to vector<128x128xf32>
    %356 = arith.subf %352, %355 : vector<128x128xf32>
    %357 = math.exp %356 : vector<128x128xf32>
    %cst_159 = arith.constant dense<0.000000e+00> : vector<128xf32>
    %358 = vector.multi_reduction <add>, %357, %cst_159 [1] : vector<128x128xf32> to vector<128xf32>
    %359 = vector.shape_cast %358 : vector<128xf32> to vector<128x1xf32>
    %360 = tpu.reciprocal %359 {approx = true} : vector<128x1xf32> -> vector<128x1xf32>
    %361 = vector.broadcast %360 : vector<128x1xf32> to vector<128x128xf32>
    %362 = arith.mulf %357, %361 : vector<128x128xf32>
    %363 = vector.extract_strided_slice %243 {offsets = [24, 0], sizes = [4, 128], strides = [1, 1]} : vector<32x128xf32> to vector<4x128xf32>
    %364 = arith.truncf %363 : vector<4x128xf32> to vector<4x128xbf16>
    %365 = arith.truncf %362 : vector<128x128xf32> to vector<128x128xbf16>
    %cst_160 = arith.constant dense<0.000000e+00> : vector<4x128xf32>
    %366 = tpu.matmul %364, %365, %cst_160 {dimension_numbers = #tpu.dot_dimension_numbers<[1], [1], [0], [0], [0, 0, 1, 0], [], []>} : vector<4x128xbf16>, vector<128x128xbf16>, vector<4x128xf32> -> vector<4x128xf32>
    %367 = vector.extract_strided_slice %246 {offsets = [28, 0], sizes = [4, 128], strides = [1, 1]} : vector<32x128xbf16> to vector<4x128xbf16>
    %368 = vector.extract_strided_slice %247 {offsets = [28, 0], sizes = [4, 128], strides = [1, 1]} : vector<32x128xbf16> to vector<4x128xbf16>
    %cst_161 = arith.constant dense<0.000000e+00> : vector<128x128xf32>
    %369 = tpu.matmul %367, %368, %cst_161 {dimension_numbers = #tpu.dot_dimension_numbers<[0], [0], [1], [1], [0, 1, 1, 1], [], []>} : vector<4x128xbf16>, vector<4x128xbf16>, vector<128x128xf32> -> vector<128x128xf32>
    %cst_162 = arith.constant dense<0xFF800000> : vector<128xf32>
    %370 = vector.multi_reduction <maximumf>, %369, %cst_162 [1] : vector<128x128xf32> to vector<128xf32>
    %371 = vector.shape_cast %370 : vector<128xf32> to vector<128x1xf32>
    %372 = vector.broadcast %371 : vector<128x1xf32> to vector<128x128xf32>
    %373 = arith.subf %369, %372 : vector<128x128xf32>
    %374 = math.exp %373 : vector<128x128xf32>
    %cst_163 = arith.constant dense<0.000000e+00> : vector<128xf32>
    %375 = vector.multi_reduction <add>, %374, %cst_163 [1] : vector<128x128xf32> to vector<128xf32>
    %376 = vector.shape_cast %375 : vector<128xf32> to vector<128x1xf32>
    %377 = tpu.reciprocal %376 {approx = true} : vector<128x1xf32> -> vector<128x1xf32>
    %378 = vector.broadcast %377 : vector<128x1xf32> to vector<128x128xf32>
    %379 = arith.mulf %374, %378 : vector<128x128xf32>
    %380 = vector.extract_strided_slice %243 {offsets = [28, 0], sizes = [4, 128], strides = [1, 1]} : vector<32x128xf32> to vector<4x128xf32>
    %381 = arith.truncf %380 : vector<4x128xf32> to vector<4x128xbf16>
    %382 = arith.truncf %379 : vector<128x128xf32> to vector<128x128xbf16>
    %cst_164 = arith.constant dense<0.000000e+00> : vector<4x128xf32>
    %383 = tpu.matmul %381, %382, %cst_164 {dimension_numbers = #tpu.dot_dimension_numbers<[1], [1], [0], [0], [0, 0, 1, 0], [], []>} : vector<4x128xbf16>, vector<128x128xbf16>, vector<4x128xf32> -> vector<4x128xf32>
    %384 = tpu.concatenate %264, %281, %298, %315, %332, %349, %366, %383 in 0 : vector<4x128xf32>, vector<4x128xf32>, vector<4x128xf32>, vector<4x128xf32>, vector<4x128xf32>, vector<4x128xf32>, vector<4x128xf32>, vector<4x128xf32> -> vector<32x128xf32>
    %c17_i32_165 = arith.constant 17 : i32
    %385 = tpu.dynamic_rotate %243 by %c17_i32_165 dim 1 : vector<32x128xf32>, i32 -> vector<32x128xf32>
    %c0_166 = arith.constant 0 : index
    %c0_167 = arith.constant 0 : index
    %c0_168 = arith.constant 0 : index
    %386 = vector.load %arg8[%c0_166, %c0_167, %c0_168] : memref<9x32x1xf32, #tpu.memory_space<vmem>>, vector<1x32x1xf32>
    %387 = vector.shape_cast %386 : vector<1x32x1xf32> to vector<32x1xf32>
    %388 = vector.broadcast %387 : vector<32x1xf32> to vector<32x128xf32>
    %389 = arith.mulf %385, %388 : vector<32x128xf32>
    %c0_169 = arith.constant 0 : index
    %c0_170 = arith.constant 0 : index
    %c0_171 = arith.constant 0 : index
    %390 = vector.load %arg5[%c0_169, %c0_170, %c0_171] : memref<9x1x128xf32, #tpu.memory_space<vmem>>, vector<1x1x128xf32>
    %391 = vector.shape_cast %390 : vector<1x1x128xf32> to vector<1x128xf32>
    %392 = vector.broadcast %391 : vector<1x128xf32> to vector<32x128xf32>
    %393 = arith.mulf %389, %392 : vector<32x128xf32>
    %c16_i32_172 = arith.constant 16 : i32
    %394 = tpu.dynamic_rotate %243 by %c16_i32_172 dim 1 : vector<32x128xf32>, i32 -> vector<32x128xf32>
    %c1_173 = arith.constant 1 : index
    %c0_174 = arith.constant 0 : index
    %c0_175 = arith.constant 0 : index
    %395 = vector.load %arg8[%c1_173, %c0_174, %c0_175] : memref<9x32x1xf32, #tpu.memory_space<vmem>>, vector<1x32x1xf32>
    %396 = vector.shape_cast %395 : vector<1x32x1xf32> to vector<32x1xf32>
    %397 = vector.broadcast %396 : vector<32x1xf32> to vector<32x128xf32>
    %398 = arith.mulf %394, %397 : vector<32x128xf32>
    %c1_176 = arith.constant 1 : index
    %c0_177 = arith.constant 0 : index
    %c0_178 = arith.constant 0 : index
    %399 = vector.load %arg5[%c1_176, %c0_177, %c0_178] : memref<9x1x128xf32, #tpu.memory_space<vmem>>, vector<1x1x128xf32>
    %400 = vector.shape_cast %399 : vector<1x1x128xf32> to vector<1x128xf32>
    %401 = vector.broadcast %400 : vector<1x128xf32> to vector<32x128xf32>
    %402 = arith.mulf %398, %401 : vector<32x128xf32>
    %403 = arith.addf %393, %402 : vector<32x128xf32>
    %c15_i32_179 = arith.constant 15 : i32
    %404 = tpu.dynamic_rotate %243 by %c15_i32_179 dim 1 : vector<32x128xf32>, i32 -> vector<32x128xf32>
    %c2_180 = arith.constant 2 : index
    %c0_181 = arith.constant 0 : index
    %c0_182 = arith.constant 0 : index
    %405 = vector.load %arg8[%c2_180, %c0_181, %c0_182] : memref<9x32x1xf32, #tpu.memory_space<vmem>>, vector<1x32x1xf32>
    %406 = vector.shape_cast %405 : vector<1x32x1xf32> to vector<32x1xf32>
    %407 = vector.broadcast %406 : vector<32x1xf32> to vector<32x128xf32>
    %408 = arith.mulf %404, %407 : vector<32x128xf32>
    %c2_183 = arith.constant 2 : index
    %c0_184 = arith.constant 0 : index
    %c0_185 = arith.constant 0 : index
    %409 = vector.load %arg5[%c2_183, %c0_184, %c0_185] : memref<9x1x128xf32, #tpu.memory_space<vmem>>, vector<1x1x128xf32>
    %410 = vector.shape_cast %409 : vector<1x1x128xf32> to vector<1x128xf32>
    %411 = vector.broadcast %410 : vector<1x128xf32> to vector<32x128xf32>
    %412 = arith.mulf %408, %411 : vector<32x128xf32>
    %413 = arith.addf %403, %412 : vector<32x128xf32>
    %c1_i32_186 = arith.constant 1 : i32
    %414 = tpu.dynamic_rotate %243 by %c1_i32_186 dim 1 : vector<32x128xf32>, i32 -> vector<32x128xf32>
    %c3_187 = arith.constant 3 : index
    %c0_188 = arith.constant 0 : index
    %c0_189 = arith.constant 0 : index
    %415 = vector.load %arg8[%c3_187, %c0_188, %c0_189] : memref<9x32x1xf32, #tpu.memory_space<vmem>>, vector<1x32x1xf32>
    %416 = vector.shape_cast %415 : vector<1x32x1xf32> to vector<32x1xf32>
    %417 = vector.broadcast %416 : vector<32x1xf32> to vector<32x128xf32>
    %418 = arith.mulf %414, %417 : vector<32x128xf32>
    %c3_190 = arith.constant 3 : index
    %c0_191 = arith.constant 0 : index
    %c0_192 = arith.constant 0 : index
    %419 = vector.load %arg5[%c3_190, %c0_191, %c0_192] : memref<9x1x128xf32, #tpu.memory_space<vmem>>, vector<1x1x128xf32>
    %420 = vector.shape_cast %419 : vector<1x1x128xf32> to vector<1x128xf32>
    %421 = vector.broadcast %420 : vector<1x128xf32> to vector<32x128xf32>
    %422 = arith.mulf %418, %421 : vector<32x128xf32>
    %423 = arith.addf %413, %422 : vector<32x128xf32>
    %c4_193 = arith.constant 4 : index
    %c0_194 = arith.constant 0 : index
    %c0_195 = arith.constant 0 : index
    %424 = vector.load %arg8[%c4_193, %c0_194, %c0_195] : memref<9x32x1xf32, #tpu.memory_space<vmem>>, vector<1x32x1xf32>
    %425 = vector.shape_cast %424 : vector<1x32x1xf32> to vector<32x1xf32>
    %426 = vector.broadcast %425 : vector<32x1xf32> to vector<32x128xf32>
    %427 = arith.mulf %243, %426 : vector<32x128xf32>
    %c4_196 = arith.constant 4 : index
    %c0_197 = arith.constant 0 : index
    %c0_198 = arith.constant 0 : index
    %428 = vector.load %arg5[%c4_196, %c0_197, %c0_198] : memref<9x1x128xf32, #tpu.memory_space<vmem>>, vector<1x1x128xf32>
    %429 = vector.shape_cast %428 : vector<1x1x128xf32> to vector<1x128xf32>
    %430 = vector.broadcast %429 : vector<1x128xf32> to vector<32x128xf32>
    %431 = arith.mulf %427, %430 : vector<32x128xf32>
    %432 = arith.addf %423, %431 : vector<32x128xf32>
    %c127_i32_199 = arith.constant 127 : i32
    %433 = tpu.dynamic_rotate %243 by %c127_i32_199 dim 1 : vector<32x128xf32>, i32 -> vector<32x128xf32>
    %c5_200 = arith.constant 5 : index
    %c0_201 = arith.constant 0 : index
    %c0_202 = arith.constant 0 : index
    %434 = vector.load %arg8[%c5_200, %c0_201, %c0_202] : memref<9x32x1xf32, #tpu.memory_space<vmem>>, vector<1x32x1xf32>
    %435 = vector.shape_cast %434 : vector<1x32x1xf32> to vector<32x1xf32>
    %436 = vector.broadcast %435 : vector<32x1xf32> to vector<32x128xf32>
    %437 = arith.mulf %433, %436 : vector<32x128xf32>
    %c5_203 = arith.constant 5 : index
    %c0_204 = arith.constant 0 : index
    %c0_205 = arith.constant 0 : index
    %438 = vector.load %arg5[%c5_203, %c0_204, %c0_205] : memref<9x1x128xf32, #tpu.memory_space<vmem>>, vector<1x1x128xf32>
    %439 = vector.shape_cast %438 : vector<1x1x128xf32> to vector<1x128xf32>
    %440 = vector.broadcast %439 : vector<1x128xf32> to vector<32x128xf32>
    %441 = arith.mulf %437, %440 : vector<32x128xf32>
    %442 = arith.addf %432, %441 : vector<32x128xf32>
    %c113_i32_206 = arith.constant 113 : i32
    %443 = tpu.dynamic_rotate %243 by %c113_i32_206 dim 1 : vector<32x128xf32>, i32 -> vector<32x128xf32>
    %c6_207 = arith.constant 6 : index
    %c0_208 = arith.constant 0 : index
    %c0_209 = arith.constant 0 : index
    %444 = vector.load %arg8[%c6_207, %c0_208, %c0_209] : memref<9x32x1xf32, #tpu.memory_space<vmem>>, vector<1x32x1xf32>
    %445 = vector.shape_cast %444 : vector<1x32x1xf32> to vector<32x1xf32>
    %446 = vector.broadcast %445 : vector<32x1xf32> to vector<32x128xf32>
    %447 = arith.mulf %443, %446 : vector<32x128xf32>
    %c6_210 = arith.constant 6 : index
    %c0_211 = arith.constant 0 : index
    %c0_212 = arith.constant 0 : index
    %448 = vector.load %arg5[%c6_210, %c0_211, %c0_212] : memref<9x1x128xf32, #tpu.memory_space<vmem>>, vector<1x1x128xf32>
    %449 = vector.shape_cast %448 : vector<1x1x128xf32> to vector<1x128xf32>
    %450 = vector.broadcast %449 : vector<1x128xf32> to vector<32x128xf32>
    %451 = arith.mulf %447, %450 : vector<32x128xf32>
    %452 = arith.addf %442, %451 : vector<32x128xf32>
    %c112_i32_213 = arith.constant 112 : i32
    %453 = tpu.dynamic_rotate %243 by %c112_i32_213 dim 1 : vector<32x128xf32>, i32 -> vector<32x128xf32>
    %c7_214 = arith.constant 7 : index
    %c0_215 = arith.constant 0 : index
    %c0_216 = arith.constant 0 : index
    %454 = vector.load %arg8[%c7_214, %c0_215, %c0_216] : memref<9x32x1xf32, #tpu.memory_space<vmem>>, vector<1x32x1xf32>
    %455 = vector.shape_cast %454 : vector<1x32x1xf32> to vector<32x1xf32>
    %456 = vector.broadcast %455 : vector<32x1xf32> to vector<32x128xf32>
    %457 = arith.mulf %453, %456 : vector<32x128xf32>
    %c7_217 = arith.constant 7 : index
    %c0_218 = arith.constant 0 : index
    %c0_219 = arith.constant 0 : index
    %458 = vector.load %arg5[%c7_217, %c0_218, %c0_219] : memref<9x1x128xf32, #tpu.memory_space<vmem>>, vector<1x1x128xf32>
    %459 = vector.shape_cast %458 : vector<1x1x128xf32> to vector<1x128xf32>
    %460 = vector.broadcast %459 : vector<1x128xf32> to vector<32x128xf32>
    %461 = arith.mulf %457, %460 : vector<32x128xf32>
    %462 = arith.addf %452, %461 : vector<32x128xf32>
    %c111_i32_220 = arith.constant 111 : i32
    %463 = tpu.dynamic_rotate %243 by %c111_i32_220 dim 1 : vector<32x128xf32>, i32 -> vector<32x128xf32>
    %c8_221 = arith.constant 8 : index
    %c0_222 = arith.constant 0 : index
    %c0_223 = arith.constant 0 : index
    %464 = vector.load %arg8[%c8_221, %c0_222, %c0_223] : memref<9x32x1xf32, #tpu.memory_space<vmem>>, vector<1x32x1xf32>
    %465 = vector.shape_cast %464 : vector<1x32x1xf32> to vector<32x1xf32>
    %466 = vector.broadcast %465 : vector<32x1xf32> to vector<32x128xf32>
    %467 = arith.mulf %463, %466 : vector<32x128xf32>
    %c8_224 = arith.constant 8 : index
    %c0_225 = arith.constant 0 : index
    %c0_226 = arith.constant 0 : index
    %468 = vector.load %arg5[%c8_224, %c0_225, %c0_226] : memref<9x1x128xf32, #tpu.memory_space<vmem>>, vector<1x1x128xf32>
    %469 = vector.shape_cast %468 : vector<1x1x128xf32> to vector<1x128xf32>
    %470 = vector.broadcast %469 : vector<1x128xf32> to vector<32x128xf32>
    %471 = arith.mulf %467, %470 : vector<32x128xf32>
    %472 = arith.addf %462, %471 : vector<32x128xf32>
    %473 = vector.broadcast %9 : vector<32x1xf32> to vector<32x128xf32>
    %474 = arith.addf %472, %473 : vector<32x128xf32>
    %475 = arith.addf %384, %474 : vector<32x128xf32>
    %476 = arith.truncf %475 : vector<32x128xf32> to vector<32x128xbf16>
    %c0_227 = arith.constant 0 : index
    %c0_228 = arith.constant 0 : index
    %477 = vector.load %arg9[%c0_227, %c0_228] : memref<32x32xbf16, #tpu.memory_space<vmem>>, vector<32x32xbf16>
    %cst_229 = arith.constant dense<0.000000e+00> : vector<32x128xf32>
    %478 = tpu.matmul %477, %476, %cst_229 {dimension_numbers = #tpu.dot_dimension_numbers<[1], [0], [0], [1], [0, 0, 1, 1], [], []>} : vector<32x32xbf16>, vector<32x128xbf16>, vector<32x128xf32> -> vector<32x128xf32>
    %479 = vector.broadcast %10 : vector<32x1xf32> to vector<32x128xf32>
    %480 = arith.addf %478, %479 : vector<32x128xf32>
    %481 = arith.addf %480, %1 : vector<32x128xf32>
    %cst_230 = arith.constant 5.000000e-01 : f32
    %482 = vector.broadcast %cst_230 : f32 to vector<32x128xf32>
    %483 = arith.mulf %482, %481 : vector<32x128xf32>
    %cst_231 = arith.constant 4.471500e-02 : f32
    %484 = vector.broadcast %cst_231 : f32 to vector<32x128xf32>
    %485 = arith.mulf %484, %481 : vector<32x128xf32>
    %486 = arith.mulf %485, %481 : vector<32x128xf32>
    %487 = arith.mulf %486, %481 : vector<32x128xf32>
    %488 = arith.addf %481, %487 : vector<32x128xf32>
    %cst_232 = arith.constant 0.797884583 : f32
    %489 = vector.broadcast %cst_232 : f32 to vector<32x128xf32>
    %490 = arith.mulf %489, %488 : vector<32x128xf32>
    %491 = math.tanh %490 : vector<32x128xf32>
    %cst_233 = arith.constant 1.000000e+00 : f32
    %492 = vector.broadcast %cst_233 : f32 to vector<32x128xf32>
    %493 = arith.addf %492, %491 : vector<32x128xf32>
    %494 = arith.mulf %483, %493 : vector<32x128xf32>
    %c0_234 = arith.constant 0 : index
    %c0_235 = arith.constant 0 : index
    %c0_236 = arith.constant 0 : index
    %495 = vector.load %arg11[%c0_234, %c0_235, %c0_236] : memref<1x32x128xf32, #tpu.memory_space<vmem>>, vector<1x32x128xf32>
    %496 = vector.shape_cast %495 : vector<1x32x128xf32> to vector<32x128xf32>
    %497 = vector.shape_cast %494 : vector<32x128xf32> to vector<1x32x128xf32>
    tpu.vector_store %arg11[%c0_234, %c0_235, %c0_236], %497 {strides = array<i32>} : memref<1x32x128xf32, #tpu.memory_space<vmem>>, vector<1x32x128xf32>,
    return
  }
  func.func @transform_0(%arg0: i32) -> (i32, i32, i32) {
    %c0_i32 = arith.constant 0 : i32
    %c0_i32_0 = arith.constant 0 : i32
    %c0_i32_1 = arith.constant 0 : i32
    return %arg0, %c0_i32, %c0_i32_0 : i32, i32, i32
  }
  func.func @transform_1(%arg0: i32) -> (i32, i32, i32) {
    %c0_i32 = arith.constant 0 : i32
    %c0_i32_0 = arith.constant 0 : i32
    %c0_i32_1 = arith.constant 0 : i32
    return %arg0, %c0_i32, %c0_i32_0 : i32, i32, i32
  }
  func.func @transform_2(%arg0: i32) -> (i32, i32, i32) {
    %c0_i32 = arith.constant 0 : i32
    %c0_i32_0 = arith.constant 0 : i32
    %c0_i32_1 = arith.constant 0 : i32
    %c0_i32_2 = arith.constant 0 : i32
    return %c0_i32, %c0_i32_0, %c0_i32_1 : i32, i32, i32
  }
  func.func @transform_3(%arg0: i32) -> (i32, i32, i32) {
    %c0_i32 = arith.constant 0 : i32
    %c0_i32_0 = arith.constant 0 : i32
    %c0_i32_1 = arith.constant 0 : i32
    %c0_i32_2 = arith.constant 0 : i32
    return %c0_i32, %c0_i32_0, %c0_i32_1 : i32, i32, i32
  }
  func.func @transform_4(%arg0: i32) -> (i32, i32, i32) {
    %c0_i32 = arith.constant 0 : i32
    %c0_i32_0 = arith.constant 0 : i32
    %c0_i32_1 = arith.constant 0 : i32
    %c0_i32_2 = arith.constant 0 : i32
    return %c0_i32, %c0_i32_0, %c0_i32_1 : i32, i32, i32
  }
  func.func @transform_5(%arg0: i32) -> (i32, i32) {
    %c0_i32 = arith.constant 0 : i32
    %c0_i32_0 = arith.constant 0 : i32
    %c0_i32_1 = arith.constant 0 : i32
    return %c0_i32, %c0_i32_0 : i32, i32
  }
  func.func @transform_6(%arg0: i32) -> (i32, i32) {
    %c0_i32 = arith.constant 0 : i32
    %c0_i32_0 = arith.constant 0 : i32
    %c0_i32_1 = arith.constant 0 : i32
    return %c0_i32, %c0_i32_0 : i32, i32
  }
  func.func @transform_7(%arg0: i32) -> (i32, i32, i32) {
    %c0_i32 = arith.constant 0 : i32
    %c0_i32_0 = arith.constant 0 : i32
    %c0_i32_1 = arith.constant 0 : i32
    %c0_i32_2 = arith.constant 0 : i32
    return %c0_i32, %c0_i32_0, %c0_i32_1 : i32, i32, i32
  }
  func.func @transform_8(%arg0: i32) -> (i32, i32) {
    %c0_i32 = arith.constant 0 : i32
    %c0_i32_0 = arith.constant 0 : i32
    %c0_i32_1 = arith.constant 0 : i32
    return %c0_i32, %c0_i32_0 : i32, i32
  }
  func.func @transform_9(%arg0: i32) -> (i32, i32) {
    %c0_i32 = arith.constant 0 : i32
    %c0_i32_0 = arith.constant 0 : i32
    %c0_i32_1 = arith.constant 0 : i32
    return %c0_i32, %c0_i32_0 : i32, i32
  }
  func.func @transform_10(%arg0: i32) -> (i32, i32, i32) {
    %c0_i32 = arith.constant 0 : i32
    %c0_i32_0 = arith.constant 0 : i32
    %c0_i32_1 = arith.constant 0 : i32
    return %arg0, %c0_i32, %c0_i32_0 : i32, i32, i32
  }
}

</mosaic_0001>

<llo_original>
// kernel: _lambda_.1
$region0: #{_lambda_.1}
  #allocation0 [shape = 'u32[]', space=smem, size = 0x4, offset = 0x4, fixed_abs, tag = 'smem constant byte address 0x4 - core index']
  #allocation1 [shape = 'u32[72,128]{1,0:T(1,128)}', space=vmem, size = 0x9000, scoped, tag = 'internal scratch']
  %s0 = inlined_call_operand.vmem [shape: f32[2,32,128], index: 0, kind: input, shape index: {}]
  %s1 = inlined_call_operand.vmem [shape: f32[2,32,128], index: 1, kind: input, shape index: {}]
  %s2 = inlined_call_operand.hbm [shape: f32[9,32,1], index: 2, kind: input, shape index: {}]
  %s3 = inlined_call_operand.vmem [shape: f32[9,32,1], index: 3, kind: input, shape index: {}]
  %s4 = inlined_call_operand.vmem [shape: f32[9,1,128], index: 4, kind: input, shape index: {}]
  %s5 = inlined_call_operand.vmem [shape: bf16[32,64], index: 5, kind: input, shape index: {}]
  %s6 = inlined_call_operand.vmem [shape: bf16[96,32], index: 6, kind: input, shape index: {}]
  %s7 = inlined_call_operand.hbm [shape: f32[9,32,1], index: 7, kind: input, shape index: {}]
  %s8 = inlined_call_operand.vmem [shape: bf16[32,32], index: 8, kind: input, shape index: {}]
  %s9 = inlined_call_operand.hbm [shape: f32[256,1], index: 9, kind: input, shape index: {}]
  %s10 = inlined_call_operand.vmem [shape: f32[2,32,128], index: 10, kind: output, shape index: {}]
  %s11 = sld [smem:[#allocation0]]
  $region85: #{_lambda_.1} parent=0
    _
  %s13 = ssub.s32 1, %s11
  %s14 = scalar_select 0, %s13, %s11
  $region1: #{_lambda_.1} parent=0
    #allocation2 [shape = 'u8[147456]{0}', space=vmem, size = 0x24000, scoped, tag = 'input window, operand 2, single buffered']
    #allocation3 [shape = 's32[2]{0}', space=sflag, size = 0x8, scoped, tag = 'scoped memory for _lambda_.1']
    #allocation4 [shape = 'u8[147456]{0}', space=vmem, size = 0x24000, scoped, tag = 'input window, operand 7, single buffered']
    #allocation5 [shape = 's32[1]{0}', space=sflag, size = 0x4, scoped, tag = 'scoped memory for _lambda_.1']
    #allocation6 [shape = 'u8[131072]{0}', space=vmem, size = 0x20000, scoped, tag = 'input window, operand 9, single buffered']
    %15 = vsyncpa [#allocation3], 0
    %16 = vsyncpa [#allocation5], 0
    loop: start=0, step=1, limit=4
    $region2: #{_lambda_.1} parent=1 // loop_pre_header
      _
    $region3: #{_lambda_.1} parent=1 // loop_header
      %s18 = sphi 0, %s22
      %p19 = scmp.ge.s32.totalorder %s18, 4
      %s28 = sphi 0, %s30
      %s31 = sphi 0, %s28
      %s32 = sphi 0, %s31
      %s48 = sphi 0, %s32
      %s54 = sphi 0, %s56
      %s57 = sphi 0, %s54
      %s58 = sphi 0, %s57
      %s74 = sphi 0, %s58
      %s78 = sphi 0, %s78
      %s80 = sphi 0, %s78
      %s81 = sphi 0, %s80
      %s95 = sphi 0, %s81
      %s99 = sphi 0, %s99
      %s101 = sphi 0, %s99
      %s102 = sphi 0, %s101
      %s116 = sphi 0, %s102
      %s120 = sphi 0, %s120
      %s122 = sphi 0, %s120
      %s123 = sphi 0, %s122
      %s137 = sphi 0, %s123
      %s141 = sphi 0, %s141
      %s143 = sphi 0, %s141
      %s144 = sphi 0, %s143
      %s158 = sphi 0, %s144
      %s162 = sphi 0, %s162
      %s164 = sphi 0, %s162
      %s165 = sphi 0, %s164
      %s179 = sphi 0, %s165
      %s183 = sphi 0, %s183
      %s185 = sphi 0, %s183
      %s186 = sphi 0, %s185
      %s200 = sphi 0, %s186
      %s204 = sphi 0, %s204
      %s206 = sphi 0, %s204
      %s207 = sphi 0, %s206
      %s221 = sphi 0, %s207
      %s225 = sphi 0, %s225
      %s227 = sphi 0, %s225
      %s228 = sphi 0, %s227
      %s242 = sphi 0, %s228
      %s248 = sphi 0, %s250
      %s251 = sphi 0, %s248
      %s252 = sphi 0, %s251
      %s268 = sphi 0, %s252
    $region4: #{_lambda_.1} parent=1 // loop_header_branch
      %21 = sbr.rel (%p19) target = $region8
    $region5: #{_lambda_.1} parent=1 // loop_body
      %s23 = ssub.s32 %s18, 1
      %s24 = ssub.s32 %s18, 2
      %s25 = sadd.s32 %s18, 1
      %s26 = ssub.s32 %s18, %s25
      %p27 = scmp.eq.s32.totalorder %s26, 0
      %s29 = sadd.s32 %s28, 1
      %s30 = scalar_select %p27, %s28, %s29
      %p33 = pneg %p27
      %p34 = scmp.eq.s32.totalorder %s18, 1
      %p35 = por %p33, %p34
      %p36 = scmp.ne.s32.totalorder %s28, %s31
      %p37 = scmp.eq.s32.totalorder %s18, 0
      %p38 = por %p36, %p37
      %p39 = scmp.ne.s32.totalorder %s28, %s31
      %p40 = scmp.eq.s32.totalorder %s23, 1
      %p41 = por %p39, %p40
      %p42 = scmp.ne.s32.totalorder %s31, %s32
      %p43 = scmp.eq.s32.totalorder %s23, 0
      %p44 = por %p42, %p43
      %p45 = scmp.ne.s32.totalorder %s31, %s32
      %p46 = scmp.eq.s32.totalorder %s24, 1
      %p47 = por %p45, %p46
      %p49 = scmp.ne.s32.totalorder %s32, %s48
      %p50 = scmp.eq.s32.totalorder %s24, 0
      %p51 = por %p49, %p50
      %s52 = ssub.s32 %s18, %s25
      %p53 = scmp.eq.s32.totalorder %s52, 0
      %s55 = sadd.s32 %s54, 1
      %s56 = scalar_select %p53, %s54, %s55
      %p59 = pneg %p53
      %p60 = scmp.eq.s32.totalorder %s18, 1
      %p61 = por %p59, %p60
      %p62 = scmp.ne.s32.totalorder %s54, %s57
      %p63 = scmp.eq.s32.totalorder %s18, 0
      %p64 = por %p62, %p63
      %p65 = scmp.ne.s32.totalorder %s54, %s57
      %p66 = scmp.eq.s32.totalorder %s23, 1
      %p67 = por %p65, %p66
      %p68 = scmp.ne.s32.totalorder %s57, %s58
      %p69 = scmp.eq.s32.totalorder %s23, 0
      %p70 = por %p68, %p69
      %p71 = scmp.ne.s32.totalorder %s57, %s58
      %p72 = scmp.eq.s32.totalorder %s24, 1
      %p73 = por %p71, %p72
      %p75 = scmp.ne.s32.totalorder %s58, %s74
      %p76 = scmp.eq.s32.totalorder %s24, 0
      %p77 = por %p75, %p76
      %s79 = sadd.s32 %s78, 1
      %p82 = scmp.eq.s32.totalorder %s18, 1
      %p83 = scmp.ne.s32.totalorder %s78, %s80
      %p84 = scmp.eq.s32.totalorder %s18, 0
      %p85 = por %p83, %p84
      %p86 = scmp.ne.s32.totalorder %s78, %s80
      %p87 = scmp.eq.s32.totalorder %s23, 1
      %p88 = por %p86, %p87
      %p89 = scmp.ne.s32.totalorder %s80, %s81
      %p90 = scmp.eq.s32.totalorder %s23, 0
      %p91 = por %p89, %p90
      %p92 = scmp.ne.s32.totalorder %s80, %s81
      %p93 = scmp.eq.s32.totalorder %s24, 1
      %p94 = por %p92, %p93
      %p96 = scmp.ne.s32.totalorder %s81, %s95
      %p97 = scmp.eq.s32.totalorder %s24, 0
      %p98 = por %p96, %p97
      %s100 = sadd.s32 %s99, 1
      %p103 = scmp.eq.s32.totalorder %s18, 1
      %p104 = scmp.ne.s32.totalorder %s99, %s101
      %p105 = scmp.eq.s32.totalorder %s18, 0
      %p106 = por %p104, %p105
      %p107 = scmp.ne.s32.totalorder %s99, %s101
      %p108 = scmp.eq.s32.totalorder %s23, 1
      %p109 = por %p107, %p108
      %p110 = scmp.ne.s32.totalorder %s101, %s102
      %p111 = scmp.eq.s32.totalorder %s23, 0
      %p112 = por %p110, %p111
      %p113 = scmp.ne.s32.totalorder %s101, %s102
      %p114 = scmp.eq.s32.totalorder %s24, 1
      %p115 = por %p113, %p114
      %p117 = scmp.ne.s32.totalorder %s102, %s116
      %p118 = scmp.eq.s32.totalorder %s24, 0
      %p119 = por %p117, %p118
      %s121 = sadd.s32 %s120, 1
      %p124 = scmp.eq.s32.totalorder %s18, 1
      %p125 = scmp.ne.s32.totalorder %s120, %s122
      %p126 = scmp.eq.s32.totalorder %s18, 0
      %p127 = por %p125, %p126
      %p128 = scmp.ne.s32.totalorder %s120, %s122
      %p129 = scmp.eq.s32.totalorder %s23, 1
      %p130 = por %p128, %p129
      %p131 = scmp.ne.s32.totalorder %s122, %s123
      %p132 = scmp.eq.s32.totalorder %s23, 0
      %p133 = por %p131, %p132
      %p134 = scmp.ne.s32.totalorder %s122, %s123
      %p135 = scmp.eq.s32.totalorder %s24, 1
      %p136 = por %p134, %p135
      %p138 = scmp.ne.s32.totalorder %s123, %s137
      %p139 = scmp.eq.s32.totalorder %s24, 0
      %p140 = por %p138, %p139
      %s142 = sadd.s32 %s141, 1
      %p145 = scmp.eq.s32.totalorder %s18, 1
      %p146 = scmp.ne.s32.totalorder %s141, %s143
      %p147 = scmp.eq.s32.totalorder %s18, 0
      %p148 = por %p146, %p147
      %p149 = scmp.ne.s32.totalorder %s141, %s143
      %p150 = scmp.eq.s32.totalorder %s23, 1
      %p151 = por %p149, %p150
      %p152 = scmp.ne.s32.totalorder %s143, %s144
      %p153 = scmp.eq.s32.totalorder %s23, 0
      %p154 = por %p152, %p153
      %p155 = scmp.ne.s32.totalorder %s143, %s144
      %p156 = scmp.eq.s32.totalorder %s24, 1
      %p157 = por %p155, %p156
      %p159 = scmp.ne.s32.totalorder %s144, %s158
      %p160 = scmp.eq.s32.totalorder %s24, 0
      %p161 = por %p159, %p160
      %s163 = sadd.s32 %s162, 1
      %p166 = scmp.eq.s32.totalorder %s18, 1
      %p167 = scmp.ne.s32.totalorder %s162, %s164
      %p168 = scmp.eq.s32.totalorder %s18, 0
      %p169 = por %p167, %p168
      %p170 = scmp.ne.s32.totalorder %s162, %s164
      %p171 = scmp.eq.s32.totalorder %s23, 1
      %p172 = por %p170, %p171
      %p173 = scmp.ne.s32.totalorder %s164, %s165
      %p174 = scmp.eq.s32.totalorder %s23, 0
      %p175 = por %p173, %p174
      %p176 = scmp.ne.s32.totalorder %s164, %s165
      %p177 = scmp.eq.s32.totalorder %s24, 1
      %p178 = por %p176, %p177
      %p180 = scmp.ne.s32.totalorder %s165, %s179
      %p181 = scmp.eq.s32.totalorder %s24, 0
      %p182 = por %p180, %p181
      %s184 = sadd.s32 %s183, 1
      %p187 = scmp.eq.s32.totalorder %s18, 1
      %p188 = scmp.ne.s32.totalorder %s183, %s185
      %p189 = scmp.eq.s32.totalorder %s18, 0
      %p190 = por %p188, %p189
      %p191 = scmp.ne.s32.totalorder %s183, %s185
      %p192 = scmp.eq.s32.totalorder %s23, 1
      %p193 = por %p191, %p192
      %p194 = scmp.ne.s32.totalorder %s185, %s186
      %p195 = scmp.eq.s32.totalorder %s23, 0
      %p196 = por %p194, %p195
      %p197 = scmp.ne.s32.totalorder %s185, %s186
      %p198 = scmp.eq.s32.totalorder %s24, 1
      %p199 = por %p197, %p198
      %p201 = scmp.ne.s32.totalorder %s186, %s200
      %p202 = scmp.eq.s32.totalorder %s24, 0
      %p203 = por %p201, %p202
      %s205 = sadd.s32 %s204, 1
      %p208 = scmp.eq.s32.totalorder %s18, 1
      %p209 = scmp.ne.s32.totalorder %s204, %s206
      %p210 = scmp.eq.s32.totalorder %s18, 0
      %p211 = por %p209, %p210
      %p212 = scmp.ne.s32.totalorder %s204, %s206
      %p213 = scmp.eq.s32.totalorder %s23, 1
      %p214 = por %p212, %p213
      %p215 = scmp.ne.s32.totalorder %s206, %s207
      %p216 = scmp.eq.s32.totalorder %s23, 0
      %p217 = por %p215, %p216
      %p218 = scmp.ne.s32.totalorder %s206, %s207
      %p219 = scmp.eq.s32.totalorder %s24, 1
      %p220 = por %p218, %p219
      %p222 = scmp.ne.s32.totalorder %s207, %s221
      %p223 = scmp.eq.s32.totalorder %s24, 0
      %p224 = por %p222, %p223
      %s226 = sadd.s32 %s225, 1
      %p229 = scmp.eq.s32.totalorder %s18, 1
      %p230 = scmp.ne.s32.totalorder %s225, %s227
      %p231 = scmp.eq.s32.totalorder %s18, 0
      %p232 = por %p230, %p231
      %p233 = scmp.ne.s32.totalorder %s225, %s227
      %p234 = scmp.eq.s32.totalorder %s23, 1
      %p235 = por %p233, %p234
      %p236 = scmp.ne.s32.totalorder %s227, %s228
      %p237 = scmp.eq.s32.totalorder %s23, 0
      %p238 = por %p236, %p237
      %p239 = scmp.ne.s32.totalorder %s227, %s228
      %p240 = scmp.eq.s32.totalorder %s24, 1
      %p241 = por %p239, %p240
      %p243 = scmp.ne.s32.totalorder %s228, %s242
      %p244 = scmp.eq.s32.totalorder %s24, 0
      %p245 = por %p243, %p244
      %s246 = ssub.s32 %s18, %s25
      %p247 = scmp.eq.s32.totalorder %s246, 0
      %s249 = sadd.s32 %s248, 1
      %s250 = scalar_select %p247, %s248, %s249
      %p253 = pneg %p247
      %p254 = scmp.eq.s32.totalorder %s18, 1
      %p255 = por %p253, %p254
      %p256 = scmp.ne.s32.totalorder %s248, %s251
      %p257 = scmp.eq.s32.totalorder %s18, 0
      %p258 = por %p256, %p257
      %p259 = scmp.ne.s32.totalorder %s248, %s251
      %p260 = scmp.eq.s32.totalorder %s23, 1
      %p261 = por %p259, %p260
      %p262 = scmp.ne.s32.totalorder %s251, %s252
      %p263 = scmp.eq.s32.totalorder %s23, 0
      %p264 = por %p262, %p263
      %p265 = scmp.ne.s32.totalorder %s251, %s252
      %p266 = scmp.eq.s32.totalorder %s24, 1
      %p267 = por %p265, %p266
      %p269 = scmp.ne.s32.totalorder %s252, %s268
      %p270 = scmp.eq.s32.totalorder %s24, 0
      %p271 = por %p269, %p270
      %p272 = scmp.le.s32.totalorder 1, %s18
      %p273 = scmp.lt.s32.totalorder %s18, 3
      %p274 = pnand %p272, %p273
      %p275 = pneg %p274
      // Predicated region
      $region9: #{_lambda_.1} parent=5 // pred_check
        _
      $region10: #{_lambda_.1} parent=5 // pred_check_branch
        %277 = sbr.rel (%p274) target = $region12
      $region11: #{_lambda_.1} parent=5 // pred_region
        %s278 = ssub.s32 %s18, 1
        // Predicated region
        $region13: #{_lambda_.1} parent=11 // pred_check
          %p279 = pneg %p91
        $region14: #{_lambda_.1} parent=11 // pred_check_branch
          %281 = sbr.rel (%p279) target = $region16
        $region15: #{_lambda_.1} parent=11 // pred_region
          %283 = vsyncadd [#allocation3], 0
          %s284 = sshll.u32 %s2, 4
          %s285 = int_to_ptr.hbm [resolvable:$true] %s284
          %s286 = sshll.u32 [#allocation2], 4
          %s287 = int_to_ptr.vmem [resolvable:$true] %s286
          %292 = dma.hbm_to_vmem [thread:$0]  %s285, 4608, %s287, [#allocation3], 128, 128, 8
        $region16: #{_lambda_.1} parent=11 // pred_fallthru
          _
        // Predicated region
        $region17: #{_lambda_.1} parent=11 // pred_check
          %p293 = pneg %p112
        $region18: #{_lambda_.1} parent=11 // pred_check_branch
          %295 = sbr.rel (%p293) target = $region20
        $region19: #{_lambda_.1} parent=11 // pred_region
          _
        $region20: #{_lambda_.1} parent=11 // pred_fallthru
          _
        // Predicated region
        $region21: #{_lambda_.1} parent=11 // pred_check
          %p296 = pneg %p133
        $region22: #{_lambda_.1} parent=11 // pred_check_branch
          %298 = sbr.rel (%p296) target = $region24
        $region23: #{_lambda_.1} parent=11 // pred_region
          _
        $region24: #{_lambda_.1} parent=11 // pred_fallthru
          _
        // Predicated region
        $region25: #{_lambda_.1} parent=11 // pred_check
          %p299 = pneg %p154
        $region26: #{_lambda_.1} parent=11 // pred_check_branch
          %301 = sbr.rel (%p299) target = $region28
        $region27: #{_lambda_.1} parent=11 // pred_region
          _
        $region28: #{_lambda_.1} parent=11 // pred_fallthru
          _
        // Predicated region
        $region29: #{_lambda_.1} parent=11 // pred_check
          %p302 = pneg %p175
        $region30: #{_lambda_.1} parent=11 // pred_check_branch
          %304 = sbr.rel (%p302) target = $region32
        $region31: #{_lambda_.1} parent=11 // pred_region
          _
        $region32: #{_lambda_.1} parent=11 // pred_fallthru
          _
        // Predicated region
        $region33: #{_lambda_.1} parent=11 // pred_check
          %p305 = pneg %p196
        $region34: #{_lambda_.1} parent=11 // pred_check_branch
          %307 = sbr.rel (%p305) target = $region36
        $region35: #{_lambda_.1} parent=11 // pred_region
          %309 = vsyncadd [#allocation5], 0
          %s310 = sshll.u32 %s7, 4
          %s311 = int_to_ptr.hbm [resolvable:$true] %s310
          %s312 = sshll.u32 [#allocation4], 4
          %s313 = int_to_ptr.vmem [resolvable:$true] %s312
          %318 = dma.hbm_to_vmem [thread:$0]  %s311, 4608, %s313, [#allocation5], 128, 128, 8
        $region36: #{_lambda_.1} parent=11 // pred_fallthru
          _
        // Predicated region
        $region37: #{_lambda_.1} parent=11 // pred_check
          %p319 = pneg %p217
        $region38: #{_lambda_.1} parent=11 // pred_check_branch
          %321 = sbr.rel (%p319) target = $region40
        $region39: #{_lambda_.1} parent=11 // pred_region
          _
        $region40: #{_lambda_.1} parent=11 // pred_fallthru
          _
        // Predicated region
        $region41: #{_lambda_.1} parent=11 // pred_check
          %p322 = pneg %p238
        $region42: #{_lambda_.1} parent=11 // pred_check_branch
          %324 = sbr.rel (%p322) target = $region44
        $region43: #{_lambda_.1} parent=11 // pred_region
          %326 = vsyncadd [#allocation5], 0
          %s327 = sshll.u32 %s9, 4
          %s328 = int_to_ptr.hbm [resolvable:$true] %s327
          %s329 = sshll.u32 [#allocation6], 4
          %s330 = int_to_ptr.vmem [resolvable:$true] %s329
          %335 = dma.hbm_to_vmem [thread:$0]  %s328, 4096, %s330, [#allocation5], 128, 128, 8
        $region44: #{_lambda_.1} parent=11 // pred_fallthru
          _
      $region12: #{_lambda_.1} parent=5 // pred_fallthru
        _
      %p336 = scmp.lt.s32.totalorder %s18, 2
      // Predicated region
      $region45: #{_lambda_.1} parent=5 // pred_check
        %p337 = pneg %p336
      $region46: #{_lambda_.1} parent=5 // pred_check_branch
        %339 = sbr.rel (%p337) target = $region48
      $region47: #{_lambda_.1} parent=5 // pred_region
        // Predicated region
        $region49: #{_lambda_.1} parent=47 // pred_check
          %p340 = pneg %p38
        $region50: #{_lambda_.1} parent=47 // pred_check_branch
          %342 = sbr.rel (%p340) target = $region52
        $region51: #{_lambda_.1} parent=47 // pred_region
          %p343 = scmp.lt.s32.totalorder %s18, 1
          %s344 = scalar_select %p343, %s18, 1
          %s345 = smul.addr %s344, 4
          %s346 = smul.addr %s345, 8
          %s347 = scalar_lea.vmem %s0, %s346
        $region52: #{_lambda_.1} parent=47 // pred_fallthru
          _
        // Predicated region
        $region53: #{_lambda_.1} parent=47 // pred_check
          %p348 = pneg %p64
        $region54: #{_lambda_.1} parent=47 // pred_check_branch
          %350 = sbr.rel (%p348) target = $region56
        $region55: #{_lambda_.1} parent=47 // pred_region
          %p351 = scmp.lt.s32.totalorder %s18, 1
          %s352 = scalar_select %p351, %s18, 1
          %s353 = smul.addr %s352, 4
          %s354 = smul.addr %s353, 8
          %s355 = scalar_lea.vmem %s1, %s354
        $region56: #{_lambda_.1} parent=47 // pred_fallthru
          _
      $region48: #{_lambda_.1} parent=5 // pred_fallthru
        _
      %p356 = scmp.le.s32.totalorder 1, %s18
      %p357 = scmp.lt.s32.totalorder %s18, 3
      %p358 = pnand %p356, %p357
      %p359 = pneg %p358
      // Predicated region
      $region57: #{_lambda_.1} parent=5 // pred_check
        _
      $region58: #{_lambda_.1} parent=5 // pred_check_branch
        %361 = sbr.rel (%p358) target = $region60
      $region59: #{_lambda_.1} parent=5 // pred_region
        %s362 = ssub.s32 %s18, 1
        // Predicated region
        $region61: #{_lambda_.1} parent=59 // pred_check
          %p363 = pneg %p91
        $region62: #{_lambda_.1} parent=59 // pred_check_branch
          %365 = sbr.rel (%p363) target = $region64
        $region63: #{_lambda_.1} parent=59 // pred_region
          %367 = dma.done [#allocation3], 4608
        $region64: #{_lambda_.1} parent=59 // pred_fallthru
          _
        // Predicated region
        $region65: #{_lambda_.1} parent=59 // pred_check
          %p368 = pneg %p196
        $region66: #{_lambda_.1} parent=59 // pred_check_branch
          %370 = sbr.rel (%p368) target = $region68
        $region67: #{_lambda_.1} parent=59 // pred_region
          %372 = dma.done [#allocation5], 4608
        $region68: #{_lambda_.1} parent=59 // pred_fallthru
          _
        // Predicated region
        $region69: #{_lambda_.1} parent=59 // pred_check
          %p373 = pneg %p238
        $region70: #{_lambda_.1} parent=59 // pred_check_branch
          %375 = sbr.rel (%p373) target = $region72
        $region71: #{_lambda_.1} parent=59 // pred_region
          %377 = dma.done [#allocation5], 4096
        $region72: #{_lambda_.1} parent=59 // pred_fallthru
          _
        %p378 = scmp.lt.s32.totalorder %s23, 1
        %s379 = scalar_select %p378, %s23, 1
        %s380 = smul.addr %s379, 4
        %s381 = smul.addr %s380, 8
        %s382 = scalar_lea.vmem %s0, %s381
        %p383 = pneg %p44
        %p384 = pneg %p41
        %p385 = scmp.lt.s32.totalorder %s23, 1
        %s386 = scalar_select %p385, %s23, 1
        %s387 = smul.addr %s386, 4
        %s388 = smul.addr %s387, 8
        %s389 = scalar_lea.vmem %s1, %s388
        %p390 = pneg %p70
        %p391 = pneg %p67
        %p392 = pneg %p91
        %p393 = pneg %p88
        %p394 = pneg %p112
        %p395 = pneg %p109
        %p396 = pneg %p133
        %p397 = pneg %p130
        %p398 = pneg %p154
        %p399 = pneg %p151
        %p400 = pneg %p175
        %p401 = pneg %p172
        %p402 = pneg %p196
        %p403 = pneg %p193
        %p404 = pneg %p217
        %p405 = pneg %p214
        %p406 = pneg %p238
        %p407 = pneg %p235
        %p408 = pneg %p264
        %p409 = pneg %p261
        %p410 = scmp.lt.s32.totalorder %s23, 1
        %s411 = scalar_select %p410, %s23, 1
        %s412 = smul.addr %s411, 4
        %s413 = smul.addr %s412, 8
        %s414 = scalar_lea.vmem %s10, %s413
        %p415 = scmp.lt.s32.totalorder %s23, 1
        %s416 = scalar_select %p415, %s23, 1
        %s417 = smul.addr %s416, 4
        %s418 = smul.addr %s417, 8
        %s419 = scalar_lea.vmem %s0, %s418
        %p420 = scmp.lt.s32.totalorder %s23, 1
        %s421 = scalar_select %p420, %s23, 1
        %s422 = smul.addr %s421, 4
        %s423 = smul.addr %s422, 8
        %s424 = scalar_lea.vmem %s1, %s423
        %p425 = scmp.lt.s32.totalorder %s23, 1
        %s426 = scalar_select %p425, %s23, 1
        %s427 = smul.addr %s426, 4
        %s428 = smul.addr %s427, 8
        %s429 = scalar_lea.vmem %s10, %s428
        %v431 = vld [vmem:[%s419] sm:$0xff]
        %v432 = vld [vmem:[%s419 + $0x8] sm:$0xff]
        %v433 = vld [vmem:[%s419 + $0x10] sm:$0xff]
        %v434 = vld [vmem:[%s419 + $0x18] sm:$0xff]
        %v435 = vld [vmem:[%s424] sm:$0xff]
        %v436 = vld [vmem:[%s424 + $0x8] sm:$0xff]
        %v437 = vld [vmem:[%s424 + $0x10] sm:$0xff]
        %v438 = vld [vmem:[%s424 + $0x18] sm:$0xff]
        %v439 = vld [vmem:[#allocation6] sm:$0xff]
        %v440 = vld [vmem:[#allocation6 + $0x8] sm:$0xff]
        %v441 = vld [vmem:[#allocation6 + $0x10] sm:$0xff]
        %v442 = vld [vmem:[#allocation6 + $0x18] sm:$0xff]
        %v443 = vld [vmem:[#allocation6 + $0x20] sm:$0xff]
        %v444 = vld [vmem:[#allocation6 + $0x28] sm:$0xff]
        %v445 = vld [vmem:[#allocation6 + $0x30] sm:$0xff]
        %v446 = vld [vmem:[#allocation6 + $0x38] sm:$0xff]
        %v447 = vld [vmem:[#allocation6 + $0x40] sm:$0xff]
        %v448 = vld [vmem:[#allocation6 + $0x48] sm:$0xff]
        %v449 = vld [vmem:[#allocation6 + $0x50] sm:$0xff]
        %v450 = vld [vmem:[#allocation6 + $0x58] sm:$0xff]
        %v451 = vld [vmem:[#allocation6 + $0x60] sm:$0xff]
        %v452 = vld [vmem:[#allocation6 + $0x68] sm:$0xff]
        %v453 = vld [vmem:[#allocation6 + $0x70] sm:$0xff]
        %v454 = vld [vmem:[#allocation6 + $0x78] sm:$0xff]
        %v455 = vld [vmem:[#allocation6 + $0x80] sm:$0xff]
        %v456 = vld [vmem:[#allocation6 + $0x88] sm:$0xff]
        %v457 = vld [vmem:[#allocation6 + $0x90] sm:$0xff]
        %v458 = vld [vmem:[#allocation6 + $0x98] sm:$0xff]
        %v459 = vld [vmem:[#allocation6 + $0xa0] sm:$0xff]
        %v460 = vld [vmem:[#allocation6 + $0xa8] sm:$0xff]
        %v461 = vld [vmem:[#allocation6 + $0xb0] sm:$0xff]
        %v462 = vld [vmem:[#allocation6 + $0xb8] sm:$0xff]
        %v463 = vld [vmem:[#allocation6 + $0xc0] sm:$0xff]
        %v464 = vld [vmem:[#allocation6 + $0xc8] sm:$0xff]
        %v465 = vld [vmem:[#allocation6 + $0xd0] sm:$0xff]
        %v466 = vld [vmem:[#allocation6 + $0xd8] sm:$0xff]
        %v467 = vld [vmem:[#allocation6 + $0xe0] sm:$0xff]
        %v468 = vld [vmem:[#allocation6 + $0xe8] sm:$0xff]
        %v469 = vld [vmem:[#allocation6 + $0xf0] sm:$0xff]
        %v470 = vld [vmem:[#allocation6 + $0xf8] sm:$0xff]
        %471 = vrot.lane.b32.xlu0 %v431, 17
        %v472 = vpop.permute.xlu0 %471
        %473 = vrot.lane.b32.xlu0 %v432, 17
        %v474 = vpop.permute.xlu0 %473
        %475 = vrot.lane.b32.xlu0 %v433, 17
        %v476 = vpop.permute.xlu0 %475
        %477 = vrot.lane.b32.xlu0 %v434, 17
        %v478 = vpop.permute.xlu0 %477
        %v479 = vld [vmem:[#allocation2] sm:$0xff]
        %v480 = vld [vmem:[#allocation2 + $0x8] sm:$0xff]
        %v481 = vld [vmem:[#allocation2 + $0x10] sm:$0xff]
        %v482 = vld [vmem:[#allocation2 + $0x18] sm:$0xff]
        %484 = vset.pattern.permute.xlu0 0
        %485 = vperm.xlu0 %484, %v479
        %v486 = vpop.permute.xlu0 %485
        %489 = vset.pattern.permute.xlu0 0
        %490 = vperm.xlu0 %489, %v480
        %v491 = vpop.permute.xlu0 %490
        %494 = vset.pattern.permute.xlu0 0
        %495 = vperm.xlu0 %494, %v481
        %v496 = vpop.permute.xlu0 %495
        %499 = vset.pattern.permute.xlu0 0
        %500 = vperm.xlu0 %499, %v482
        %v501 = vpop.permute.xlu0 %500
        %v503 = vmul.f32 %v472, %v486
        %v504 = vmul.f32 %v474, %v491
        %v505 = vmul.f32 %v476, %v496
        %v506 = vmul.f32 %v478, %v501
        %v507 = vld [vmem:[%s4] sm:$0x1]
        %v509 = vperm.slane %v507, 0
        %v511 = vmul.f32 %v503, %v509
        %v512 = vmul.f32 %v504, %v509
        %v513 = vmul.f32 %v505, %v509
        %v514 = vmul.f32 %v506, %v509
        %515 = vrot.lane.b32.xlu0 %v431, 16
        %v516 = vpop.permute.xlu0 %515
        %517 = vrot.lane.b32.xlu0 %v432, 16
        %v518 = vpop.permute.xlu0 %517
        %519 = vrot.lane.b32.xlu0 %v433, 16
        %v520 = vpop.permute.xlu0 %519
        %521 = vrot.lane.b32.xlu0 %v434, 16
        %v522 = vpop.permute.xlu0 %521
        %s523 = scalar_lea.vmem [#allocation2], 32
        %v524 = vld [vmem:[%s523] sm:$0xff]
        %v525 = vld [vmem:[%s523 + $0x8] sm:$0xff]
        %v526 = vld [vmem:[%s523 + $0x10] sm:$0xff]
        %v527 = vld [vmem:[%s523 + $0x18] sm:$0xff]
        %529 = vset.pattern.permute.xlu0 0
        %530 = vperm.xlu0 %529, %v524
        %v531 = vpop.permute.xlu0 %530
        %534 = vset.pattern.permute.xlu0 0
        %535 = vperm.xlu0 %534, %v525
        %v536 = vpop.permute.xlu0 %535
        %539 = vset.pattern.permute.xlu0 0
        %540 = vperm.xlu0 %539, %v526
        %v541 = vpop.permute.xlu0 %540
        %544 = vset.pattern.permute.xlu0 0
        %545 = vperm.xlu0 %544, %v527
        %v546 = vpop.permute.xlu0 %545
        %v548 = vmul.f32 %v516, %v531
        %v549 = vmul.f32 %v518, %v536
        %v550 = vmul.f32 %v520, %v541
        %v551 = vmul.f32 %v522, %v546
        %s552 = scalar_lea.vmem %s4, 1
        %v553 = vld [vmem:[%s552] sm:$0x1]
        %v555 = vperm.slane %v553, 0
        %v557 = vmul.f32 %v548, %v555
        %v558 = vmul.f32 %v549, %v555
        %v559 = vmul.f32 %v550, %v555
        %v560 = vmul.f32 %v551, %v555
        %v561 = vadd.f32 %v511, %v557
        %v562 = vadd.f32 %v512, %v558
        %v563 = vadd.f32 %v513, %v559
        %v564 = vadd.f32 %v514, %v560
        %565 = vrot.lane.b32.xlu0 %v431, 15
        %v566 = vpop.permute.xlu0 %565
        %567 = vrot.lane.b32.xlu0 %v432, 15
        %v568 = vpop.permute.xlu0 %567
        %569 = vrot.lane.b32.xlu0 %v433, 15
        %v570 = vpop.permute.xlu0 %569
        %571 = vrot.lane.b32.xlu0 %v434, 15
        %v572 = vpop.permute.xlu0 %571
        %s573 = scalar_lea.vmem [#allocation2], 64
        %v574 = vld [vmem:[%s573] sm:$0xff]
        %v575 = vld [vmem:[%s573 + $0x8] sm:$0xff]
        %v576 = vld [vmem:[%s573 + $0x10] sm:$0xff]
        %v577 = vld [vmem:[%s573 + $0x18] sm:$0xff]
        %579 = vset.pattern.permute.xlu0 0
        %580 = vperm.xlu0 %579, %v574
        %v581 = vpop.permute.xlu0 %580
        %584 = vset.pattern.permute.xlu0 0
        %585 = vperm.xlu0 %584, %v575
        %v586 = vpop.permute.xlu0 %585
        %589 = vset.pattern.permute.xlu0 0
        %590 = vperm.xlu0 %589, %v576
        %v591 = vpop.permute.xlu0 %590
        %594 = vset.pattern.permute.xlu0 0
        %595 = vperm.xlu0 %594, %v577
        %v596 = vpop.permute.xlu0 %595
        %v598 = vmul.f32 %v566, %v581
        %v599 = vmul.f32 %v568, %v586
        %v600 = vmul.f32 %v570, %v591
        %v601 = vmul.f32 %v572, %v596
        %s602 = scalar_lea.vmem %s4, 2
        %v603 = vld [vmem:[%s602] sm:$0x1]
        %v605 = vperm.slane %v603, 0
        %v607 = vmul.f32 %v598, %v605
        %v608 = vmul.f32 %v599, %v605
        %v609 = vmul.f32 %v600, %v605
        %v610 = vmul.f32 %v601, %v605
        %v611 = vadd.f32 %v561, %v607
        %v612 = vadd.f32 %v562, %v608
        %v613 = vadd.f32 %v563, %v609
        %v614 = vadd.f32 %v564, %v610
        %615 = vrot.lane.b32.xlu0 %v431, 1
        %v616 = vpop.permute.xlu0 %615
        %617 = vrot.lane.b32.xlu0 %v432, 1
        %v618 = vpop.permute.xlu0 %617
        %619 = vrot.lane.b32.xlu0 %v433, 1
        %v620 = vpop.permute.xlu0 %619
        %621 = vrot.lane.b32.xlu0 %v434, 1
        %v622 = vpop.permute.xlu0 %621
        %s623 = scalar_lea.vmem [#allocation2], 96
        %v624 = vld [vmem:[%s623] sm:$0xff]
        %v625 = vld [vmem:[%s623 + $0x8] sm:$0xff]
        %v626 = vld [vmem:[%s623 + $0x10] sm:$0xff]
        %v627 = vld [vmem:[%s623 + $0x18] sm:$0xff]
        %629 = vset.pattern.permute.xlu0 0
        %630 = vperm.xlu0 %629, %v624
        %v631 = vpop.permute.xlu0 %630
        %634 = vset.pattern.permute.xlu0 0
        %635 = vperm.xlu0 %634, %v625
        %v636 = vpop.permute.xlu0 %635
        %639 = vset.pattern.permute.xlu0 0
        %640 = vperm.xlu0 %639, %v626
        %v641 = vpop.permute.xlu0 %640
        %644 = vset.pattern.permute.xlu0 0
        %645 = vperm.xlu0 %644, %v627
        %v646 = vpop.permute.xlu0 %645
        %v648 = vmul.f32 %v616, %v631
        %v649 = vmul.f32 %v618, %v636
        %v650 = vmul.f32 %v620, %v641
        %v651 = vmul.f32 %v622, %v646
        %s652 = scalar_lea.vmem %s4, 3
        %v653 = vld [vmem:[%s652] sm:$0x1]
        %v655 = vperm.slane %v653, 0
        %v657 = vmul.f32 %v648, %v655
        %v658 = vmul.f32 %v649, %v655
        %v659 = vmul.f32 %v650, %v655
        %v660 = vmul.f32 %v651, %v655
        %v661 = vadd.f32 %v611, %v657
        %v662 = vadd.f32 %v612, %v658
        %v663 = vadd.f32 %v613, %v659
        %v664 = vadd.f32 %v614, %v660
        %s665 = scalar_lea.vmem [#allocation2], 128
        %v666 = vld [vmem:[%s665] sm:$0xff]
        %v667 = vld [vmem:[%s665 + $0x8] sm:$0xff]
        %v668 = vld [vmem:[%s665 + $0x10] sm:$0xff]
        %v669 = vld [vmem:[%s665 + $0x18] sm:$0xff]
        %671 = vset.pattern.permute.xlu0 0
        %672 = vperm.xlu0 %671, %v666
        %v673 = vpop.permute.xlu0 %672
        %676 = vset.pattern.permute.xlu0 0
        %677 = vperm.xlu0 %676, %v667
        %v678 = vpop.permute.xlu0 %677
        %681 = vset.pattern.permute.xlu0 0
        %682 = vperm.xlu0 %681, %v668
        %v683 = vpop.permute.xlu0 %682
        %686 = vset.pattern.permute.xlu0 0
        %687 = vperm.xlu0 %686, %v669
        %v688 = vpop.permute.xlu0 %687
        %v690 = vmul.f32 %v431, %v673
        %v691 = vmul.f32 %v432, %v678
        %v692 = vmul.f32 %v433, %v683
        %v693 = vmul.f32 %v434, %v688
        %s694 = scalar_lea.vmem %s4, 4
        %v695 = vld [vmem:[%s694] sm:$0x1]
        %v697 = vperm.slane %v695, 0
        %v699 = vmul.f32 %v690, %v697
        %v700 = vmul.f32 %v691, %v697
        %v701 = vmul.f32 %v692, %v697
        %v702 = vmul.f32 %v693, %v697
        %v703 = vadd.f32 %v661, %v699
        %v704 = vadd.f32 %v662, %v700
        %v705 = vadd.f32 %v663, %v701
        %v706 = vadd.f32 %v664, %v702
        %707 = vrot.lane.b32.xlu0 %v431, 127
        %v708 = vpop.permute.xlu0 %707
        %709 = vrot.lane.b32.xlu0 %v432, 127
        %v710 = vpop.permute.xlu0 %709
        %711 = vrot.lane.b32.xlu0 %v433, 127
        %v712 = vpop.permute.xlu0 %711
        %713 = vrot.lane.b32.xlu0 %v434, 127
        %v714 = vpop.permute.xlu0 %713
        %s715 = scalar_lea.vmem [#allocation2], 160
        %v716 = vld [vmem:[%s715] sm:$0xff]
        %v717 = vld [vmem:[%s715 + $0x8] sm:$0xff]
        %v718 = vld [vmem:[%s715 + $0x10] sm:$0xff]
        %v719 = vld [vmem:[%s715 + $0x18] sm:$0xff]
        %721 = vset.pattern.permute.xlu0 0
        %722 = vperm.xlu0 %721, %v716
        %v723 = vpop.permute.xlu0 %722
        %726 = vset.pattern.permute.xlu0 0
        %727 = vperm.xlu0 %726, %v717
        %v728 = vpop.permute.xlu0 %727
        %731 = vset.pattern.permute.xlu0 0
        %732 = vperm.xlu0 %731, %v718
        %v733 = vpop.permute.xlu0 %732
        %736 = vset.pattern.permute.xlu0 0
        %737 = vperm.xlu0 %736, %v719
        %v738 = vpop.permute.xlu0 %737
        %v740 = vmul.f32 %v708, %v723
        %v741 = vmul.f32 %v710, %v728
        %v742 = vmul.f32 %v712, %v733
        %v743 = vmul.f32 %v714, %v738
        %s744 = scalar_lea.vmem %s4, 5
        %v745 = vld [vmem:[%s744] sm:$0x1]
        %v747 = vperm.slane %v745, 0
        %v749 = vmul.f32 %v740, %v747
        %v750 = vmul.f32 %v741, %v747
        %v751 = vmul.f32 %v742, %v747
        %v752 = vmul.f32 %v743, %v747
        %v753 = vadd.f32 %v703, %v749
        %v754 = vadd.f32 %v704, %v750
        %v755 = vadd.f32 %v705, %v751
        %v756 = vadd.f32 %v706, %v752
        %757 = vrot.lane.b32.xlu0 %v431, 113
        %v758 = vpop.permute.xlu0 %757
        %759 = vrot.lane.b32.xlu0 %v432, 113
        %v760 = vpop.permute.xlu0 %759
        %761 = vrot.lane.b32.xlu0 %v433, 113
        %v762 = vpop.permute.xlu0 %761
        %763 = vrot.lane.b32.xlu0 %v434, 113
        %v764 = vpop.permute.xlu0 %763
        %s765 = scalar_lea.vmem [#allocation2], 192
        %v766 = vld [vmem:[%s765] sm:$0xff]
        %v767 = vld [vmem:[%s765 + $0x8] sm:$0xff]
        %v768 = vld [vmem:[%s765 + $0x10] sm:$0xff]
        %v769 = vld [vmem:[%s765 + $0x18] sm:$0xff]
        %771 = vset.pattern.permute.xlu0 0
        %772 = vperm.xlu0 %771, %v766
        %v773 = vpop.permute.xlu0 %772
        %776 = vset.pattern.permute.xlu0 0
        %777 = vperm.xlu0 %776, %v767
        %v778 = vpop.permute.xlu0 %777
        %781 = vset.pattern.permute.xlu0 0
        %782 = vperm.xlu0 %781, %v768
        %v783 = vpop.permute.xlu0 %782
        %786 = vset.pattern.permute.xlu0 0
        %787 = vperm.xlu0 %786, %v769
        %v788 = vpop.permute.xlu0 %787
        %v790 = vmul.f32 %v758, %v773
        %v791 = vmul.f32 %v760, %v778
        %v792 = vmul.f32 %v762, %v783
        %v793 = vmul.f32 %v764, %v788
        %s794 = scalar_lea.vmem %s4, 6
        %v795 = vld [vmem:[%s794] sm:$0x1]
        %v797 = vperm.slane %v795, 0
        %v799 = vmul.f32 %v790, %v797
        %v800 = vmul.f32 %v791, %v797
        %v801 = vmul.f32 %v792, %v797
        %v802 = vmul.f32 %v793, %v797
        %v803 = vadd.f32 %v753, %v799
        %v804 = vadd.f32 %v754, %v800
        %v805 = vadd.f32 %v755, %v801
        %v806 = vadd.f32 %v756, %v802
        %807 = vrot.lane.b32.xlu0 %v431, 112
        %v808 = vpop.permute.xlu0 %807
        %809 = vrot.lane.b32.xlu0 %v432, 112
        %v810 = vpop.permute.xlu0 %809
        %811 = vrot.lane.b32.xlu0 %v433, 112
        %v812 = vpop.permute.xlu0 %811
        %813 = vrot.lane.b32.xlu0 %v434, 112
        %v814 = vpop.permute.xlu0 %813
        %s815 = scalar_lea.vmem [#allocation2], 224
        %v816 = vld [vmem:[%s815] sm:$0xff]
        %v817 = vld [vmem:[%s815 + $0x8] sm:$0xff]
        %v818 = vld [vmem:[%s815 + $0x10] sm:$0xff]
        %v819 = vld [vmem:[%s815 + $0x18] sm:$0xff]
        %821 = vset.pattern.permute.xlu0 0
        %822 = vperm.xlu0 %821, %v816
        %v823 = vpop.permute.xlu0 %822
        %826 = vset.pattern.permute.xlu0 0
        %827 = vperm.xlu0 %826, %v817
        %v828 = vpop.permute.xlu0 %827
        %831 = vset.pattern.permute.xlu0 0
        %832 = vperm.xlu0 %831, %v818
        %v833 = vpop.permute.xlu0 %832
        %836 = vset.pattern.permute.xlu0 0
        %837 = vperm.xlu0 %836, %v819
        %v838 = vpop.permute.xlu0 %837
        %v840 = vmul.f32 %v808, %v823
        %v841 = vmul.f32 %v810, %v828
        %v842 = vmul.f32 %v812, %v833
        %v843 = vmul.f32 %v814, %v838
        %s844 = scalar_lea.vmem %s4, 7
        %v845 = vld [vmem:[%s844] sm:$0x1]
        %v847 = vperm.slane %v845, 0
        %v849 = vmul.f32 %v840, %v847
        %v850 = vmul.f32 %v841, %v847
        %v851 = vmul.f32 %v842, %v847
        %v852 = vmul.f32 %v843, %v847
        %v853 = vadd.f32 %v803, %v849
        %v854 = vadd.f32 %v804, %v850
        %v855 = vadd.f32 %v805, %v851
        %v856 = vadd.f32 %v806, %v852
        %857 = vrot.lane.b32.xlu0 %v431, 111
        %v858 = vpop.permute.xlu0 %857
        %859 = vrot.lane.b32.xlu0 %v432, 111
        %v860 = vpop.permute.xlu0 %859
        %861 = vrot.lane.b32.xlu0 %v433, 111
        %v862 = vpop.permute.xlu0 %861
        %863 = vrot.lane.b32.xlu0 %v434, 111
        %v864 = vpop.permute.xlu0 %863
        %s865 = scalar_lea.vmem [#allocation2], 256
        %v866 = vld [vmem:[%s865] sm:$0xff]
        %v867 = vld [vmem:[%s865 + $0x8] sm:$0xff]
        %v868 = vld [vmem:[%s865 + $0x10] sm:$0xff]
        %v869 = vld [vmem:[%s865 + $0x18] sm:$0xff]
        %871 = vset.pattern.permute.xlu0 0
        %872 = vperm.xlu0 %871, %v866
        %v873 = vpop.permute.xlu0 %872
        %876 = vset.pattern.permute.xlu0 0
        %877 = vperm.xlu0 %876, %v867
        %v878 = vpop.permute.xlu0 %877
        %881 = vset.pattern.permute.xlu0 0
        %882 = vperm.xlu0 %881, %v868
        %v883 = vpop.permute.xlu0 %882
        %886 = vset.pattern.permute.xlu0 0
        %887 = vperm.xlu0 %886, %v869
        %v888 = vpop.permute.xlu0 %887
        %v890 = vmul.f32 %v858, %v873
        %v891 = vmul.f32 %v860, %v878
        %v892 = vmul.f32 %v862, %v883
        %v893 = vmul.f32 %v864, %v888
        %s894 = scalar_lea.vmem %s4, 8
        %v895 = vld [vmem:[%s894] sm:$0x1]
        %v897 = vperm.slane %v895, 0
        %v899 = vmul.f32 %v890, %v897
        %v900 = vmul.f32 %v891, %v897
        %v901 = vmul.f32 %v892, %v897
        %v902 = vmul.f32 %v893, %v897
        %v903 = vadd.f32 %v853, %v899
        %v904 = vadd.f32 %v854, %v900
        %v905 = vadd.f32 %v855, %v901
        %v906 = vadd.f32 %v856, %v902
        %908 = vset.pattern.permute.xlu0 0
        %909 = vperm.xlu0 %908, %v439
        %v910 = vpop.permute.xlu0 %909
        %913 = vset.pattern.permute.xlu0 0
        %914 = vperm.xlu0 %913, %v440
        %v915 = vpop.permute.xlu0 %914
        %918 = vset.pattern.permute.xlu0 0
        %919 = vperm.xlu0 %918, %v441
        %v920 = vpop.permute.xlu0 %919
        %923 = vset.pattern.permute.xlu0 0
        %924 = vperm.xlu0 %923, %v442
        %v925 = vpop.permute.xlu0 %924
        %v927 = vadd.f32 %v903, %v910
        %v928 = vadd.f32 %v904, %v915
        %v929 = vadd.f32 %v905, %v920
        %v930 = vadd.f32 %v906, %v925
        %v931 = vmul.f32 %v927, 0.5
        %v932 = vmul.f32 %v928, 0.5
        %v933 = vmul.f32 %v929, 0.5
        %v934 = vmul.f32 %v930, 0.5
        %v935 = vmul.f32 %v927, 0.044715
        %v936 = vmul.f32 %v928, 0.044715
        %v937 = vmul.f32 %v929, 0.044715
        %v938 = vmul.f32 %v930, 0.044715
        %v939 = vmul.f32 %v935, %v927
        %v940 = vmul.f32 %v936, %v928
        %v941 = vmul.f32 %v937, %v929
        %v942 = vmul.f32 %v938, %v930
        %v943 = vmul.f32 %v939, %v927
        %v944 = vmul.f32 %v940, %v928
        %v945 = vmul.f32 %v941, %v929
        %v946 = vmul.f32 %v942, %v930
        %v947 = vadd.f32 %v927, %v943
        %v948 = vadd.f32 %v928, %v944
        %v949 = vadd.f32 %v929, %v945
        %v950 = vadd.f32 %v930, %v946
        %v951 = vmul.f32 %v947, 0.7978846
        %v952 = vmul.f32 %v948, 0.7978846
        %v953 = vmul.f32 %v949, 0.7978846
        %v954 = vmul.f32 %v950, 0.7978846
        %v955 = vtanh.pop %v951
        %v956 = vtanh.pop %v952
        %v957 = vtanh.pop %v953
        %v958 = vtanh.pop %v954
        %v959 = vadd.f32 %v955, 1.0
        %v960 = vadd.f32 %v956, 1.0
        %v961 = vadd.f32 %v957, 1.0
        %v962 = vadd.f32 %v958, 1.0
        %v963 = vmul.f32 %v931, %v959
        %v964 = vmul.f32 %v932, %v960
        %v965 = vmul.f32 %v933, %v961
        %v966 = vmul.f32 %v934, %v962
        %967 = vrot.lane.b32.xlu0 %v435, 17
        %v968 = vpop.permute.xlu0 %967
        %969 = vrot.lane.b32.xlu0 %v436, 17
        %v970 = vpop.permute.xlu0 %969
        %971 = vrot.lane.b32.xlu0 %v437, 17
        %v972 = vpop.permute.xlu0 %971
        %973 = vrot.lane.b32.xlu0 %v438, 17
        %v974 = vpop.permute.xlu0 %973
        %v975 = vld [vmem:[%s3] sm:$0xff]
        %v976 = vld [vmem:[%s3 + $0x8] sm:$0xff]
        %v977 = vld [vmem:[%s3 + $0x10] sm:$0xff]
        %v978 = vld [vmem:[%s3 + $0x18] sm:$0xff]
        %980 = vset.pattern.permute.xlu0 0
        %981 = vperm.xlu0 %980, %v975
        %v982 = vpop.permute.xlu0 %981
        %985 = vset.pattern.permute.xlu0 0
        %986 = vperm.xlu0 %985, %v976
        %v987 = vpop.permute.xlu0 %986
        %990 = vset.pattern.permute.xlu0 0
        %991 = vperm.xlu0 %990, %v977
        %v992 = vpop.permute.xlu0 %991
        %995 = vset.pattern.permute.xlu0 0
        %996 = vperm.xlu0 %995, %v978
        %v997 = vpop.permute.xlu0 %996
        %v999 = vmul.f32 %v968, %v982
        %v1000 = vmul.f32 %v970, %v987
        %v1001 = vmul.f32 %v972, %v992
        %v1002 = vmul.f32 %v974, %v997
        %v1003 = vmul.f32 %v999, %v509
        %v1004 = vmul.f32 %v1000, %v509
        %v1005 = vmul.f32 %v1001, %v509
        %v1006 = vmul.f32 %v1002, %v509
        %1007 = vrot.lane.b32.xlu0 %v435, 16
        %v1008 = vpop.permute.xlu0 %1007
        %1009 = vrot.lane.b32.xlu0 %v436, 16
        %v1010 = vpop.permute.xlu0 %1009
        %1011 = vrot.lane.b32.xlu0 %v437, 16
        %v1012 = vpop.permute.xlu0 %1011
        %1013 = vrot.lane.b32.xlu0 %v438, 16
        %v1014 = vpop.permute.xlu0 %1013
        %s1015 = scalar_lea.vmem %s3, 32
        %v1016 = vld [vmem:[%s1015] sm:$0xff]
        %v1017 = vld [vmem:[%s1015 + $0x8] sm:$0xff]
        %v1018 = vld [vmem:[%s1015 + $0x10] sm:$0xff]
        %v1019 = vld [vmem:[%s1015 + $0x18] sm:$0xff]
        %1021 = vset.pattern.permute.xlu0 0
        %1022 = vperm.xlu0 %1021, %v1016
        %v1023 = vpop.permute.xlu0 %1022
        %1026 = vset.pattern.permute.xlu0 0
        %1027 = vperm.xlu0 %1026, %v1017
        %v1028 = vpop.permute.xlu0 %1027
        %1031 = vset.pattern.permute.xlu0 0
        %1032 = vperm.xlu0 %1031, %v1018
        %v1033 = vpop.permute.xlu0 %1032
        %1036 = vset.pattern.permute.xlu0 0
        %1037 = vperm.xlu0 %1036, %v1019
        %v1038 = vpop.permute.xlu0 %1037
        %v1040 = vmul.f32 %v1008, %v1023
        %v1041 = vmul.f32 %v1010, %v1028
        %v1042 = vmul.f32 %v1012, %v1033
        %v1043 = vmul.f32 %v1014, %v1038
        %v1044 = vmul.f32 %v1040, %v555
        %v1045 = vmul.f32 %v1041, %v555
        %v1046 = vmul.f32 %v1042, %v555
        %v1047 = vmul.f32 %v1043, %v555
        %v1048 = vadd.f32 %v1003, %v1044
        %v1049 = vadd.f32 %v1004, %v1045
        %v1050 = vadd.f32 %v1005, %v1046
        %v1051 = vadd.f32 %v1006, %v1047
        %1052 = vrot.lane.b32.xlu0 %v435, 15
        %v1053 = vpop.permute.xlu0 %1052
        %1054 = vrot.lane.b32.xlu0 %v436, 15
        %v1055 = vpop.permute.xlu0 %1054
        %1056 = vrot.lane.b32.xlu0 %v437, 15
        %v1057 = vpop.permute.xlu0 %1056
        %1058 = vrot.lane.b32.xlu0 %v438, 15
        %v1059 = vpop.permute.xlu0 %1058
        %s1060 = scalar_lea.vmem %s3, 64
        %v1061 = vld [vmem:[%s1060] sm:$0xff]
        %v1062 = vld [vmem:[%s1060 + $0x8] sm:$0xff]
        %v1063 = vld [vmem:[%s1060 + $0x10] sm:$0xff]
        %v1064 = vld [vmem:[%s1060 + $0x18] sm:$0xff]
        %1066 = vset.pattern.permute.xlu0 0
        %1067 = vperm.xlu0 %1066, %v1061
        %v1068 = vpop.permute.xlu0 %1067
        %1071 = vset.pattern.permute.xlu0 0
        %1072 = vperm.xlu0 %1071, %v1062
        %v1073 = vpop.permute.xlu0 %1072
        %1076 = vset.pattern.permute.xlu0 0
        %1077 = vperm.xlu0 %1076, %v1063
        %v1078 = vpop.permute.xlu0 %1077
        %1081 = vset.pattern.permute.xlu0 0
        %1082 = vperm.xlu0 %1081, %v1064
        %v1083 = vpop.permute.xlu0 %1082
        %v1085 = vmul.f32 %v1053, %v1068
        %v1086 = vmul.f32 %v1055, %v1073
        %v1087 = vmul.f32 %v1057, %v1078
        %v1088 = vmul.f32 %v1059, %v1083
        %v1089 = vmul.f32 %v1085, %v605
        %v1090 = vmul.f32 %v1086, %v605
        %v1091 = vmul.f32 %v1087, %v605
        %v1092 = vmul.f32 %v1088, %v605
        %v1093 = vadd.f32 %v1048, %v1089
        %v1094 = vadd.f32 %v1049, %v1090
        %v1095 = vadd.f32 %v1050, %v1091
        %v1096 = vadd.f32 %v1051, %v1092
        %1097 = vrot.lane.b32.xlu0 %v435, 1
        %v1098 = vpop.permute.xlu0 %1097
        %1099 = vrot.lane.b32.xlu0 %v436, 1
        %v1100 = vpop.permute.xlu0 %1099
        %1101 = vrot.lane.b32.xlu0 %v437, 1
        %v1102 = vpop.permute.xlu0 %1101
        %1103 = vrot.lane.b32.xlu0 %v438, 1
        %v1104 = vpop.permute.xlu0 %1103
        %s1105 = scalar_lea.vmem %s3, 96
        %v1106 = vld [vmem:[%s1105] sm:$0xff]
        %v1107 = vld [vmem:[%s1105 + $0x8] sm:$0xff]
        %v1108 = vld [vmem:[%s1105 + $0x10] sm:$0xff]
        %v1109 = vld [vmem:[%s1105 + $0x18] sm:$0xff]
        %1111 = vset.pattern.permute.xlu0 0
        %1112 = vperm.xlu0 %1111, %v1106
        %v1113 = vpop.permute.xlu0 %1112
        %1116 = vset.pattern.permute.xlu0 0
        %1117 = vperm.xlu0 %1116, %v1107
        %v1118 = vpop.permute.xlu0 %1117
        %1121 = vset.pattern.permute.xlu0 0
        %1122 = vperm.xlu0 %1121, %v1108
        %v1123 = vpop.permute.xlu0 %1122
        %1126 = vset.pattern.permute.xlu0 0
        %1127 = vperm.xlu0 %1126, %v1109
        %v1128 = vpop.permute.xlu0 %1127
        %v1130 = vmul.f32 %v1098, %v1113
        %v1131 = vmul.f32 %v1100, %v1118
        %v1132 = vmul.f32 %v1102, %v1123
        %v1133 = vmul.f32 %v1104, %v1128
        %v1134 = vmul.f32 %v1130, %v655
        %v1135 = vmul.f32 %v1131, %v655
        %v1136 = vmul.f32 %v1132, %v655
        %v1137 = vmul.f32 %v1133, %v655
        %v1138 = vadd.f32 %v1093, %v1134
        %v1139 = vadd.f32 %v1094, %v1135
        %v1140 = vadd.f32 %v1095, %v1136
        %v1141 = vadd.f32 %v1096, %v1137
        %s1142 = scalar_lea.vmem %s3, 128
        %v1143 = vld [vmem:[%s1142] sm:$0xff]
        %v1144 = vld [vmem:[%s1142 + $0x8] sm:$0xff]
        %v1145 = vld [vmem:[%s1142 + $0x10] sm:$0xff]
        %v1146 = vld [vmem:[%s1142 + $0x18] sm:$0xff]
        %1148 = vset.pattern.permute.xlu0 0
        %1149 = vperm.xlu0 %1148, %v1143
        %v1150 = vpop.permute.xlu0 %1149
        %1153 = vset.pattern.permute.xlu0 0
        %1154 = vperm.xlu0 %1153, %v1144
        %v1155 = vpop.permute.xlu0 %1154
        %1158 = vset.pattern.permute.xlu0 0
        %1159 = vperm.xlu0 %1158, %v1145
        %v1160 = vpop.permute.xlu0 %1159
        %1163 = vset.pattern.permute.xlu0 0
        %1164 = vperm.xlu0 %1163, %v1146
        %v1165 = vpop.permute.xlu0 %1164
        %v1167 = vmul.f32 %v435, %v1150
        %v1168 = vmul.f32 %v436, %v1155
        %v1169 = vmul.f32 %v437, %v1160
        %v1170 = vmul.f32 %v438, %v1165
        %v1171 = vmul.f32 %v1167, %v697
        %v1172 = vmul.f32 %v1168, %v697
        %v1173 = vmul.f32 %v1169, %v697
        %v1174 = vmul.f32 %v1170, %v697
        %v1175 = vadd.f32 %v1138, %v1171
        %v1176 = vadd.f32 %v1139, %v1172
        %v1177 = vadd.f32 %v1140, %v1173
        %v1178 = vadd.f32 %v1141, %v1174
        %1179 = vrot.lane.b32.xlu0 %v435, 127
        %v1180 = vpop.permute.xlu0 %1179
        %1181 = vrot.lane.b32.xlu0 %v436, 127
        %v1182 = vpop.permute.xlu0 %1181
        %1183 = vrot.lane.b32.xlu0 %v437, 127
        %v1184 = vpop.permute.xlu0 %1183
        %1185 = vrot.lane.b32.xlu0 %v438, 127
        %v1186 = vpop.permute.xlu0 %1185
        %s1187 = scalar_lea.vmem %s3, 160
        %v1188 = vld [vmem:[%s1187] sm:$0xff]
        %v1189 = vld [vmem:[%s1187 + $0x8] sm:$0xff]
        %v1190 = vld [vmem:[%s1187 + $0x10] sm:$0xff]
        %v1191 = vld [vmem:[%s1187 + $0x18] sm:$0xff]
        %1193 = vset.pattern.permute.xlu0 0
        %1194 = vperm.xlu0 %1193, %v1188
        %v1195 = vpop.permute.xlu0 %1194
        %1198 = vset.pattern.permute.xlu0 0
        %1199 = vperm.xlu0 %1198, %v1189
        %v1200 = vpop.permute.xlu0 %1199
        %1203 = vset.pattern.permute.xlu0 0
        %1204 = vperm.xlu0 %1203, %v1190
        %v1205 = vpop.permute.xlu0 %1204
        %1208 = vset.pattern.permute.xlu0 0
        %1209 = vperm.xlu0 %1208, %v1191
        %v1210 = vpop.permute.xlu0 %1209
        %v1212 = vmul.f32 %v1180, %v1195
        %v1213 = vmul.f32 %v1182, %v1200
        %v1214 = vmul.f32 %v1184, %v1205
        %v1215 = vmul.f32 %v1186, %v1210
        %v1216 = vmul.f32 %v1212, %v747
        %v1217 = vmul.f32 %v1213, %v747
        %v1218 = vmul.f32 %v1214, %v747
        %v1219 = vmul.f32 %v1215, %v747
        %v1220 = vadd.f32 %v1175, %v1216
        %v1221 = vadd.f32 %v1176, %v1217
        %v1222 = vadd.f32 %v1177, %v1218
        %v1223 = vadd.f32 %v1178, %v1219
        %1224 = vrot.lane.b32.xlu0 %v435, 113
        %v1225 = vpop.permute.xlu0 %1224
        %1226 = vrot.lane.b32.xlu0 %v436, 113
        %v1227 = vpop.permute.xlu0 %1226
        %1228 = vrot.lane.b32.xlu0 %v437, 113
        %v1229 = vpop.permute.xlu0 %1228
        %1230 = vrot.lane.b32.xlu0 %v438, 113
        %v1231 = vpop.permute.xlu0 %1230
        %s1232 = scalar_lea.vmem %s3, 192
        %v1233 = vld [vmem:[%s1232] sm:$0xff]
        %v1234 = vld [vmem:[%s1232 + $0x8] sm:$0xff]
        %v1235 = vld [vmem:[%s1232 + $0x10] sm:$0xff]
        %v1236 = vld [vmem:[%s1232 + $0x18] sm:$0xff]
        %1238 = vset.pattern.permute.xlu0 0
        %1239 = vperm.xlu0 %1238, %v1233
        %v1240 = vpop.permute.xlu0 %1239
        %1243 = vset.pattern.permute.xlu0 0
        %1244 = vperm.xlu0 %1243, %v1234
        %v1245 = vpop.permute.xlu0 %1244
        %1248 = vset.pattern.permute.xlu0 0
        %1249 = vperm.xlu0 %1248, %v1235
        %v1250 = vpop.permute.xlu0 %1249
        %1253 = vset.pattern.permute.xlu0 0
        %1254 = vperm.xlu0 %1253, %v1236
        %v1255 = vpop.permute.xlu0 %1254
        %v1257 = vmul.f32 %v1225, %v1240
        %v1258 = vmul.f32 %v1227, %v1245
        %v1259 = vmul.f32 %v1229, %v1250
        %v1260 = vmul.f32 %v1231, %v1255
        %v1261 = vmul.f32 %v1257, %v797
        %v1262 = vmul.f32 %v1258, %v797
        %v1263 = vmul.f32 %v1259, %v797
        %v1264 = vmul.f32 %v1260, %v797
        %v1265 = vadd.f32 %v1220, %v1261
        %v1266 = vadd.f32 %v1221, %v1262
        %v1267 = vadd.f32 %v1222, %v1263
        %v1268 = vadd.f32 %v1223, %v1264
        %1269 = vrot.lane.b32.xlu0 %v435, 112
        %v1270 = vpop.permute.xlu0 %1269
        %1271 = vrot.lane.b32.xlu0 %v436, 112
        %v1272 = vpop.permute.xlu0 %1271
        %1273 = vrot.lane.b32.xlu0 %v437, 112
        %v1274 = vpop.permute.xlu0 %1273
        %1275 = vrot.lane.b32.xlu0 %v438, 112
        %v1276 = vpop.permute.xlu0 %1275
        %s1277 = scalar_lea.vmem %s3, 224
        %v1278 = vld [vmem:[%s1277] sm:$0xff]
        %v1279 = vld [vmem:[%s1277 + $0x8] sm:$0xff]
        %v1280 = vld [vmem:[%s1277 + $0x10] sm:$0xff]
        %v1281 = vld [vmem:[%s1277 + $0x18] sm:$0xff]
        %1283 = vset.pattern.permute.xlu0 0
        %1284 = vperm.xlu0 %1283, %v1278
        %v1285 = vpop.permute.xlu0 %1284
        %1288 = vset.pattern.permute.xlu0 0
        %1289 = vperm.xlu0 %1288, %v1279
        %v1290 = vpop.permute.xlu0 %1289
        %1293 = vset.pattern.permute.xlu0 0
        %1294 = vperm.xlu0 %1293, %v1280
        %v1295 = vpop.permute.xlu0 %1294
        %1298 = vset.pattern.permute.xlu0 0
        %1299 = vperm.xlu0 %1298, %v1281
        %v1300 = vpop.permute.xlu0 %1299
        %v1302 = vmul.f32 %v1270, %v1285
        %v1303 = vmul.f32 %v1272, %v1290
        %v1304 = vmul.f32 %v1274, %v1295
        %v1305 = vmul.f32 %v1276, %v1300
        %v1306 = vmul.f32 %v1302, %v847
        %v1307 = vmul.f32 %v1303, %v847
        %v1308 = vmul.f32 %v1304, %v847
        %v1309 = vmul.f32 %v1305, %v847
        %v1310 = vadd.f32 %v1265, %v1306
        %v1311 = vadd.f32 %v1266, %v1307
        %v1312 = vadd.f32 %v1267, %v1308
        %v1313 = vadd.f32 %v1268, %v1309
        %1314 = vrot.lane.b32.xlu0 %v435, 111
        %v1315 = vpop.permute.xlu0 %1314
        %1316 = vrot.lane.b32.xlu0 %v436, 111
        %v1317 = vpop.permute.xlu0 %1316
        %1318 = vrot.lane.b32.xlu0 %v437, 111
        %v1319 = vpop.permute.xlu0 %1318
        %1320 = vrot.lane.b32.xlu0 %v438, 111
        %v1321 = vpop.permute.xlu0 %1320
        %s1322 = scalar_lea.vmem %s3, 256
        %v1323 = vld [vmem:[%s1322] sm:$0xff]
        %v1324 = vld [vmem:[%s1322 + $0x8] sm:$0xff]
        %v1325 = vld [vmem:[%s1322 + $0x10] sm:$0xff]
        %v1326 = vld [vmem:[%s1322 + $0x18] sm:$0xff]
        %1328 = vset.pattern.permute.xlu0 0
        %1329 = vperm.xlu0 %1328, %v1323
        %v1330 = vpop.permute.xlu0 %1329
        %1333 = vset.pattern.permute.xlu0 0
        %1334 = vperm.xlu0 %1333, %v1324
        %v1335 = vpop.permute.xlu0 %1334
        %1338 = vset.pattern.permute.xlu0 0
        %1339 = vperm.xlu0 %1338, %v1325
        %v1340 = vpop.permute.xlu0 %1339
        %1343 = vset.pattern.permute.xlu0 0
        %1344 = vperm.xlu0 %1343, %v1326
        %v1345 = vpop.permute.xlu0 %1344
        %v1347 = vmul.f32 %v1315, %v1330
        %v1348 = vmul.f32 %v1317, %v1335
        %v1349 = vmul.f32 %v1319, %v1340
        %v1350 = vmul.f32 %v1321, %v1345
        %v1351 = vmul.f32 %v1347, %v897
        %v1352 = vmul.f32 %v1348, %v897
        %v1353 = vmul.f32 %v1349, %v897
        %v1354 = vmul.f32 %v1350, %v897
        %v1355 = vadd.f32 %v1310, %v1351
        %v1356 = vadd.f32 %v1311, %v1352
        %v1357 = vadd.f32 %v1312, %v1353
        %v1358 = vadd.f32 %v1313, %v1354
        %1360 = vset.pattern.permute.xlu0 0
        %1361 = vperm.xlu0 %1360, %v443
        %v1362 = vpop.permute.xlu0 %1361
        %1365 = vset.pattern.permute.xlu0 0
        %1366 = vperm.xlu0 %1365, %v444
        %v1367 = vpop.permute.xlu0 %1366
        %1370 = vset.pattern.permute.xlu0 0
        %1371 = vperm.xlu0 %1370, %v445
        %v1372 = vpop.permute.xlu0 %1371
        %1375 = vset.pattern.permute.xlu0 0
        %1376 = vperm.xlu0 %1375, %v446
        %v1377 = vpop.permute.xlu0 %1376
        %v1379 = vadd.f32 %v1355, %v1362
        %v1380 = vadd.f32 %v1356, %v1367
        %v1381 = vadd.f32 %v1357, %v1372
        %v1382 = vadd.f32 %v1358, %v1377
        %v1383 = vmul.f32 %v1379, 0.5
        %v1384 = vmul.f32 %v1380, 0.5
        %v1385 = vmul.f32 %v1381, 0.5
        %v1386 = vmul.f32 %v1382, 0.5
        %v1387 = vmul.f32 %v1379, 0.044715
        %v1388 = vmul.f32 %v1380, 0.044715
        %v1389 = vmul.f32 %v1381, 0.044715
        %v1390 = vmul.f32 %v1382, 0.044715
        %v1391 = vmul.f32 %v1387, %v1379
        %v1392 = vmul.f32 %v1388, %v1380
        %v1393 = vmul.f32 %v1389, %v1381
        %v1394 = vmul.f32 %v1390, %v1382
        %v1395 = vmul.f32 %v1391, %v1379
        %v1396 = vmul.f32 %v1392, %v1380
        %v1397 = vmul.f32 %v1393, %v1381
        %v1398 = vmul.f32 %v1394, %v1382
        %v1399 = vadd.f32 %v1379, %v1395
        %v1400 = vadd.f32 %v1380, %v1396
        %v1401 = vadd.f32 %v1381, %v1397
        %v1402 = vadd.f32 %v1382, %v1398
        %v1403 = vmul.f32 %v1399, 0.7978846
        %v1404 = vmul.f32 %v1400, 0.7978846
        %v1405 = vmul.f32 %v1401, 0.7978846
        %v1406 = vmul.f32 %v1402, 0.7978846
        %v1407 = vtanh.pop %v1403
        %v1408 = vtanh.pop %v1404
        %v1409 = vtanh.pop %v1405
        %v1410 = vtanh.pop %v1406
        %v1411 = vadd.f32 %v1407, 1.0
        %v1412 = vadd.f32 %v1408, 1.0
        %v1413 = vadd.f32 %v1409, 1.0
        %v1414 = vadd.f32 %v1410, 1.0
        %v1415 = vmul.f32 %v1383, %v1411
        %v1416 = vmul.f32 %v1384, %v1412
        %v1417 = vmul.f32 %v1385, %v1413
        %v1418 = vmul.f32 %v1386, %v1414
        %v1419 = vpack.c.bf16 %v964, %v963
        %v1420 = vpack.c.bf16 %v966, %v965
        %v1421 = vpack.c.bf16 %v1416, %v1415
        %v1422 = vpack.c.bf16 %v1418, %v1417
        %v1423 = vld [vmem:[%s5] sm:$0xf]
        %v1424 = vld [vmem:[%s5 + $0x4] sm:$0xf]
        %v1425 = vld [vmem:[%s5 + $0x8] sm:$0xf]
        %v1426 = vld [vmem:[%s5 + $0xc] sm:$0xf]
        %1428 = vset.pattern.permute.xlu0 0
        %1429 = vperm.xlu0 %1428, %v447
        %v1430 = vpop.permute.xlu0 %1429
        %1433 = vset.pattern.permute.xlu0 0
        %1434 = vperm.xlu0 %1433, %v448
        %v1435 = vpop.permute.xlu0 %1434
        %1438 = vset.pattern.permute.xlu0 0
        %1439 = vperm.xlu0 %1438, %v449
        %v1440 = vpop.permute.xlu0 %1439
        %1443 = vset.pattern.permute.xlu0 0
        %1444 = vperm.xlu0 %1443, %v450
        %v1445 = vpop.permute.xlu0 %1444
        %v1451 = vunpack.c.l.b16 %v1423
        %v1452 = vunpack.c.l.b16 %v1424
        %v1453 = vunpack.c.l.b16 %v1425
        %v1454 = vunpack.c.l.b16 %v1426
        %v1455 = vpack.c.b16 %v1452, %v1451
        %v1456 = vpack.c.b16 %v1454, %v1453
        %vm1457 = vcmask 523264
        %v1459 = vsel %vm1457, %v1455, 0
        %v1462 = vsel %vm1457, %v1456, 0
        %1464 = vmatpush.bf16.msra.mxu0 0
        %1465 = vmatpush.bf16.msra.mxu0 0
        %1466 = vmatpush.bf16.msra.mxu0 0
        %1467 = vmatpush.bf16.msra.mxu0 0
        %1468 = vmatpush.bf16.msra.mxu0 %v1422
        %1469 = vmatpush.bf16.msra.mxu0 %v1421
        %1470 = vmatpush.bf16.msra.mxu0 %v1420
        %1471 = vmatpush.bf16.msra.mxu0 %v1419
        %1472 = vmatmul.bf16.gmra.mxu0 %v1459
        %v1473 = vpop.f32.mrf.mxu0
        %v1474 = vadd.f32 %v1430, %v1473
        %v1475 = vpop.f32.mrf.mxu0
        %v1476 = vadd.f32 %v1435, %v1475
        %1477 = vmatmul.bf16.gmra.mxu0 %v1462
        %v1478 = vpop.f32.mrf.mxu0
        %v1479 = vadd.f32 %v1440, %v1478
        %v1480 = vpop.f32.mrf.mxu0
        %v1481 = vadd.f32 %v1445, %v1480
        %1482 = vdwg.mxu0
        %v1483 = vmul.f32 %v1474, 0.5
        %v1484 = vmul.f32 %v1476, 0.5
        %v1485 = vmul.f32 %v1479, 0.5
        %v1486 = vmul.f32 %v1481, 0.5
        %v1487 = vmul.f32 %v1474, 0.044715
        %v1488 = vmul.f32 %v1476, 0.044715
        %v1489 = vmul.f32 %v1479, 0.044715
        %v1490 = vmul.f32 %v1481, 0.044715
        %v1491 = vmul.f32 %v1487, %v1474
        %v1492 = vmul.f32 %v1488, %v1476
        %v1493 = vmul.f32 %v1489, %v1479
        %v1494 = vmul.f32 %v1490, %v1481
        %v1495 = vmul.f32 %v1491, %v1474
        %v1496 = vmul.f32 %v1492, %v1476
        %v1497 = vmul.f32 %v1493, %v1479
        %v1498 = vmul.f32 %v1494, %v1481
        %v1499 = vadd.f32 %v1474, %v1495
        %v1500 = vadd.f32 %v1476, %v1496
        %v1501 = vadd.f32 %v1479, %v1497
        %v1502 = vadd.f32 %v1481, %v1498
        %v1503 = vmul.f32 %v1499, 0.7978846
        %v1504 = vmul.f32 %v1500, 0.7978846
        %v1505 = vmul.f32 %v1501, 0.7978846
        %v1506 = vmul.f32 %v1502, 0.7978846
        %v1507 = vtanh.pop %v1503
        %v1508 = vtanh.pop %v1504
        %v1509 = vtanh.pop %v1505
        %v1510 = vtanh.pop %v1506
        %v1511 = vadd.f32 %v1507, 1.0
        %v1512 = vadd.f32 %v1508, 1.0
        %v1513 = vadd.f32 %v1509, 1.0
        %v1514 = vadd.f32 %v1510, 1.0
        %v1515 = vmul.f32 %v1483, %v1511
        %v1516 = vmul.f32 %v1484, %v1512
        %v1517 = vmul.f32 %v1485, %v1513
        %v1518 = vmul.f32 %v1486, %v1514
        %v1519 = vld [vmem:[%s6] sm:$0xf]
        %v1520 = vld [vmem:[%s6 + $0x4] sm:$0xf]
        %v1521 = vld [vmem:[%s6 + $0x8] sm:$0xf]
        %v1522 = vld [vmem:[%s6 + $0xc] sm:$0xf]
        %v1523 = vld [vmem:[%s6 + $0x10] sm:$0xf]
        %v1524 = vld [vmem:[%s6 + $0x14] sm:$0xf]
        %v1525 = vld [vmem:[%s6 + $0x18] sm:$0xf]
        %v1526 = vld [vmem:[%s6 + $0x1c] sm:$0xf]
        %v1527 = vld [vmem:[%s6 + $0x20] sm:$0xf]
        %v1528 = vld [vmem:[%s6 + $0x24] sm:$0xf]
        %v1529 = vld [vmem:[%s6 + $0x28] sm:$0xf]
        %v1530 = vld [vmem:[%s6 + $0x2c] sm:$0xf]
        %v1531 = vpack.c.bf16 %v1516, %v1515
        %v1532 = vpack.c.bf16 %v1518, %v1517
        %1534 = vset.pattern.permute.xlu0 0
        %1535 = vperm.xlu0 %1534, %v451
        %v1536 = vpop.permute.xlu0 %1535
        %1539 = vset.pattern.permute.xlu0 0
        %1540 = vperm.xlu0 %1539, %v452
        %v1541 = vpop.permute.xlu0 %1540
        %1544 = vset.pattern.permute.xlu0 0
        %1545 = vperm.xlu0 %1544, %v453
        %v1546 = vpop.permute.xlu0 %1545
        %1549 = vset.pattern.permute.xlu0 0
        %1550 = vperm.xlu0 %1549, %v454
        %v1551 = vpop.permute.xlu0 %1550
        %1554 = vset.pattern.permute.xlu0 0
        %1555 = vperm.xlu0 %1554, %v455
        %v1556 = vpop.permute.xlu0 %1555
        %1559 = vset.pattern.permute.xlu0 0
        %1560 = vperm.xlu0 %1559, %v456
        %v1561 = vpop.permute.xlu0 %1560
        %1564 = vset.pattern.permute.xlu0 0
        %1565 = vperm.xlu0 %1564, %v457
        %v1566 = vpop.permute.xlu0 %1565
        %1569 = vset.pattern.permute.xlu0 0
        %1570 = vperm.xlu0 %1569, %v458
        %v1571 = vpop.permute.xlu0 %1570
        %1574 = vset.pattern.permute.xlu0 0
        %1575 = vperm.xlu0 %1574, %v459
        %v1576 = vpop.permute.xlu0 %1575
        %1579 = vset.pattern.permute.xlu0 0
        %1580 = vperm.xlu0 %1579, %v460
        %v1581 = vpop.permute.xlu0 %1580
        %1584 = vset.pattern.permute.xlu0 0
        %1585 = vperm.xlu0 %1584, %v461
        %v1586 = vpop.permute.xlu0 %1585
        %1589 = vset.pattern.permute.xlu0 0
        %1590 = vperm.xlu0 %1589, %v462
        %v1591 = vpop.permute.xlu0 %1590
        %v1605 = vunpack.c.l.b16 %v1519
        %v1606 = vunpack.c.l.b16 %v1520
        %v1607 = vunpack.c.l.b16 %v1521
        %v1608 = vunpack.c.l.b16 %v1522
        %v1609 = vunpack.c.l.b16 %v1523
        %v1610 = vunpack.c.l.b16 %v1524
        %v1611 = vunpack.c.l.b16 %v1525
        %v1612 = vunpack.c.l.b16 %v1526
        %v1613 = vunpack.c.l.b16 %v1527
        %v1614 = vunpack.c.l.b16 %v1528
        %v1615 = vunpack.c.l.b16 %v1529
        %v1616 = vunpack.c.l.b16 %v1530
        %v1617 = vpack.c.b16 %v1606, %v1605
        %v1618 = vpack.c.b16 %v1608, %v1607
        %v1619 = vpack.c.b16 %v1610, %v1609
        %v1620 = vpack.c.b16 %v1612, %v1611
        %v1621 = vpack.c.b16 %v1614, %v1613
        %v1622 = vpack.c.b16 %v1616, %v1615
        %vm1623 = vcmask 261120
        %v1625 = vsel %vm1623, %v1617, 0
        %v1628 = vsel %vm1623, %v1618, 0
        %v1631 = vsel %vm1623, %v1619, 0
        %v1634 = vsel %vm1623, %v1620, 0
        %v1637 = vsel %vm1623, %v1621, 0
        %v1640 = vsel %vm1623, %v1622, 0
        %1642 = vmatpush.bf16.msra.mxu0 0
        %1643 = vmatpush.bf16.msra.mxu0 0
        %1644 = vmatpush.bf16.msra.mxu0 0
        %1645 = vmatpush.bf16.msra.mxu0 0
        %1646 = vmatpush.bf16.msra.mxu0 0
        %1647 = vmatpush.bf16.msra.mxu0 0
        %1648 = vmatpush.bf16.msra.mxu0 %v1532
        %1649 = vmatpush.bf16.msra.mxu0 %v1531
        %1650 = vmatmul.bf16.gmra.mxu0 %v1625
        %v1651 = vpop.f32.mrf.mxu0
        %v1652 = vadd.f32 %v1536, %v1651
        %v1653 = vpop.f32.mrf.mxu0
        %v1654 = vadd.f32 %v1541, %v1653
        %1655 = vmatmul.bf16.gmra.mxu0 %v1628
        %v1656 = vpop.f32.mrf.mxu0
        %v1657 = vadd.f32 %v1546, %v1656
        %v1658 = vpop.f32.mrf.mxu0
        %v1659 = vadd.f32 %v1551, %v1658
        %1660 = vmatmul.bf16.gmra.mxu0 %v1631
        %v1661 = vpop.f32.mrf.mxu0
        %v1662 = vadd.f32 %v1556, %v1661
        %v1663 = vpop.f32.mrf.mxu0
        %v1664 = vadd.f32 %v1561, %v1663
        %1665 = vmatmul.bf16.gmra.mxu0 %v1634
        %v1666 = vpop.f32.mrf.mxu0
        %v1667 = vadd.f32 %v1566, %v1666
        %v1668 = vpop.f32.mrf.mxu0
        %v1669 = vadd.f32 %v1571, %v1668
        %1670 = vmatmul.bf16.gmra.mxu0 %v1637
        %v1671 = vpop.f32.mrf.mxu0
        %v1672 = vadd.f32 %v1576, %v1671
        %v1673 = vpop.f32.mrf.mxu0
        %v1674 = vadd.f32 %v1581, %v1673
        %1675 = vmatmul.bf16.gmra.mxu0 %v1640
        %v1676 = vpop.f32.mrf.mxu0
        %v1677 = vadd.f32 %v1586, %v1676
        %v1678 = vpop.f32.mrf.mxu0
        %v1679 = vadd.f32 %v1591, %v1678
        %1680 = vdwg.mxu0
        %v1681 = vmul.f32 %v1652, 0.5
        %v1682 = vmul.f32 %v1654, 0.5
        %v1683 = vmul.f32 %v1657, 0.5
        %v1684 = vmul.f32 %v1659, 0.5
        %v1685 = vpack.c.bf16 %v1681, %v1681
        %v1686 = vpack.c.bf16 %v1682, %v1682
        %v1687 = vpack.c.bf16 %v1683, %v1683
        %v1688 = vpack.c.bf16 %v1684, %v1684
        %v1689 = vpack.c.bf16 %v1662, %v1662
        %v1690 = vpack.c.bf16 %v1664, %v1664
        %v1691 = vpack.c.bf16 %v1667, %v1667
        %v1692 = vpack.c.bf16 %v1669, %v1669
        %1693 = vxpose.xlu0.c.b16.start [1/8] %v1685, 128
        %1694 = vxpose.xlu0.c.b16.cont [2/8] 0, 128
        %1695 = vxpose.xlu0.c.b16.cont [3/8] 0, 128
        %1696 = vxpose.xlu0.c.b16.cont [4/8] 0, 128
        %1697 = vxpose.xlu0.c.b16.cont [5/8] 0, 128
        %1698 = vxpose.xlu0.c.b16.cont [6/8] 0, 128
        %1699 = vxpose.xlu0.c.b16.cont [7/8] 0, 128
        %1700 = vxpose.xlu0.c.b16.end [8/8] 0, 128
        %v1701 = vpop.trf.xlu0
        %v1702 = vpop.trf.xlu0
        %v1703 = vpop.trf.xlu0
        %v1704 = vpop.trf.xlu0
        %v1705 = vpop.trf.xlu0
        %v1706 = vpop.trf.xlu0
        %v1707 = vpop.trf.xlu0
        %v1708 = vpop.trf.xlu0
        %vm1709 = vcmask 31744
        %v1711 = vsel %vm1709, %v1701, 0
        %v1714 = vsel %vm1709, %v1702, 0
        %v1717 = vsel %vm1709, %v1703, 0
        %v1720 = vsel %vm1709, %v1704, 0
        %v1723 = vsel %vm1709, %v1705, 0
        %v1726 = vsel %vm1709, %v1706, 0
        %v1729 = vsel %vm1709, %v1707, 0
        %v1732 = vsel %vm1709, %v1708, 0
        %vm1734 = vcmask 1041408
        %v1736 = vsel %vm1734, %v1689, 0
        %1738 = vmatpush.bf16.msra.mxu0 0
        %1739 = vmatpush.bf16.msra.mxu0 0
        %1740 = vmatpush.bf16.msra.mxu0 0
        %1741 = vmatpush.bf16.msra.mxu0 0
        %1742 = vmatpush.bf16.msra.mxu0 0
        %1743 = vmatpush.bf16.msra.mxu0 0
        %1744 = vmatpush.bf16.msra.mxu0 0
        %1745 = vmatpush.bf16.msra.mxu0 %v1736
        %1746 = vmatmul.bf16.gmra.mxu0 %v1711
        %v1747 = vpop.f32.mrf.mxu0
        %v1748 = vadd.f32 0.0, %v1747
        %v1749 = vpop.f32.mrf.mxu0
        %v1750 = vadd.f32 0.0, %v1749
        %1751 = vmatmul.bf16.gmra.mxu0 %v1714
        %v1752 = vpop.f32.mrf.mxu0
        %v1753 = vadd.f32 0.0, %v1752
        %v1754 = vpop.f32.mrf.mxu0
        %v1755 = vadd.f32 0.0, %v1754
        %1756 = vmatmul.bf16.gmra.mxu0 %v1717
        %v1757 = vpop.f32.mrf.mxu0
        %v1758 = vadd.f32 0.0, %v1757
        %v1759 = vpop.f32.mrf.mxu0
        %v1760 = vadd.f32 0.0, %v1759
        %1761 = vmatmul.bf16.gmra.mxu0 %v1720
        %v1762 = vpop.f32.mrf.mxu0
        %v1763 = vadd.f32 0.0, %v1762
        %v1764 = vpop.f32.mrf.mxu0
        %v1765 = vadd.f32 0.0, %v1764
        %1766 = vmatmul.bf16.gmra.mxu0 %v1723
        %v1767 = vpop.f32.mrf.mxu0
        %v1768 = vadd.f32 0.0, %v1767
        %v1769 = vpop.f32.mrf.mxu0
        %v1770 = vadd.f32 0.0, %v1769
        %1771 = vmatmul.bf16.gmra.mxu0 %v1726
        %v1772 = vpop.f32.mrf.mxu0
        %v1773 = vadd.f32 0.0, %v1772
        %v1774 = vpop.f32.mrf.mxu0
        %v1775 = vadd.f32 0.0, %v1774
        %1776 = vmatmul.bf16.gmra.mxu0 %v1729
        %v1777 = vpop.f32.mrf.mxu0
        %v1778 = vadd.f32 0.0, %v1777
        %v1779 = vpop.f32.mrf.mxu0
        %v1780 = vadd.f32 0.0, %v1779
        %1781 = vmatmul.bf16.gmra.mxu0 %v1732
        %v1782 = vpop.f32.mrf.mxu0
        %v1783 = vadd.f32 0.0, %v1782
        %v1784 = vpop.f32.mrf.mxu0
        %v1785 = vadd.f32 0.0, %v1784
        %1786 = vdwg.mxu0
        %1787 = vmax.xlane.f32.xlu0 %v1748
        %v1788 = vpop.xlane.xlu0 %1787
        %1789 = vmax.xlane.f32.xlu0 %v1750
        %v1790 = vpop.xlane.xlu0 %1789
        %1791 = vmax.xlane.f32.xlu0 %v1753
        %v1792 = vpop.xlane.xlu0 %1791
        %1793 = vmax.xlane.f32.xlu0 %v1755
        %v1794 = vpop.xlane.xlu0 %1793
        %1795 = vmax.xlane.f32.xlu0 %v1758
        %v1796 = vpop.xlane.xlu0 %1795
        %1797 = vmax.xlane.f32.xlu0 %v1760
        %v1798 = vpop.xlane.xlu0 %1797
        %1799 = vmax.xlane.f32.xlu0 %v1763
        %v1800 = vpop.xlane.xlu0 %1799
        %1801 = vmax.xlane.f32.xlu0 %v1765
        %v1802 = vpop.xlane.xlu0 %1801
        %1803 = vmax.xlane.f32.xlu0 %v1768
        %v1804 = vpop.xlane.xlu0 %1803
        %1805 = vmax.xlane.f32.xlu0 %v1770
        %v1806 = vpop.xlane.xlu0 %1805
        %1807 = vmax.xlane.f32.xlu0 %v1773
        %v1808 = vpop.xlane.xlu0 %1807
        %1809 = vmax.xlane.f32.xlu0 %v1775
        %v1810 = vpop.xlane.xlu0 %1809
        %1811 = vmax.xlane.f32.xlu0 %v1778
        %v1812 = vpop.xlane.xlu0 %1811
        %1813 = vmax.xlane.f32.xlu0 %v1780
        %v1814 = vpop.xlane.xlu0 %1813
        %1815 = vmax.xlane.f32.xlu0 %v1783
        %v1816 = vpop.xlane.xlu0 %1815
        %1817 = vmax.xlane.f32.xlu0 %v1785
        %v1818 = vpop.xlane.xlu0 %1817
        %v1819 = vsub.f32 %v1748, %v1788
        %v1820 = vsub.f32 %v1750, %v1790
        %v1821 = vsub.f32 %v1753, %v1792
        %v1822 = vsub.f32 %v1755, %v1794
        %v1823 = vsub.f32 %v1758, %v1796
        %v1824 = vsub.f32 %v1760, %v1798
        %v1825 = vsub.f32 %v1763, %v1800
        %v1826 = vsub.f32 %v1765, %v1802
        %v1827 = vsub.f32 %v1768, %v1804
        %v1828 = vsub.f32 %v1770, %v1806
        %v1829 = vsub.f32 %v1773, %v1808
        %v1830 = vsub.f32 %v1775, %v1810
        %v1831 = vsub.f32 %v1778, %v1812
        %v1832 = vsub.f32 %v1780, %v1814
        %v1833 = vsub.f32 %v1783, %v1816
        %v1834 = vsub.f32 %v1785, %v1818
        %v1835 = vmul.f32 %v1819, 1.442695
        %v1836 = vpow.pop %v1835
        %v1837 = vmul.f32 %v1820, 1.442695
        %v1838 = vpow.pop %v1837
        %v1839 = vmul.f32 %v1821, 1.442695
        %v1840 = vpow.pop %v1839
        %v1841 = vmul.f32 %v1822, 1.442695
        %v1842 = vpow.pop %v1841
        %v1843 = vmul.f32 %v1823, 1.442695
        %v1844 = vpow.pop %v1843
        %v1845 = vmul.f32 %v1824, 1.442695
        %v1846 = vpow.pop %v1845
        %v1847 = vmul.f32 %v1825, 1.442695
        %v1848 = vpow.pop %v1847
        %v1849 = vmul.f32 %v1826, 1.442695
        %v1850 = vpow.pop %v1849
        %v1851 = vmul.f32 %v1827, 1.442695
        %v1852 = vpow.pop %v1851
        %v1853 = vmul.f32 %v1828, 1.442695
        %v1854 = vpow.pop %v1853
        %v1855 = vmul.f32 %v1829, 1.442695
        %v1856 = vpow.pop %v1855
        %v1857 = vmul.f32 %v1830, 1.442695
        %v1858 = vpow.pop %v1857
        %v1859 = vmul.f32 %v1831, 1.442695
        %v1860 = vpow.pop %v1859
        %v1861 = vmul.f32 %v1832, 1.442695
        %v1862 = vpow.pop %v1861
        %v1863 = vmul.f32 %v1833, 1.442695
        %v1864 = vpow.pop %v1863
        %v1865 = vmul.f32 %v1834, 1.442695
        %v1866 = vpow.pop %v1865
        %1867 = vadd.xlane.f32.xlu0 %v1836
        %v1868 = vpop.xlane.xlu0 %1867
        %1869 = vadd.xlane.f32.xlu0 %v1838
        %v1870 = vpop.xlane.xlu0 %1869
        %1871 = vadd.xlane.f32.xlu0 %v1840
        %v1872 = vpop.xlane.xlu0 %1871
        %1873 = vadd.xlane.f32.xlu0 %v1842
        %v1874 = vpop.xlane.xlu0 %1873
        %1875 = vadd.xlane.f32.xlu0 %v1844
        %v1876 = vpop.xlane.xlu0 %1875
        %1877 = vadd.xlane.f32.xlu0 %v1846
        %v1878 = vpop.xlane.xlu0 %1877
        %1879 = vadd.xlane.f32.xlu0 %v1848
        %v1880 = vpop.xlane.xlu0 %1879
        %1881 = vadd.xlane.f32.xlu0 %v1850
        %v1882 = vpop.xlane.xlu0 %1881
        %1883 = vadd.xlane.f32.xlu0 %v1852
        %v1884 = vpop.xlane.xlu0 %1883
        %1885 = vadd.xlane.f32.xlu0 %v1854
        %v1886 = vpop.xlane.xlu0 %1885
        %1887 = vadd.xlane.f32.xlu0 %v1856
        %v1888 = vpop.xlane.xlu0 %1887
        %1889 = vadd.xlane.f32.xlu0 %v1858
        %v1890 = vpop.xlane.xlu0 %1889
        %1891 = vadd.xlane.f32.xlu0 %v1860
        %v1892 = vpop.xlane.xlu0 %1891
        %1893 = vadd.xlane.f32.xlu0 %v1862
        %v1894 = vpop.xlane.xlu0 %1893
        %1895 = vadd.xlane.f32.xlu0 %v1864
        %v1896 = vpop.xlane.xlu0 %1895
        %1897 = vadd.xlane.f32.xlu0 %v1866
        %v1898 = vpop.xlane.xlu0 %1897
        %v1899 = vrcp.pop %v1868
        %v1900 = vrcp.pop %v1870
        %v1901 = vrcp.pop %v1872
        %v1902 = vrcp.pop %v1874
        %v1903 = vrcp.pop %v1876
        %v1904 = vrcp.pop %v1878
        %v1905 = vrcp.pop %v1880
        %v1906 = vrcp.pop %v1882
        %v1907 = vrcp.pop %v1884
        %v1908 = vrcp.pop %v1886
        %v1909 = vrcp.pop %v1888
        %v1910 = vrcp.pop %v1890
        %v1911 = vrcp.pop %v1892
        %v1912 = vrcp.pop %v1894
        %v1913 = vrcp.pop %v1896
        %v1914 = vrcp.pop %v1898
        %v1915 = vmul.f32 %v1836, %v1899
        %v1916 = vmul.f32 %v1838, %v1900
        %v1917 = vmul.f32 %v1840, %v1901
        %v1918 = vmul.f32 %v1842, %v1902
        %v1919 = vmul.f32 %v1844, %v1903
        %v1920 = vmul.f32 %v1846, %v1904
        %v1921 = vmul.f32 %v1848, %v1905
        %v1922 = vmul.f32 %v1850, %v1906
        %v1923 = vmul.f32 %v1852, %v1907
        %v1924 = vmul.f32 %v1854, %v1908
        %v1925 = vmul.f32 %v1856, %v1909
        %v1926 = vmul.f32 %v1858, %v1910
        %v1927 = vmul.f32 %v1860, %v1911
        %v1928 = vmul.f32 %v1862, %v1912
        %v1929 = vmul.f32 %v1864, %v1913
        %v1930 = vmul.f32 %v1866, %v1914
        %v1931 = vpack.c.bf16 %v1672, %v1672
        %v1932 = vpack.c.bf16 %v1916, %v1915
        %v1933 = vpack.c.bf16 %v1918, %v1917
        %v1934 = vpack.c.bf16 %v1920, %v1919
        %v1935 = vpack.c.bf16 %v1922, %v1921
        %v1936 = vpack.c.bf16 %v1924, %v1923
        %v1937 = vpack.c.bf16 %v1926, %v1925
        %v1938 = vpack.c.bf16 %v1928, %v1927
        %v1939 = vpack.c.bf16 %v1930, %v1929
        %1940 = vmatpush.bf16.xpose.msra.mxu0 %v1939
        %1941 = vmatpush.bf16.xpose.msra.mxu0 %v1938
        %1942 = vmatpush.bf16.xpose.msra.mxu0 %v1937
        %1943 = vmatpush.bf16.xpose.msra.mxu0 %v1936
        %1944 = vmatpush.bf16.xpose.msra.mxu0 %v1935
        %1945 = vmatpush.bf16.xpose.msra.mxu0 %v1934
        %1946 = vmatpush.bf16.xpose.msra.mxu0 %v1933
        %1947 = vmatpush.bf16.xpose.msra.mxu0 %v1932
        %1948 = vmatmul.bf16.gmra.mxu0 %v1931
        %v1949 = vpop.f32.mrf.mxu0
        %v1950 = vadd.f32 0.0, %v1949
        %v1951 = vpop.f32.mrf.mxu0
        %1952 = vdwg.mxu0
        %v1954 = vunpack.c.l.b16 %v1685
        %v1955 = vpack.c.b16 %v1954, %v1954
        %v1956 = vrot.slane %v1955, 2
        %1958 = vxpose.xlu0.c.b16.start [1/8] %v1956, 128
        %1959 = vxpose.xlu0.c.b16.cont [2/8] 0, 128
        %1960 = vxpose.xlu0.c.b16.cont [3/8] 0, 128
        %1961 = vxpose.xlu0.c.b16.cont [4/8] 0, 128
        %1962 = vxpose.xlu0.c.b16.cont [5/8] 0, 128
        %1963 = vxpose.xlu0.c.b16.cont [6/8] 0, 128
        %1964 = vxpose.xlu0.c.b16.cont [7/8] 0, 128
        %1965 = vxpose.xlu0.c.b16.end [8/8] 0, 128
        %v1966 = vpop.trf.xlu0
        %v1967 = vpop.trf.xlu0
        %v1968 = vpop.trf.xlu0
        %v1969 = vpop.trf.xlu0
        %v1970 = vpop.trf.xlu0
        %v1971 = vpop.trf.xlu0
        %v1972 = vpop.trf.xlu0
        %v1973 = vpop.trf.xlu0
        %v1975 = vunpack.c.l.b16 %v1689
        %v1976 = vpack.c.b16 %v1975, %v1975
        %v1977 = vrot.slane %v1976, 2
        %v1979 = vsel %vm1709, %v1966, 0
        %v1982 = vsel %vm1709, %v1967, 0
        %v1985 = vsel %vm1709, %v1968, 0
        %v1988 = vsel %vm1709, %v1969, 0
        %v1991 = vsel %vm1709, %v1970, 0
        %v1994 = vsel %vm1709, %v1971, 0
        %v1997 = vsel %vm1709, %v1972, 0
        %v2000 = vsel %vm1709, %v1973, 0
        %v2003 = vsel %vm1734, %v1977, 0
        %2005 = vmatpush.bf16.msra.mxu0 0
        %2006 = vmatpush.bf16.msra.mxu0 0
        %2007 = vmatpush.bf16.msra.mxu0 0
        %2008 = vmatpush.bf16.msra.mxu0 0
        %2009 = vmatpush.bf16.msra.mxu0 0
        %2010 = vmatpush.bf16.msra.mxu0 0
        %2011 = vmatpush.bf16.msra.mxu0 0
        %2012 = vmatpush.bf16.msra.mxu0 %v2003
        %2013 = vmatmul.bf16.gmra.mxu0 %v1979
        %v2014 = vpop.f32.mrf.mxu0
        %v2015 = vadd.f32 0.0, %v2014
        %v2016 = vpop.f32.mrf.mxu0
        %v2017 = vadd.f32 0.0, %v2016
        %2018 = vmatmul.bf16.gmra.mxu0 %v1982
        %v2019 = vpop.f32.mrf.mxu0
        %v2020 = vadd.f32 0.0, %v2019
        %v2021 = vpop.f32.mrf.mxu0
        %v2022 = vadd.f32 0.0, %v2021
        %2023 = vmatmul.bf16.gmra.mxu0 %v1985
        %v2024 = vpop.f32.mrf.mxu0
        %v2025 = vadd.f32 0.0, %v2024
        %v2026 = vpop.f32.mrf.mxu0
        %v2027 = vadd.f32 0.0, %v2026
        %2028 = vmatmul.bf16.gmra.mxu0 %v1988
        %v2029 = vpop.f32.mrf.mxu0
        %v2030 = vadd.f32 0.0, %v2029
        %v2031 = vpop.f32.mrf.mxu0
        %v2032 = vadd.f32 0.0, %v2031
        %2033 = vmatmul.bf16.gmra.mxu0 %v1991
        %v2034 = vpop.f32.mrf.mxu0
        %v2035 = vadd.f32 0.0, %v2034
        %v2036 = vpop.f32.mrf.mxu0
        %v2037 = vadd.f32 0.0, %v2036
        %2038 = vmatmul.bf16.gmra.mxu0 %v1994
        %v2039 = vpop.f32.mrf.mxu0
        %v2040 = vadd.f32 0.0, %v2039
        %v2041 = vpop.f32.mrf.mxu0
        %v2042 = vadd.f32 0.0, %v2041
        %2043 = vmatmul.bf16.gmra.mxu0 %v1997
        %v2044 = vpop.f32.mrf.mxu0
        %v2045 = vadd.f32 0.0, %v2044
        %v2046 = vpop.f32.mrf.mxu0
        %v2047 = vadd.f32 0.0, %v2046
        %2048 = vmatmul.bf16.gmra.mxu0 %v2000
        %v2049 = vpop.f32.mrf.mxu0
        %v2050 = vadd.f32 0.0, %v2049
        %v2051 = vpop.f32.mrf.mxu0
        %v2052 = vadd.f32 0.0, %v2051
        %2053 = vdwg.mxu0
        %2054 = vmax.xlane.f32.xlu0 %v2015
        %v2055 = vpop.xlane.xlu0 %2054
        %2056 = vmax.xlane.f32.xlu0 %v2017
        %v2057 = vpop.xlane.xlu0 %2056
        %2058 = vmax.xlane.f32.xlu0 %v2020
        %v2059 = vpop.xlane.xlu0 %2058
        %2060 = vmax.xlane.f32.xlu0 %v2022
        %v2061 = vpop.xlane.xlu0 %2060
        %2062 = vmax.xlane.f32.xlu0 %v2025
        %v2063 = vpop.xlane.xlu0 %2062
        %2064 = vmax.xlane.f32.xlu0 %v2027
        %v2065 = vpop.xlane.xlu0 %2064
        %2066 = vmax.xlane.f32.xlu0 %v2030
        %v2067 = vpop.xlane.xlu0 %2066
        %2068 = vmax.xlane.f32.xlu0 %v2032
        %v2069 = vpop.xlane.xlu0 %2068
        %2070 = vmax.xlane.f32.xlu0 %v2035
        %v2071 = vpop.xlane.xlu0 %2070
        %2072 = vmax.xlane.f32.xlu0 %v2037
        %v2073 = vpop.xlane.xlu0 %2072
        %2074 = vmax.xlane.f32.xlu0 %v2040
        %v2075 = vpop.xlane.xlu0 %2074
        %2076 = vmax.xlane.f32.xlu0 %v2042
        %v2077 = vpop.xlane.xlu0 %2076
        %2078 = vmax.xlane.f32.xlu0 %v2045
        %v2079 = vpop.xlane.xlu0 %2078
        %2080 = vmax.xlane.f32.xlu0 %v2047
        %v2081 = vpop.xlane.xlu0 %2080
        %2082 = vmax.xlane.f32.xlu0 %v2050
        %v2083 = vpop.xlane.xlu0 %2082
        %2084 = vmax.xlane.f32.xlu0 %v2052
        %v2085 = vpop.xlane.xlu0 %2084
        %v2086 = vsub.f32 %v2015, %v2055
        %v2087 = vsub.f32 %v2017, %v2057
        %v2088 = vsub.f32 %v2020, %v2059
        %v2089 = vsub.f32 %v2022, %v2061
        %v2090 = vsub.f32 %v2025, %v2063
        %v2091 = vsub.f32 %v2027, %v2065
        %v2092 = vsub.f32 %v2030, %v2067
        %v2093 = vsub.f32 %v2032, %v2069
        %v2094 = vsub.f32 %v2035, %v2071
        %v2095 = vsub.f32 %v2037, %v2073
        %v2096 = vsub.f32 %v2040, %v2075
        %v2097 = vsub.f32 %v2042, %v2077
        %v2098 = vsub.f32 %v2045, %v2079
        %v2099 = vsub.f32 %v2047, %v2081
        %v2100 = vsub.f32 %v2050, %v2083
        %v2101 = vsub.f32 %v2052, %v2085
        %v2102 = vmul.f32 %v2086, 1.442695
        %v2103 = vpow.pop %v2102
        %v2104 = vmul.f32 %v2087, 1.442695
        %v2105 = vpow.pop %v2104
        %v2106 = vmul.f32 %v2088, 1.442695
        %v2107 = vpow.pop %v2106
        %v2108 = vmul.f32 %v2089, 1.442695
        %v2109 = vpow.pop %v2108
        %v2110 = vmul.f32 %v2090, 1.442695
        %v2111 = vpow.pop %v2110
        %v2112 = vmul.f32 %v2091, 1.442695
        %v2113 = vpow.pop %v2112
        %v2114 = vmul.f32 %v2092, 1.442695
        %v2115 = vpow.pop %v2114
        %v2116 = vmul.f32 %v2093, 1.442695
        %v2117 = vpow.pop %v2116
        %v2118 = vmul.f32 %v2094, 1.442695
        %v2119 = vpow.pop %v2118
        %v2120 = vmul.f32 %v2095, 1.442695
        %v2121 = vpow.pop %v2120
        %v2122 = vmul.f32 %v2096, 1.442695
        %v2123 = vpow.pop %v2122
        %v2124 = vmul.f32 %v2097, 1.442695
        %v2125 = vpow.pop %v2124
        %v2126 = vmul.f32 %v2098, 1.442695
        %v2127 = vpow.pop %v2126
        %v2128 = vmul.f32 %v2099, 1.442695
        %v2129 = vpow.pop %v2128
        %v2130 = vmul.f32 %v2100, 1.442695
        %v2131 = vpow.pop %v2130
        %v2132 = vmul.f32 %v2101, 1.442695
        %v2133 = vpow.pop %v2132
        %2134 = vadd.xlane.f32.xlu0 %v2103
        %v2135 = vpop.xlane.xlu0 %2134
        %2136 = vadd.xlane.f32.xlu0 %v2105
        %v2137 = vpop.xlane.xlu0 %2136
        %2138 = vadd.xlane.f32.xlu0 %v2107
        %v2139 = vpop.xlane.xlu0 %2138
        %2140 = vadd.xlane.f32.xlu0 %v2109
        %v2141 = vpop.xlane.xlu0 %2140
        %2142 = vadd.xlane.f32.xlu0 %v2111
        %v2143 = vpop.xlane.xlu0 %2142
        %2144 = vadd.xlane.f32.xlu0 %v2113
        %v2145 = vpop.xlane.xlu0 %2144
        %2146 = vadd.xlane.f32.xlu0 %v2115
        %v2147 = vpop.xlane.xlu0 %2146
        %2148 = vadd.xlane.f32.xlu0 %v2117
        %v2149 = vpop.xlane.xlu0 %2148
        %2150 = vadd.xlane.f32.xlu0 %v2119
        %v2151 = vpop.xlane.xlu0 %2150
        %2152 = vadd.xlane.f32.xlu0 %v2121
        %v2153 = vpop.xlane.xlu0 %2152
        %2154 = vadd.xlane.f32.xlu0 %v2123
        %v2155 = vpop.xlane.xlu0 %2154
        %2156 = vadd.xlane.f32.xlu0 %v2125
        %v2157 = vpop.xlane.xlu0 %2156
        %2158 = vadd.xlane.f32.xlu0 %v2127
        %v2159 = vpop.xlane.xlu0 %2158
        %2160 = vadd.xlane.f32.xlu0 %v2129
        %v2161 = vpop.xlane.xlu0 %2160
        %2162 = vadd.xlane.f32.xlu0 %v2131
        %v2163 = vpop.xlane.xlu0 %2162
        %2164 = vadd.xlane.f32.xlu0 %v2133
        %v2165 = vpop.xlane.xlu0 %2164
        %v2166 = vrcp.pop %v2135
        %v2167 = vrcp.pop %v2137
        %v2168 = vrcp.pop %v2139
        %v2169 = vrcp.pop %v2141
        %v2170 = vrcp.pop %v2143
        %v2171 = vrcp.pop %v2145
        %v2172 = vrcp.pop %v2147
        %v2173 = vrcp.pop %v2149
        %v2174 = vrcp.pop %v2151
        %v2175 = vrcp.pop %v2153
        %v2176 = vrcp.pop %v2155
        %v2177 = vrcp.pop %v2157
        %v2178 = vrcp.pop %v2159
        %v2179 = vrcp.pop %v2161
        %v2180 = vrcp.pop %v2163
        %v2181 = vrcp.pop %v2165
        %v2182 = vmul.f32 %v2103, %v2166
        %v2183 = vmul.f32 %v2105, %v2167
        %v2184 = vmul.f32 %v2107, %v2168
        %v2185 = vmul.f32 %v2109, %v2169
        %v2186 = vmul.f32 %v2111, %v2170
        %v2187 = vmul.f32 %v2113, %v2171
        %v2188 = vmul.f32 %v2115, %v2172
        %v2189 = vmul.f32 %v2117, %v2173
        %v2190 = vmul.f32 %v2119, %v2174
        %v2191 = vmul.f32 %v2121, %v2175
        %v2192 = vmul.f32 %v2123, %v2176
        %v2193 = vmul.f32 %v2125, %v2177
        %v2194 = vmul.f32 %v2127, %v2178
        %v2195 = vmul.f32 %v2129, %v2179
        %v2196 = vmul.f32 %v2131, %v2180
        %v2197 = vmul.f32 %v2133, %v2181
        %v2198 = vpack.c.bf16 %v2183, %v2182
        %v2199 = vpack.c.bf16 %v2185, %v2184
        %v2200 = vpack.c.bf16 %v2187, %v2186
        %v2201 = vpack.c.bf16 %v2189, %v2188
        %v2202 = vpack.c.bf16 %v2191, %v2190
        %v2203 = vpack.c.bf16 %v2193, %v2192
        %v2204 = vpack.c.bf16 %v2195, %v2194
        %v2205 = vpack.c.bf16 %v2197, %v2196
        %v2207 = vrot.slane %v1931, 2
        %2209 = vmatpush.bf16.xpose.msra.mxu0 %v2205
        %2210 = vmatpush.bf16.xpose.msra.mxu0 %v2204
        %2211 = vmatpush.bf16.xpose.msra.mxu0 %v2203
        %2212 = vmatpush.bf16.xpose.msra.mxu0 %v2202
        %2213 = vmatpush.bf16.xpose.msra.mxu0 %v2201
        %2214 = vmatpush.bf16.xpose.msra.mxu0 %v2200
        %2215 = vmatpush.bf16.xpose.msra.mxu0 %v2199
        %2216 = vmatpush.bf16.xpose.msra.mxu0 %v2198
        %2217 = vmatmul.bf16.gmra.mxu0 %v2207
        %v2218 = vpop.f32.mrf.mxu0
        %v2219 = vadd.f32 0.0, %v2218
        %v2220 = vpop.f32.mrf.mxu0
        %2221 = vdwg.mxu0
        %2222 = vxpose.xlu0.c.b16.start [1/8] %v1686, 128
        %2223 = vxpose.xlu0.c.b16.cont [2/8] 0, 128
        %2224 = vxpose.xlu0.c.b16.cont [3/8] 0, 128
        %2225 = vxpose.xlu0.c.b16.cont [4/8] 0, 128
        %2226 = vxpose.xlu0.c.b16.cont [5/8] 0, 128
        %2227 = vxpose.xlu0.c.b16.cont [6/8] 0, 128
        %2228 = vxpose.xlu0.c.b16.cont [7/8] 0, 128
        %2229 = vxpose.xlu0.c.b16.end [8/8] 0, 128
        %v2230 = vpop.trf.xlu0
        %v2231 = vpop.trf.xlu0
        %v2232 = vpop.trf.xlu0
        %v2233 = vpop.trf.xlu0
        %v2234 = vpop.trf.xlu0
        %v2235 = vpop.trf.xlu0
        %v2236 = vpop.trf.xlu0
        %v2237 = vpop.trf.xlu0
        %v2239 = vsel %vm1709, %v2230, 0
        %v2242 = vsel %vm1709, %v2231, 0
        %v2245 = vsel %vm1709, %v2232, 0
        %v2248 = vsel %vm1709, %v2233, 0
        %v2251 = vsel %vm1709, %v2234, 0
        %v2254 = vsel %vm1709, %v2235, 0
        %v2257 = vsel %vm1709, %v2236, 0
        %v2260 = vsel %vm1709, %v2237, 0
        %v2263 = vsel %vm1734, %v1690, 0
        %2265 = vmatpush.bf16.msra.mxu0 0
        %2266 = vmatpush.bf16.msra.mxu0 0
        %2267 = vmatpush.bf16.msra.mxu0 0
        %2268 = vmatpush.bf16.msra.mxu0 0
        %2269 = vmatpush.bf16.msra.mxu0 0
        %2270 = vmatpush.bf16.msra.mxu0 0
        %2271 = vmatpush.bf16.msra.mxu0 0
        %2272 = vmatpush.bf16.msra.mxu0 %v2263
        %2273 = vmatmul.bf16.gmra.mxu0 %v2239
        %v2274 = vpop.f32.mrf.mxu0
        %v2275 = vadd.f32 0.0, %v2274
        %v2276 = vpop.f32.mrf.mxu0
        %v2277 = vadd.f32 0.0, %v2276
        %2278 = vmatmul.bf16.gmra.mxu0 %v2242
        %v2279 = vpop.f32.mrf.mxu0
        %v2280 = vadd.f32 0.0, %v2279
        %v2281 = vpop.f32.mrf.mxu0
        %v2282 = vadd.f32 0.0, %v2281
        %2283 = vmatmul.bf16.gmra.mxu0 %v2245
        %v2284 = vpop.f32.mrf.mxu0
        %v2285 = vadd.f32 0.0, %v2284
        %v2286 = vpop.f32.mrf.mxu0
        %v2287 = vadd.f32 0.0, %v2286
        %2288 = vmatmul.bf16.gmra.mxu0 %v2248
        %v2289 = vpop.f32.mrf.mxu0
        %v2290 = vadd.f32 0.0, %v2289
        %v2291 = vpop.f32.mrf.mxu0
        %v2292 = vadd.f32 0.0, %v2291
        %2293 = vmatmul.bf16.gmra.mxu0 %v2251
        %v2294 = vpop.f32.mrf.mxu0
        %v2295 = vadd.f32 0.0, %v2294
        %v2296 = vpop.f32.mrf.mxu0
        %v2297 = vadd.f32 0.0, %v2296
        %2298 = vmatmul.bf16.gmra.mxu0 %v2254
        %v2299 = vpop.f32.mrf.mxu0
        %v2300 = vadd.f32 0.0, %v2299
        %v2301 = vpop.f32.mrf.mxu0
        %v2302 = vadd.f32 0.0, %v2301
        %2303 = vmatmul.bf16.gmra.mxu0 %v2257
        %v2304 = vpop.f32.mrf.mxu0
        %v2305 = vadd.f32 0.0, %v2304
        %v2306 = vpop.f32.mrf.mxu0
        %v2307 = vadd.f32 0.0, %v2306
        %2308 = vmatmul.bf16.gmra.mxu0 %v2260
        %v2309 = vpop.f32.mrf.mxu0
        %v2310 = vadd.f32 0.0, %v2309
        %v2311 = vpop.f32.mrf.mxu0
        %v2312 = vadd.f32 0.0, %v2311
        %2313 = vdwg.mxu0
        %2314 = vmax.xlane.f32.xlu0 %v2275
        %v2315 = vpop.xlane.xlu0 %2314
        %2316 = vmax.xlane.f32.xlu0 %v2277
        %v2317 = vpop.xlane.xlu0 %2316
        %2318 = vmax.xlane.f32.xlu0 %v2280
        %v2319 = vpop.xlane.xlu0 %2318
        %2320 = vmax.xlane.f32.xlu0 %v2282
        %v2321 = vpop.xlane.xlu0 %2320
        %2322 = vmax.xlane.f32.xlu0 %v2285
        %v2323 = vpop.xlane.xlu0 %2322
        %2324 = vmax.xlane.f32.xlu0 %v2287
        %v2325 = vpop.xlane.xlu0 %2324
        %2326 = vmax.xlane.f32.xlu0 %v2290
        %v2327 = vpop.xlane.xlu0 %2326
        %2328 = vmax.xlane.f32.xlu0 %v2292
        %v2329 = vpop.xlane.xlu0 %2328
        %2330 = vmax.xlane.f32.xlu0 %v2295
        %v2331 = vpop.xlane.xlu0 %2330
        %2332 = vmax.xlane.f32.xlu0 %v2297
        %v2333 = vpop.xlane.xlu0 %2332
        %2334 = vmax.xlane.f32.xlu0 %v2300
        %v2335 = vpop.xlane.xlu0 %2334
        %2336 = vmax.xlane.f32.xlu0 %v2302
        %v2337 = vpop.xlane.xlu0 %2336
        %2338 = vmax.xlane.f32.xlu0 %v2305
        %v2339 = vpop.xlane.xlu0 %2338
        %2340 = vmax.xlane.f32.xlu0 %v2307
        %v2341 = vpop.xlane.xlu0 %2340
        %2342 = vmax.xlane.f32.xlu0 %v2310
        %v2343 = vpop.xlane.xlu0 %2342
        %2344 = vmax.xlane.f32.xlu0 %v2312
        %v2345 = vpop.xlane.xlu0 %2344
        %v2346 = vsub.f32 %v2275, %v2315
        %v2347 = vsub.f32 %v2277, %v2317
        %v2348 = vsub.f32 %v2280, %v2319
        %v2349 = vsub.f32 %v2282, %v2321
        %v2350 = vsub.f32 %v2285, %v2323
        %v2351 = vsub.f32 %v2287, %v2325
        %v2352 = vsub.f32 %v2290, %v2327
        %v2353 = vsub.f32 %v2292, %v2329
        %v2354 = vsub.f32 %v2295, %v2331
        %v2355 = vsub.f32 %v2297, %v2333
        %v2356 = vsub.f32 %v2300, %v2335
        %v2357 = vsub.f32 %v2302, %v2337
        %v2358 = vsub.f32 %v2305, %v2339
        %v2359 = vsub.f32 %v2307, %v2341
        %v2360 = vsub.f32 %v2310, %v2343
        %v2361 = vsub.f32 %v2312, %v2345
        %v2362 = vmul.f32 %v2346, 1.442695
        %v2363 = vpow.pop %v2362
        %v2364 = vmul.f32 %v2347, 1.442695
        %v2365 = vpow.pop %v2364
        %v2366 = vmul.f32 %v2348, 1.442695
        %v2367 = vpow.pop %v2366
        %v2368 = vmul.f32 %v2349, 1.442695
        %v2369 = vpow.pop %v2368
        %v2370 = vmul.f32 %v2350, 1.442695
        %v2371 = vpow.pop %v2370
        %v2372 = vmul.f32 %v2351, 1.442695
        %v2373 = vpow.pop %v2372
        %v2374 = vmul.f32 %v2352, 1.442695
        %v2375 = vpow.pop %v2374
        %v2376 = vmul.f32 %v2353, 1.442695
        %v2377 = vpow.pop %v2376
        %v2378 = vmul.f32 %v2354, 1.442695
        %v2379 = vpow.pop %v2378
        %v2380 = vmul.f32 %v2355, 1.442695
        %v2381 = vpow.pop %v2380
        %v2382 = vmul.f32 %v2356, 1.442695
        %v2383 = vpow.pop %v2382
        %v2384 = vmul.f32 %v2357, 1.442695
        %v2385 = vpow.pop %v2384
        %v2386 = vmul.f32 %v2358, 1.442695
        %v2387 = vpow.pop %v2386
        %v2388 = vmul.f32 %v2359, 1.442695
        %v2389 = vpow.pop %v2388
        %v2390 = vmul.f32 %v2360, 1.442695
        %v2391 = vpow.pop %v2390
        %v2392 = vmul.f32 %v2361, 1.442695
        %v2393 = vpow.pop %v2392
        %2394 = vadd.xlane.f32.xlu0 %v2363
        %v2395 = vpop.xlane.xlu0 %2394
        %2396 = vadd.xlane.f32.xlu0 %v2365
        %v2397 = vpop.xlane.xlu0 %2396
        %2398 = vadd.xlane.f32.xlu0 %v2367
        %v2399 = vpop.xlane.xlu0 %2398
        %2400 = vadd.xlane.f32.xlu0 %v2369
        %v2401 = vpop.xlane.xlu0 %2400
        %2402 = vadd.xlane.f32.xlu0 %v2371
        %v2403 = vpop.xlane.xlu0 %2402
        %2404 = vadd.xlane.f32.xlu0 %v2373
        %v2405 = vpop.xlane.xlu0 %2404
        %2406 = vadd.xlane.f32.xlu0 %v2375
        %v2407 = vpop.xlane.xlu0 %2406
        %2408 = vadd.xlane.f32.xlu0 %v2377
        %v2409 = vpop.xlane.xlu0 %2408
        %2410 = vadd.xlane.f32.xlu0 %v2379
        %v2411 = vpop.xlane.xlu0 %2410
        %2412 = vadd.xlane.f32.xlu0 %v2381
        %v2413 = vpop.xlane.xlu0 %2412
        %2414 = vadd.xlane.f32.xlu0 %v2383
        %v2415 = vpop.xlane.xlu0 %2414
        %2416 = vadd.xlane.f32.xlu0 %v2385
        %v2417 = vpop.xlane.xlu0 %2416
        %2418 = vadd.xlane.f32.xlu0 %v2387
        %v2419 = vpop.xlane.xlu0 %2418
        %2420 = vadd.xlane.f32.xlu0 %v2389
        %v2421 = vpop.xlane.xlu0 %2420
        %2422 = vadd.xlane.f32.xlu0 %v2391
        %v2423 = vpop.xlane.xlu0 %2422
        %2424 = vadd.xlane.f32.xlu0 %v2393
        %v2425 = vpop.xlane.xlu0 %2424
        %v2426 = vrcp.pop %v2395
        %v2427 = vrcp.pop %v2397
        %v2428 = vrcp.pop %v2399
        %v2429 = vrcp.pop %v2401
        %v2430 = vrcp.pop %v2403
        %v2431 = vrcp.pop %v2405
        %v2432 = vrcp.pop %v2407
        %v2433 = vrcp.pop %v2409
        %v2434 = vrcp.pop %v2411
        %v2435 = vrcp.pop %v2413
        %v2436 = vrcp.pop %v2415
        %v2437 = vrcp.pop %v2417
        %v2438 = vrcp.pop %v2419
        %v2439 = vrcp.pop %v2421
        %v2440 = vrcp.pop %v2423
        %v2441 = vrcp.pop %v2425
        %v2442 = vmul.f32 %v2363, %v2426
        %v2443 = vmul.f32 %v2365, %v2427
        %v2444 = vmul.f32 %v2367, %v2428
        %v2445 = vmul.f32 %v2369, %v2429
        %v2446 = vmul.f32 %v2371, %v2430
        %v2447 = vmul.f32 %v2373, %v2431
        %v2448 = vmul.f32 %v2375, %v2432
        %v2449 = vmul.f32 %v2377, %v2433
        %v2450 = vmul.f32 %v2379, %v2434
        %v2451 = vmul.f32 %v2381, %v2435
        %v2452 = vmul.f32 %v2383, %v2436
        %v2453 = vmul.f32 %v2385, %v2437
        %v2454 = vmul.f32 %v2387, %v2438
        %v2455 = vmul.f32 %v2389, %v2439
        %v2456 = vmul.f32 %v2391, %v2440
        %v2457 = vmul.f32 %v2393, %v2441
        %v2458 = vpack.c.bf16 %v1674, %v1674
        %v2459 = vpack.c.bf16 %v2443, %v2442
        %v2460 = vpack.c.bf16 %v2445, %v2444
        %v2461 = vpack.c.bf16 %v2447, %v2446
        %v2462 = vpack.c.bf16 %v2449, %v2448
        %v2463 = vpack.c.bf16 %v2451, %v2450
        %v2464 = vpack.c.bf16 %v2453, %v2452
        %v2465 = vpack.c.bf16 %v2455, %v2454
        %v2466 = vpack.c.bf16 %v2457, %v2456
        %2467 = vmatpush.bf16.xpose.msra.mxu0 %v2466
        %2468 = vmatpush.bf16.xpose.msra.mxu0 %v2465
        %2469 = vmatpush.bf16.xpose.msra.mxu0 %v2464
        %2470 = vmatpush.bf16.xpose.msra.mxu0 %v2463
        %2471 = vmatpush.bf16.xpose.msra.mxu0 %v2462
        %2472 = vmatpush.bf16.xpose.msra.mxu0 %v2461
        %2473 = vmatpush.bf16.xpose.msra.mxu0 %v2460
        %2474 = vmatpush.bf16.xpose.msra.mxu0 %v2459
        %2475 = vmatmul.bf16.gmra.mxu0 %v2458
        %v2476 = vpop.f32.mrf.mxu0
        %v2477 = vadd.f32 0.0, %v2476
        %v2478 = vpop.f32.mrf.mxu0
        %2479 = vdwg.mxu0
        %v2481 = vunpack.c.l.b16 %v1686
        %v2482 = vpack.c.b16 %v2481, %v2481
        %v2483 = vrot.slane %v2482, 2
        %2485 = vxpose.xlu0.c.b16.start [1/8] %v2483, 128
        %2486 = vxpose.xlu0.c.b16.cont [2/8] 0, 128
        %2487 = vxpose.xlu0.c.b16.cont [3/8] 0, 128
        %2488 = vxpose.xlu0.c.b16.cont [4/8] 0, 128
        %2489 = vxpose.xlu0.c.b16.cont [5/8] 0, 128
        %2490 = vxpose.xlu0.c.b16.cont [6/8] 0, 128
        %2491 = vxpose.xlu0.c.b16.cont [7/8] 0, 128
        %2492 = vxpose.xlu0.c.b16.end [8/8] 0, 128
        %v2493 = vpop.trf.xlu0
        %v2494 = vpop.trf.xlu0
        %v2495 = vpop.trf.xlu0
        %v2496 = vpop.trf.xlu0
        %v2497 = vpop.trf.xlu0
        %v2498 = vpop.trf.xlu0
        %v2499 = vpop.trf.xlu0
        %v2500 = vpop.trf.xlu0
        %v2502 = vunpack.c.l.b16 %v1690
        %v2503 = vpack.c.b16 %v2502, %v2502
        %v2504 = vrot.slane %v2503, 2
        %v2506 = vsel %vm1709, %v2493, 0
        %v2509 = vsel %vm1709, %v2494, 0
        %v2512 = vsel %vm1709, %v2495, 0
        %v2515 = vsel %vm1709, %v2496, 0
        %v2518 = vsel %vm1709, %v2497, 0
        %v2521 = vsel %vm1709, %v2498, 0
        %v2524 = vsel %vm1709, %v2499, 0
        %v2527 = vsel %vm1709, %v2500, 0
        %v2530 = vsel %vm1734, %v2504, 0
        %2532 = vmatpush.bf16.msra.mxu0 0
        %2533 = vmatpush.bf16.msra.mxu0 0
        %2534 = vmatpush.bf16.msra.mxu0 0
        %2535 = vmatpush.bf16.msra.mxu0 0
        %2536 = vmatpush.bf16.msra.mxu0 0
        %2537 = vmatpush.bf16.msra.mxu0 0
        %2538 = vmatpush.bf16.msra.mxu0 0
        %2539 = vmatpush.bf16.msra.mxu0 %v2530
        %2540 = vmatmul.bf16.gmra.mxu0 %v2506
        %v2541 = vpop.f32.mrf.mxu0
        %v2542 = vadd.f32 0.0, %v2541
        %v2543 = vpop.f32.mrf.mxu0
        %v2544 = vadd.f32 0.0, %v2543
        %2545 = vmatmul.bf16.gmra.mxu0 %v2509
        %v2546 = vpop.f32.mrf.mxu0
        %v2547 = vadd.f32 0.0, %v2546
        %v2548 = vpop.f32.mrf.mxu0
        %v2549 = vadd.f32 0.0, %v2548
        %2550 = vmatmul.bf16.gmra.mxu0 %v2512
        %v2551 = vpop.f32.mrf.mxu0
        %v2552 = vadd.f32 0.0, %v2551
        %v2553 = vpop.f32.mrf.mxu0
        %v2554 = vadd.f32 0.0, %v2553
        %2555 = vmatmul.bf16.gmra.mxu0 %v2515
        %v2556 = vpop.f32.mrf.mxu0
        %v2557 = vadd.f32 0.0, %v2556
        %v2558 = vpop.f32.mrf.mxu0
        %v2559 = vadd.f32 0.0, %v2558
        %2560 = vmatmul.bf16.gmra.mxu0 %v2518
        %v2561 = vpop.f32.mrf.mxu0
        %v2562 = vadd.f32 0.0, %v2561
        %v2563 = vpop.f32.mrf.mxu0
        %v2564 = vadd.f32 0.0, %v2563
        %2565 = vmatmul.bf16.gmra.mxu0 %v2521
        %v2566 = vpop.f32.mrf.mxu0
        %v2567 = vadd.f32 0.0, %v2566
        %v2568 = vpop.f32.mrf.mxu0
        %v2569 = vadd.f32 0.0, %v2568
        %2570 = vmatmul.bf16.gmra.mxu0 %v2524
        %v2571 = vpop.f32.mrf.mxu0
        %v2572 = vadd.f32 0.0, %v2571
        %v2573 = vpop.f32.mrf.mxu0
        %v2574 = vadd.f32 0.0, %v2573
        %2575 = vmatmul.bf16.gmra.mxu0 %v2527
        %v2576 = vpop.f32.mrf.mxu0
        %v2577 = vadd.f32 0.0, %v2576
        %v2578 = vpop.f32.mrf.mxu0
        %v2579 = vadd.f32 0.0, %v2578
        %2580 = vdwg.mxu0
        %2581 = vmax.xlane.f32.xlu0 %v2542
        %v2582 = vpop.xlane.xlu0 %2581
        %2583 = vmax.xlane.f32.xlu0 %v2544
        %v2584 = vpop.xlane.xlu0 %2583
        %2585 = vmax.xlane.f32.xlu0 %v2547
        %v2586 = vpop.xlane.xlu0 %2585
        %2587 = vmax.xlane.f32.xlu0 %v2549
        %v2588 = vpop.xlane.xlu0 %2587
        %2589 = vmax.xlane.f32.xlu0 %v2552
        %v2590 = vpop.xlane.xlu0 %2589
        %2591 = vmax.xlane.f32.xlu0 %v2554
        %v2592 = vpop.xlane.xlu0 %2591
        %2593 = vmax.xlane.f32.xlu0 %v2557
        %v2594 = vpop.xlane.xlu0 %2593
        %2595 = vmax.xlane.f32.xlu0 %v2559
        %v2596 = vpop.xlane.xlu0 %2595
        %2597 = vmax.xlane.f32.xlu0 %v2562
        %v2598 = vpop.xlane.xlu0 %2597
        %2599 = vmax.xlane.f32.xlu0 %v2564
        %v2600 = vpop.xlane.xlu0 %2599
        %2601 = vmax.xlane.f32.xlu0 %v2567
        %v2602 = vpop.xlane.xlu0 %2601
        %2603 = vmax.xlane.f32.xlu0 %v2569
        %v2604 = vpop.xlane.xlu0 %2603
        %2605 = vmax.xlane.f32.xlu0 %v2572
        %v2606 = vpop.xlane.xlu0 %2605
        %2607 = vmax.xlane.f32.xlu0 %v2574
        %v2608 = vpop.xlane.xlu0 %2607
        %2609 = vmax.xlane.f32.xlu0 %v2577
        %v2610 = vpop.xlane.xlu0 %2609
        %2611 = vmax.xlane.f32.xlu0 %v2579
        %v2612 = vpop.xlane.xlu0 %2611
        %v2613 = vsub.f32 %v2542, %v2582
        %v2614 = vsub.f32 %v2544, %v2584
        %v2615 = vsub.f32 %v2547, %v2586
        %v2616 = vsub.f32 %v2549, %v2588
        %v2617 = vsub.f32 %v2552, %v2590
        %v2618 = vsub.f32 %v2554, %v2592
        %v2619 = vsub.f32 %v2557, %v2594
        %v2620 = vsub.f32 %v2559, %v2596
        %v2621 = vsub.f32 %v2562, %v2598
        %v2622 = vsub.f32 %v2564, %v2600
        %v2623 = vsub.f32 %v2567, %v2602
        %v2624 = vsub.f32 %v2569, %v2604
        %v2625 = vsub.f32 %v2572, %v2606
        %v2626 = vsub.f32 %v2574, %v2608
        %v2627 = vsub.f32 %v2577, %v2610
        %v2628 = vsub.f32 %v2579, %v2612
        %v2629 = vmul.f32 %v2613, 1.442695
        %v2630 = vpow.pop %v2629
        %v2631 = vmul.f32 %v2614, 1.442695
        %v2632 = vpow.pop %v2631
        %v2633 = vmul.f32 %v2615, 1.442695
        %v2634 = vpow.pop %v2633
        %v2635 = vmul.f32 %v2616, 1.442695
        %v2636 = vpow.pop %v2635
        %v2637 = vmul.f32 %v2617, 1.442695
        %v2638 = vpow.pop %v2637
        %v2639 = vmul.f32 %v2618, 1.442695
        %v2640 = vpow.pop %v2639
        %v2641 = vmul.f32 %v2619, 1.442695
        %v2642 = vpow.pop %v2641
        %v2643 = vmul.f32 %v2620, 1.442695
        %v2644 = vpow.pop %v2643
        %v2645 = vmul.f32 %v2621, 1.442695
        %v2646 = vpow.pop %v2645
        %v2647 = vmul.f32 %v2622, 1.442695
        %v2648 = vpow.pop %v2647
        %v2649 = vmul.f32 %v2623, 1.442695
        %v2650 = vpow.pop %v2649
        %v2651 = vmul.f32 %v2624, 1.442695
        %v2652 = vpow.pop %v2651
        %v2653 = vmul.f32 %v2625, 1.442695
        %v2654 = vpow.pop %v2653
        %v2655 = vmul.f32 %v2626, 1.442695
        %v2656 = vpow.pop %v2655
        %v2657 = vmul.f32 %v2627, 1.442695
        %v2658 = vpow.pop %v2657
        %v2659 = vmul.f32 %v2628, 1.442695
        %v2660 = vpow.pop %v2659
        %2661 = vadd.xlane.f32.xlu0 %v2630
        %v2662 = vpop.xlane.xlu0 %2661
        %2663 = vadd.xlane.f32.xlu0 %v2632
        %v2664 = vpop.xlane.xlu0 %2663
        %2665 = vadd.xlane.f32.xlu0 %v2634
        %v2666 = vpop.xlane.xlu0 %2665
        %2667 = vadd.xlane.f32.xlu0 %v2636
        %v2668 = vpop.xlane.xlu0 %2667
        %2669 = vadd.xlane.f32.xlu0 %v2638
        %v2670 = vpop.xlane.xlu0 %2669
        %2671 = vadd.xlane.f32.xlu0 %v2640
        %v2672 = vpop.xlane.xlu0 %2671
        %2673 = vadd.xlane.f32.xlu0 %v2642
        %v2674 = vpop.xlane.xlu0 %2673
        %2675 = vadd.xlane.f32.xlu0 %v2644
        %v2676 = vpop.xlane.xlu0 %2675
        %2677 = vadd.xlane.f32.xlu0 %v2646
        %v2678 = vpop.xlane.xlu0 %2677
        %2679 = vadd.xlane.f32.xlu0 %v2648
        %v2680 = vpop.xlane.xlu0 %2679
        %2681 = vadd.xlane.f32.xlu0 %v2650
        %v2682 = vpop.xlane.xlu0 %2681
        %2683 = vadd.xlane.f32.xlu0 %v2652
        %v2684 = vpop.xlane.xlu0 %2683
        %2685 = vadd.xlane.f32.xlu0 %v2654
        %v2686 = vpop.xlane.xlu0 %2685
        %2687 = vadd.xlane.f32.xlu0 %v2656
        %v2688 = vpop.xlane.xlu0 %2687
        %2689 = vadd.xlane.f32.xlu0 %v2658
        %v2690 = vpop.xlane.xlu0 %2689
        %2691 = vadd.xlane.f32.xlu0 %v2660
        %v2692 = vpop.xlane.xlu0 %2691
        %v2693 = vrcp.pop %v2662
        %v2694 = vrcp.pop %v2664
        %v2695 = vrcp.pop %v2666
        %v2696 = vrcp.pop %v2668
        %v2697 = vrcp.pop %v2670
        %v2698 = vrcp.pop %v2672
        %v2699 = vrcp.pop %v2674
        %v2700 = vrcp.pop %v2676
        %v2701 = vrcp.pop %v2678
        %v2702 = vrcp.pop %v2680
        %v2703 = vrcp.pop %v2682
        %v2704 = vrcp.pop %v2684
        %v2705 = vrcp.pop %v2686
        %v2706 = vrcp.pop %v2688
        %v2707 = vrcp.pop %v2690
        %v2708 = vrcp.pop %v2692
        %v2709 = vmul.f32 %v2630, %v2693
        %v2710 = vmul.f32 %v2632, %v2694
        %v2711 = vmul.f32 %v2634, %v2695
        %v2712 = vmul.f32 %v2636, %v2696
        %v2713 = vmul.f32 %v2638, %v2697
        %v2714 = vmul.f32 %v2640, %v2698
        %v2715 = vmul.f32 %v2642, %v2699
        %v2716 = vmul.f32 %v2644, %v2700
        %v2717 = vmul.f32 %v2646, %v2701
        %v2718 = vmul.f32 %v2648, %v2702
        %v2719 = vmul.f32 %v2650, %v2703
        %v2720 = vmul.f32 %v2652, %v2704
        %v2721 = vmul.f32 %v2654, %v2705
        %v2722 = vmul.f32 %v2656, %v2706
        %v2723 = vmul.f32 %v2658, %v2707
        %v2724 = vmul.f32 %v2660, %v2708
        %v2725 = vpack.c.bf16 %v2710, %v2709
        %v2726 = vpack.c.bf16 %v2712, %v2711
        %v2727 = vpack.c.bf16 %v2714, %v2713
        %v2728 = vpack.c.bf16 %v2716, %v2715
        %v2729 = vpack.c.bf16 %v2718, %v2717
        %v2730 = vpack.c.bf16 %v2720, %v2719
        %v2731 = vpack.c.bf16 %v2722, %v2721
        %v2732 = vpack.c.bf16 %v2724, %v2723
        %v2734 = vrot.slane %v2458, 2
        %2736 = vmatpush.bf16.xpose.msra.mxu0 %v2732
        %2737 = vmatpush.bf16.xpose.msra.mxu0 %v2731
        %2738 = vmatpush.bf16.xpose.msra.mxu0 %v2730
        %2739 = vmatpush.bf16.xpose.msra.mxu0 %v2729
        %2740 = vmatpush.bf16.xpose.msra.mxu0 %v2728
        %2741 = vmatpush.bf16.xpose.msra.mxu0 %v2727
        %2742 = vmatpush.bf16.xpose.msra.mxu0 %v2726
        %2743 = vmatpush.bf16.xpose.msra.mxu0 %v2725
        %2744 = vmatmul.bf16.gmra.mxu0 %v2734
        %v2745 = vpop.f32.mrf.mxu0
        %v2746 = vadd.f32 0.0, %v2745
        %v2747 = vpop.f32.mrf.mxu0
        %2748 = vdwg.mxu0
        %2749 = vxpose.xlu0.c.b16.start [1/8] %v1687, 128
        %2750 = vxpose.xlu0.c.b16.cont [2/8] 0, 128
        %2751 = vxpose.xlu0.c.b16.cont [3/8] 0, 128
        %2752 = vxpose.xlu0.c.b16.cont [4/8] 0, 128
        %2753 = vxpose.xlu0.c.b16.cont [5/8] 0, 128
        %2754 = vxpose.xlu0.c.b16.cont [6/8] 0, 128
        %2755 = vxpose.xlu0.c.b16.cont [7/8] 0, 128
        %2756 = vxpose.xlu0.c.b16.end [8/8] 0, 128
        %v2757 = vpop.trf.xlu0
        %v2758 = vpop.trf.xlu0
        %v2759 = vpop.trf.xlu0
        %v2760 = vpop.trf.xlu0
        %v2761 = vpop.trf.xlu0
        %v2762 = vpop.trf.xlu0
        %v2763 = vpop.trf.xlu0
        %v2764 = vpop.trf.xlu0
        %v2766 = vsel %vm1709, %v2757, 0
        %v2769 = vsel %vm1709, %v2758, 0
        %v2772 = vsel %vm1709, %v2759, 0
        %v2775 = vsel %vm1709, %v2760, 0
        %v2778 = vsel %vm1709, %v2761, 0
        %v2781 = vsel %vm1709, %v2762, 0
        %v2784 = vsel %vm1709, %v2763, 0
        %v2787 = vsel %vm1709, %v2764, 0
        %v2790 = vsel %vm1734, %v1691, 0
        %2792 = vmatpush.bf16.msra.mxu0 0
        %2793 = vmatpush.bf16.msra.mxu0 0
        %2794 = vmatpush.bf16.msra.mxu0 0
        %2795 = vmatpush.bf16.msra.mxu0 0
        %2796 = vmatpush.bf16.msra.mxu0 0
        %2797 = vmatpush.bf16.msra.mxu0 0
        %2798 = vmatpush.bf16.msra.mxu0 0
        %2799 = vmatpush.bf16.msra.mxu0 %v2790
        %2800 = vmatmul.bf16.gmra.mxu0 %v2766
        %v2801 = vpop.f32.mrf.mxu0
        %v2802 = vadd.f32 0.0, %v2801
        %v2803 = vpop.f32.mrf.mxu0
        %v2804 = vadd.f32 0.0, %v2803
        %2805 = vmatmul.bf16.gmra.mxu0 %v2769
        %v2806 = vpop.f32.mrf.mxu0
        %v2807 = vadd.f32 0.0, %v2806
        %v2808 = vpop.f32.mrf.mxu0
        %v2809 = vadd.f32 0.0, %v2808
        %2810 = vmatmul.bf16.gmra.mxu0 %v2772
        %v2811 = vpop.f32.mrf.mxu0
        %v2812 = vadd.f32 0.0, %v2811
        %v2813 = vpop.f32.mrf.mxu0
        %v2814 = vadd.f32 0.0, %v2813
        %2815 = vmatmul.bf16.gmra.mxu0 %v2775
        %v2816 = vpop.f32.mrf.mxu0
        %v2817 = vadd.f32 0.0, %v2816
        %v2818 = vpop.f32.mrf.mxu0
        %v2819 = vadd.f32 0.0, %v2818
        %2820 = vmatmul.bf16.gmra.mxu0 %v2778
        %v2821 = vpop.f32.mrf.mxu0
        %v2822 = vadd.f32 0.0, %v2821
        %v2823 = vpop.f32.mrf.mxu0
        %v2824 = vadd.f32 0.0, %v2823
        %2825 = vmatmul.bf16.gmra.mxu0 %v2781
        %v2826 = vpop.f32.mrf.mxu0
        %v2827 = vadd.f32 0.0, %v2826
        %v2828 = vpop.f32.mrf.mxu0
        %v2829 = vadd.f32 0.0, %v2828
        %2830 = vmatmul.bf16.gmra.mxu0 %v2784
        %v2831 = vpop.f32.mrf.mxu0
        %v2832 = vadd.f32 0.0, %v2831
        %v2833 = vpop.f32.mrf.mxu0
        %v2834 = vadd.f32 0.0, %v2833
        %2835 = vmatmul.bf16.gmra.mxu0 %v2787
        %v2836 = vpop.f32.mrf.mxu0
        %v2837 = vadd.f32 0.0, %v2836
        %v2838 = vpop.f32.mrf.mxu0
        %v2839 = vadd.f32 0.0, %v2838
        %2840 = vdwg.mxu0
        %2841 = vmax.xlane.f32.xlu0 %v2802
        %v2842 = vpop.xlane.xlu0 %2841
        %2843 = vmax.xlane.f32.xlu0 %v2804
        %v2844 = vpop.xlane.xlu0 %2843
        %2845 = vmax.xlane.f32.xlu0 %v2807
        %v2846 = vpop.xlane.xlu0 %2845
        %2847 = vmax.xlane.f32.xlu0 %v2809
        %v2848 = vpop.xlane.xlu0 %2847
        %2849 = vmax.xlane.f32.xlu0 %v2812
        %v2850 = vpop.xlane.xlu0 %2849
        %2851 = vmax.xlane.f32.xlu0 %v2814
        %v2852 = vpop.xlane.xlu0 %2851
        %2853 = vmax.xlane.f32.xlu0 %v2817
        %v2854 = vpop.xlane.xlu0 %2853
        %2855 = vmax.xlane.f32.xlu0 %v2819
        %v2856 = vpop.xlane.xlu0 %2855
        %2857 = vmax.xlane.f32.xlu0 %v2822
        %v2858 = vpop.xlane.xlu0 %2857
        %2859 = vmax.xlane.f32.xlu0 %v2824
        %v2860 = vpop.xlane.xlu0 %2859
        %2861 = vmax.xlane.f32.xlu0 %v2827
        %v2862 = vpop.xlane.xlu0 %2861
        %2863 = vmax.xlane.f32.xlu0 %v2829
        %v2864 = vpop.xlane.xlu0 %2863
        %2865 = vmax.xlane.f32.xlu0 %v2832
        %v2866 = vpop.xlane.xlu0 %2865
        %2867 = vmax.xlane.f32.xlu0 %v2834
        %v2868 = vpop.xlane.xlu0 %2867
        %2869 = vmax.xlane.f32.xlu0 %v2837
        %v2870 = vpop.xlane.xlu0 %2869
        %2871 = vmax.xlane.f32.xlu0 %v2839
        %v2872 = vpop.xlane.xlu0 %2871
        %v2873 = vsub.f32 %v2802, %v2842
        %v2874 = vsub.f32 %v2804, %v2844
        %v2875 = vsub.f32 %v2807, %v2846
        %v2876 = vsub.f32 %v2809, %v2848
        %v2877 = vsub.f32 %v2812, %v2850
        %v2878 = vsub.f32 %v2814, %v2852
        %v2879 = vsub.f32 %v2817, %v2854
        %v2880 = vsub.f32 %v2819, %v2856
        %v2881 = vsub.f32 %v2822, %v2858
        %v2882 = vsub.f32 %v2824, %v2860
        %v2883 = vsub.f32 %v2827, %v2862
        %v2884 = vsub.f32 %v2829, %v2864
        %v2885 = vsub.f32 %v2832, %v2866
        %v2886 = vsub.f32 %v2834, %v2868
        %v2887 = vsub.f32 %v2837, %v2870
        %v2888 = vsub.f32 %v2839, %v2872
        %v2889 = vmul.f32 %v2873, 1.442695
        %v2890 = vpow.pop %v2889
        %v2891 = vmul.f32 %v2874, 1.442695
        %v2892 = vpow.pop %v2891
        %v2893 = vmul.f32 %v2875, 1.442695
        %v2894 = vpow.pop %v2893
        %v2895 = vmul.f32 %v2876, 1.442695
        %v2896 = vpow.pop %v2895
        %v2897 = vmul.f32 %v2877, 1.442695
        %v2898 = vpow.pop %v2897
        %v2899 = vmul.f32 %v2878, 1.442695
        %v2900 = vpow.pop %v2899
        %v2901 = vmul.f32 %v2879, 1.442695
        %v2902 = vpow.pop %v2901
        %v2903 = vmul.f32 %v2880, 1.442695
        %v2904 = vpow.pop %v2903
        %v2905 = vmul.f32 %v2881, 1.442695
        %v2906 = vpow.pop %v2905
        %v2907 = vmul.f32 %v2882, 1.442695
        %v2908 = vpow.pop %v2907
        %v2909 = vmul.f32 %v2883, 1.442695
        %v2910 = vpow.pop %v2909
        %v2911 = vmul.f32 %v2884, 1.442695
        %v2912 = vpow.pop %v2911
        %v2913 = vmul.f32 %v2885, 1.442695
        %v2914 = vpow.pop %v2913
        %v2915 = vmul.f32 %v2886, 1.442695
        %v2916 = vpow.pop %v2915
        %v2917 = vmul.f32 %v2887, 1.442695
        %v2918 = vpow.pop %v2917
        %v2919 = vmul.f32 %v2888, 1.442695
        %v2920 = vpow.pop %v2919
        %2921 = vadd.xlane.f32.xlu0 %v2890
        %v2922 = vpop.xlane.xlu0 %2921
        %2923 = vadd.xlane.f32.xlu0 %v2892
        %v2924 = vpop.xlane.xlu0 %2923
        %2925 = vadd.xlane.f32.xlu0 %v2894
        %v2926 = vpop.xlane.xlu0 %2925
        %2927 = vadd.xlane.f32.xlu0 %v2896
        %v2928 = vpop.xlane.xlu0 %2927
        %2929 = vadd.xlane.f32.xlu0 %v2898
        %v2930 = vpop.xlane.xlu0 %2929
        %2931 = vadd.xlane.f32.xlu0 %v2900
        %v2932 = vpop.xlane.xlu0 %2931
        %2933 = vadd.xlane.f32.xlu0 %v2902
        %v2934 = vpop.xlane.xlu0 %2933
        %2935 = vadd.xlane.f32.xlu0 %v2904
        %v2936 = vpop.xlane.xlu0 %2935
        %2937 = vadd.xlane.f32.xlu0 %v2906
        %v2938 = vpop.xlane.xlu0 %2937
        %2939 = vadd.xlane.f32.xlu0 %v2908
        %v2940 = vpop.xlane.xlu0 %2939
        %2941 = vadd.xlane.f32.xlu0 %v2910
        %v2942 = vpop.xlane.xlu0 %2941
        %2943 = vadd.xlane.f32.xlu0 %v2912
        %v2944 = vpop.xlane.xlu0 %2943
        %2945 = vadd.xlane.f32.xlu0 %v2914
        %v2946 = vpop.xlane.xlu0 %2945
        %2947 = vadd.xlane.f32.xlu0 %v2916
        %v2948 = vpop.xlane.xlu0 %2947
        %2949 = vadd.xlane.f32.xlu0 %v2918
        %v2950 = vpop.xlane.xlu0 %2949
        %2951 = vadd.xlane.f32.xlu0 %v2920
        %v2952 = vpop.xlane.xlu0 %2951
        %v2953 = vrcp.pop %v2922
        %v2954 = vrcp.pop %v2924
        %v2955 = vrcp.pop %v2926
        %v2956 = vrcp.pop %v2928
        %v2957 = vrcp.pop %v2930
        %v2958 = vrcp.pop %v2932
        %v2959 = vrcp.pop %v2934
        %v2960 = vrcp.pop %v2936
        %v2961 = vrcp.pop %v2938
        %v2962 = vrcp.pop %v2940
        %v2963 = vrcp.pop %v2942
        %v2964 = vrcp.pop %v2944
        %v2965 = vrcp.pop %v2946
        %v2966 = vrcp.pop %v2948
        %v2967 = vrcp.pop %v2950
        %v2968 = vrcp.pop %v2952
        %v2969 = vmul.f32 %v2890, %v2953
        %v2970 = vmul.f32 %v2892, %v2954
        %v2971 = vmul.f32 %v2894, %v2955
        %v2972 = vmul.f32 %v2896, %v2956
        %v2973 = vmul.f32 %v2898, %v2957
        %v2974 = vmul.f32 %v2900, %v2958
        %v2975 = vmul.f32 %v2902, %v2959
        %v2976 = vmul.f32 %v2904, %v2960
        %v2977 = vmul.f32 %v2906, %v2961
        %v2978 = vmul.f32 %v2908, %v2962
        %v2979 = vmul.f32 %v2910, %v2963
        %v2980 = vmul.f32 %v2912, %v2964
        %v2981 = vmul.f32 %v2914, %v2965
        %v2982 = vmul.f32 %v2916, %v2966
        %v2983 = vmul.f32 %v2918, %v2967
        %v2984 = vmul.f32 %v2920, %v2968
        %v2985 = vpack.c.bf16 %v1677, %v1677
        %v2986 = vpack.c.bf16 %v2970, %v2969
        %v2987 = vpack.c.bf16 %v2972, %v2971
        %v2988 = vpack.c.bf16 %v2974, %v2973
        %v2989 = vpack.c.bf16 %v2976, %v2975
        %v2990 = vpack.c.bf16 %v2978, %v2977
        %v2991 = vpack.c.bf16 %v2980, %v2979
        %v2992 = vpack.c.bf16 %v2982, %v2981
        %v2993 = vpack.c.bf16 %v2984, %v2983
        %2994 = vmatpush.bf16.xpose.msra.mxu0 %v2993
        %2995 = vmatpush.bf16.xpose.msra.mxu0 %v2992
        %2996 = vmatpush.bf16.xpose.msra.mxu0 %v2991
        %2997 = vmatpush.bf16.xpose.msra.mxu0 %v2990
        %2998 = vmatpush.bf16.xpose.msra.mxu0 %v2989
        %2999 = vmatpush.bf16.xpose.msra.mxu0 %v2988
        %3000 = vmatpush.bf16.xpose.msra.mxu0 %v2987
        %3001 = vmatpush.bf16.xpose.msra.mxu0 %v2986
        %3002 = vmatmul.bf16.gmra.mxu0 %v2985
        %v3003 = vpop.f32.mrf.mxu0
        %v3004 = vadd.f32 0.0, %v3003
        %v3005 = vpop.f32.mrf.mxu0
        %3006 = vdwg.mxu0
        %v3008 = vunpack.c.l.b16 %v1687
        %v3009 = vpack.c.b16 %v3008, %v3008
        %v3010 = vrot.slane %v3009, 2
        %3012 = vxpose.xlu0.c.b16.start [1/8] %v3010, 128
        %3013 = vxpose.xlu0.c.b16.cont [2/8] 0, 128
        %3014 = vxpose.xlu0.c.b16.cont [3/8] 0, 128
        %3015 = vxpose.xlu0.c.b16.cont [4/8] 0, 128
        %3016 = vxpose.xlu0.c.b16.cont [5/8] 0, 128
        %3017 = vxpose.xlu0.c.b16.cont [6/8] 0, 128
        %3018 = vxpose.xlu0.c.b16.cont [7/8] 0, 128
        %3019 = vxpose.xlu0.c.b16.end [8/8] 0, 128
        %v3020 = vpop.trf.xlu0
        %v3021 = vpop.trf.xlu0
        %v3022 = vpop.trf.xlu0
        %v3023 = vpop.trf.xlu0
        %v3024 = vpop.trf.xlu0
        %v3025 = vpop.trf.xlu0
        %v3026 = vpop.trf.xlu0
        %v3027 = vpop.trf.xlu0
        %v3029 = vunpack.c.l.b16 %v1691
        %v3030 = vpack.c.b16 %v3029, %v3029
        %v3031 = vrot.slane %v3030, 2
        %v3033 = vsel %vm1709, %v3020, 0
        %v3036 = vsel %vm1709, %v3021, 0
        %v3039 = vsel %vm1709, %v3022, 0
        %v3042 = vsel %vm1709, %v3023, 0
        %v3045 = vsel %vm1709, %v3024, 0
        %v3048 = vsel %vm1709, %v3025, 0
        %v3051 = vsel %vm1709, %v3026, 0
        %v3054 = vsel %vm1709, %v3027, 0
        %v3057 = vsel %vm1734, %v3031, 0
        %3059 = vmatpush.bf16.msra.mxu0 0
        %3060 = vmatpush.bf16.msra.mxu0 0
        %3061 = vmatpush.bf16.msra.mxu0 0
        %3062 = vmatpush.bf16.msra.mxu0 0
        %3063 = vmatpush.bf16.msra.mxu0 0
        %3064 = vmatpush.bf16.msra.mxu0 0
        %3065 = vmatpush.bf16.msra.mxu0 0
        %3066 = vmatpush.bf16.msra.mxu0 %v3057
        %3067 = vmatmul.bf16.gmra.mxu0 %v3033
        %v3068 = vpop.f32.mrf.mxu0
        %v3069 = vadd.f32 0.0, %v3068
        %v3070 = vpop.f32.mrf.mxu0
        %v3071 = vadd.f32 0.0, %v3070
        %3072 = vmatmul.bf16.gmra.mxu0 %v3036
        %v3073 = vpop.f32.mrf.mxu0
        %v3074 = vadd.f32 0.0, %v3073
        %v3075 = vpop.f32.mrf.mxu0
        %v3076 = vadd.f32 0.0, %v3075
        %3077 = vmatmul.bf16.gmra.mxu0 %v3039
        %v3078 = vpop.f32.mrf.mxu0
        %v3079 = vadd.f32 0.0, %v3078
        %v3080 = vpop.f32.mrf.mxu0
        %v3081 = vadd.f32 0.0, %v3080
        %3082 = vmatmul.bf16.gmra.mxu0 %v3042
        %v3083 = vpop.f32.mrf.mxu0
        %v3084 = vadd.f32 0.0, %v3083
        %v3085 = vpop.f32.mrf.mxu0
        %v3086 = vadd.f32 0.0, %v3085
        %3087 = vmatmul.bf16.gmra.mxu0 %v3045
        %v3088 = vpop.f32.mrf.mxu0
        %v3089 = vadd.f32 0.0, %v3088
        %v3090 = vpop.f32.mrf.mxu0
        %v3091 = vadd.f32 0.0, %v3090
        %3092 = vmatmul.bf16.gmra.mxu0 %v3048
        %v3093 = vpop.f32.mrf.mxu0
        %v3094 = vadd.f32 0.0, %v3093
        %v3095 = vpop.f32.mrf.mxu0
        %v3096 = vadd.f32 0.0, %v3095
        %3097 = vmatmul.bf16.gmra.mxu0 %v3051
        %v3098 = vpop.f32.mrf.mxu0
        %v3099 = vadd.f32 0.0, %v3098
        %v3100 = vpop.f32.mrf.mxu0
        %v3101 = vadd.f32 0.0, %v3100
        %3102 = vmatmul.bf16.gmra.mxu0 %v3054
        %v3103 = vpop.f32.mrf.mxu0
        %v3104 = vadd.f32 0.0, %v3103
        %v3105 = vpop.f32.mrf.mxu0
        %v3106 = vadd.f32 0.0, %v3105
        %3107 = vdwg.mxu0
        %3108 = vmax.xlane.f32.xlu0 %v3069
        %v3109 = vpop.xlane.xlu0 %3108
        %3110 = vmax.xlane.f32.xlu0 %v3071
        %v3111 = vpop.xlane.xlu0 %3110
        %3112 = vmax.xlane.f32.xlu0 %v3074
        %v3113 = vpop.xlane.xlu0 %3112
        %3114 = vmax.xlane.f32.xlu0 %v3076
        %v3115 = vpop.xlane.xlu0 %3114
        %3116 = vmax.xlane.f32.xlu0 %v3079
        %v3117 = vpop.xlane.xlu0 %3116
        %3118 = vmax.xlane.f32.xlu0 %v3081
        %v3119 = vpop.xlane.xlu0 %3118
        %3120 = vmax.xlane.f32.xlu0 %v3084
        %v3121 = vpop.xlane.xlu0 %3120
        %3122 = vmax.xlane.f32.xlu0 %v3086
        %v3123 = vpop.xlane.xlu0 %3122
        %3124 = vmax.xlane.f32.xlu0 %v3089
        %v3125 = vpop.xlane.xlu0 %3124
        %3126 = vmax.xlane.f32.xlu0 %v3091
        %v3127 = vpop.xlane.xlu0 %3126
        %3128 = vmax.xlane.f32.xlu0 %v3094
        %v3129 = vpop.xlane.xlu0 %3128
        %3130 = vmax.xlane.f32.xlu0 %v3096
        %v3131 = vpop.xlane.xlu0 %3130
        %3132 = vmax.xlane.f32.xlu0 %v3099
        %v3133 = vpop.xlane.xlu0 %3132
        %3134 = vmax.xlane.f32.xlu0 %v3101
        %v3135 = vpop.xlane.xlu0 %3134
        %3136 = vmax.xlane.f32.xlu0 %v3104
        %v3137 = vpop.xlane.xlu0 %3136
        %3138 = vmax.xlane.f32.xlu0 %v3106
        %v3139 = vpop.xlane.xlu0 %3138
        %v3140 = vsub.f32 %v3069, %v3109
        %v3141 = vsub.f32 %v3071, %v3111
        %v3142 = vsub.f32 %v3074, %v3113
        %v3143 = vsub.f32 %v3076, %v3115
        %v3144 = vsub.f32 %v3079, %v3117
        %v3145 = vsub.f32 %v3081, %v3119
        %v3146 = vsub.f32 %v3084, %v3121
        %v3147 = vsub.f32 %v3086, %v3123
        %v3148 = vsub.f32 %v3089, %v3125
        %v3149 = vsub.f32 %v3091, %v3127
        %v3150 = vsub.f32 %v3094, %v3129
        %v3151 = vsub.f32 %v3096, %v3131
        %v3152 = vsub.f32 %v3099, %v3133
        %v3153 = vsub.f32 %v3101, %v3135
        %v3154 = vsub.f32 %v3104, %v3137
        %v3155 = vsub.f32 %v3106, %v3139
        %v3156 = vmul.f32 %v3140, 1.442695
        %v3157 = vpow.pop %v3156
        %v3158 = vmul.f32 %v3141, 1.442695
        %v3159 = vpow.pop %v3158
        %v3160 = vmul.f32 %v3142, 1.442695
        %v3161 = vpow.pop %v3160
        %v3162 = vmul.f32 %v3143, 1.442695
        %v3163 = vpow.pop %v3162
        %v3164 = vmul.f32 %v3144, 1.442695
        %v3165 = vpow.pop %v3164
        %v3166 = vmul.f32 %v3145, 1.442695
        %v3167 = vpow.pop %v3166
        %v3168 = vmul.f32 %v3146, 1.442695
        %v3169 = vpow.pop %v3168
        %v3170 = vmul.f32 %v3147, 1.442695
        %v3171 = vpow.pop %v3170
        %v3172 = vmul.f32 %v3148, 1.442695
        %v3173 = vpow.pop %v3172
        %v3174 = vmul.f32 %v3149, 1.442695
        %v3175 = vpow.pop %v3174
        %v3176 = vmul.f32 %v3150, 1.442695
        %v3177 = vpow.pop %v3176
        %v3178 = vmul.f32 %v3151, 1.442695
        %v3179 = vpow.pop %v3178
        %v3180 = vmul.f32 %v3152, 1.442695
        %v3181 = vpow.pop %v3180
        %v3182 = vmul.f32 %v3153, 1.442695
        %v3183 = vpow.pop %v3182
        %v3184 = vmul.f32 %v3154, 1.442695
        %v3185 = vpow.pop %v3184
        %v3186 = vmul.f32 %v3155, 1.442695
        %v3187 = vpow.pop %v3186
        %3188 = vadd.xlane.f32.xlu0 %v3157
        %v3189 = vpop.xlane.xlu0 %3188
        %3190 = vadd.xlane.f32.xlu0 %v3159
        %v3191 = vpop.xlane.xlu0 %3190
        %3192 = vadd.xlane.f32.xlu0 %v3161
        %v3193 = vpop.xlane.xlu0 %3192
        %3194 = vadd.xlane.f32.xlu0 %v3163
        %v3195 = vpop.xlane.xlu0 %3194
        %3196 = vadd.xlane.f32.xlu0 %v3165
        %v3197 = vpop.xlane.xlu0 %3196
        %3198 = vadd.xlane.f32.xlu0 %v3167
        %v3199 = vpop.xlane.xlu0 %3198
        %3200 = vadd.xlane.f32.xlu0 %v3169
        %v3201 = vpop.xlane.xlu0 %3200
        %3202 = vadd.xlane.f32.xlu0 %v3171
        %v3203 = vpop.xlane.xlu0 %3202
        %3204 = vadd.xlane.f32.xlu0 %v3173
        %v3205 = vpop.xlane.xlu0 %3204
        %3206 = vadd.xlane.f32.xlu0 %v3175
        %v3207 = vpop.xlane.xlu0 %3206
        %3208 = vadd.xlane.f32.xlu0 %v3177
        %v3209 = vpop.xlane.xlu0 %3208
        %3210 = vadd.xlane.f32.xlu0 %v3179
        %v3211 = vpop.xlane.xlu0 %3210
        %3212 = vadd.xlane.f32.xlu0 %v3181
        %v3213 = vpop.xlane.xlu0 %3212
        %3214 = vadd.xlane.f32.xlu0 %v3183
        %v3215 = vpop.xlane.xlu0 %3214
        %3216 = vadd.xlane.f32.xlu0 %v3185
        %v3217 = vpop.xlane.xlu0 %3216
        %3218 = vadd.xlane.f32.xlu0 %v3187
        %v3219 = vpop.xlane.xlu0 %3218
        %v3220 = vrcp.pop %v3189
        %v3221 = vrcp.pop %v3191
        %v3222 = vrcp.pop %v3193
        %v3223 = vrcp.pop %v3195
        %v3224 = vrcp.pop %v3197
        %v3225 = vrcp.pop %v3199
        %v3226 = vrcp.pop %v3201
        %v3227 = vrcp.pop %v3203
        %v3228 = vrcp.pop %v3205
        %v3229 = vrcp.pop %v3207
        %v3230 = vrcp.pop %v3209
        %v3231 = vrcp.pop %v3211
        %v3232 = vrcp.pop %v3213
        %v3233 = vrcp.pop %v3215
        %v3234 = vrcp.pop %v3217
        %v3235 = vrcp.pop %v3219
        %v3236 = vmul.f32 %v3157, %v3220
        %v3237 = vmul.f32 %v3159, %v3221
        %v3238 = vmul.f32 %v3161, %v3222
        %v3239 = vmul.f32 %v3163, %v3223
        %v3240 = vmul.f32 %v3165, %v3224
        %v3241 = vmul.f32 %v3167, %v3225
        %v3242 = vmul.f32 %v3169, %v3226
        %v3243 = vmul.f32 %v3171, %v3227
        %v3244 = vmul.f32 %v3173, %v3228
        %v3245 = vmul.f32 %v3175, %v3229
        %v3246 = vmul.f32 %v3177, %v3230
        %v3247 = vmul.f32 %v3179, %v3231
        %v3248 = vmul.f32 %v3181, %v3232
        %v3249 = vmul.f32 %v3183, %v3233
        %v3250 = vmul.f32 %v3185, %v3234
        %v3251 = vmul.f32 %v3187, %v3235
        %v3252 = vpack.c.bf16 %v3237, %v3236
        %v3253 = vpack.c.bf16 %v3239, %v3238
        %v3254 = vpack.c.bf16 %v3241, %v3240
        %v3255 = vpack.c.bf16 %v3243, %v3242
        %v3256 = vpack.c.bf16 %v3245, %v3244
        %v3257 = vpack.c.bf16 %v3247, %v3246
        %v3258 = vpack.c.bf16 %v3249, %v3248
        %v3259 = vpack.c.bf16 %v3251, %v3250
        %v3261 = vrot.slane %v2985, 2
        %3263 = vmatpush.bf16.xpose.msra.mxu0 %v3259
        %3264 = vmatpush.bf16.xpose.msra.mxu0 %v3258
        %3265 = vmatpush.bf16.xpose.msra.mxu0 %v3257
        %3266 = vmatpush.bf16.xpose.msra.mxu0 %v3256
        %3267 = vmatpush.bf16.xpose.msra.mxu0 %v3255
        %3268 = vmatpush.bf16.xpose.msra.mxu0 %v3254
        %3269 = vmatpush.bf16.xpose.msra.mxu0 %v3253
        %3270 = vmatpush.bf16.xpose.msra.mxu0 %v3252
        %3271 = vmatmul.bf16.gmra.mxu0 %v3261
        %v3272 = vpop.f32.mrf.mxu0
        %v3273 = vadd.f32 0.0, %v3272
        %v3274 = vpop.f32.mrf.mxu0
        %3275 = vdwg.mxu0
        %3276 = vxpose.xlu0.c.b16.start [1/8] %v1688, 128
        %3277 = vxpose.xlu0.c.b16.cont [2/8] 0, 128
        %3278 = vxpose.xlu0.c.b16.cont [3/8] 0, 128
        %3279 = vxpose.xlu0.c.b16.cont [4/8] 0, 128
        %3280 = vxpose.xlu0.c.b16.cont [5/8] 0, 128
        %3281 = vxpose.xlu0.c.b16.cont [6/8] 0, 128
        %3282 = vxpose.xlu0.c.b16.cont [7/8] 0, 128
        %3283 = vxpose.xlu0.c.b16.end [8/8] 0, 128
        %v3284 = vpop.trf.xlu0
        %v3285 = vpop.trf.xlu0
        %v3286 = vpop.trf.xlu0
        %v3287 = vpop.trf.xlu0
        %v3288 = vpop.trf.xlu0
        %v3289 = vpop.trf.xlu0
        %v3290 = vpop.trf.xlu0
        %v3291 = vpop.trf.xlu0
        %v3293 = vsel %vm1709, %v3284, 0
        %v3296 = vsel %vm1709, %v3285, 0
        %v3299 = vsel %vm1709, %v3286, 0
        %v3302 = vsel %vm1709, %v3287, 0
        %v3305 = vsel %vm1709, %v3288, 0
        %v3308 = vsel %vm1709, %v3289, 0
        %v3311 = vsel %vm1709, %v3290, 0
        %v3314 = vsel %vm1709, %v3291, 0
        %v3317 = vsel %vm1734, %v1692, 0
        %3319 = vmatpush.bf16.msra.mxu0 0
        %3320 = vmatpush.bf16.msra.mxu0 0
        %3321 = vmatpush.bf16.msra.mxu0 0
        %3322 = vmatpush.bf16.msra.mxu0 0
        %3323 = vmatpush.bf16.msra.mxu0 0
        %3324 = vmatpush.bf16.msra.mxu0 0
        %3325 = vmatpush.bf16.msra.mxu0 0
        %3326 = vmatpush.bf16.msra.mxu0 %v3317
        %3327 = vmatmul.bf16.gmra.mxu0 %v3293
        %v3328 = vpop.f32.mrf.mxu0
        %v3329 = vadd.f32 0.0, %v3328
        %v3330 = vpop.f32.mrf.mxu0
        %v3331 = vadd.f32 0.0, %v3330
        %3332 = vmatmul.bf16.gmra.mxu0 %v3296
        %v3333 = vpop.f32.mrf.mxu0
        %v3334 = vadd.f32 0.0, %v3333
        %v3335 = vpop.f32.mrf.mxu0
        %v3336 = vadd.f32 0.0, %v3335
        %3337 = vmatmul.bf16.gmra.mxu0 %v3299
        %v3338 = vpop.f32.mrf.mxu0
        %v3339 = vadd.f32 0.0, %v3338
        %v3340 = vpop.f32.mrf.mxu0
        %v3341 = vadd.f32 0.0, %v3340
        %3342 = vmatmul.bf16.gmra.mxu0 %v3302
        %v3343 = vpop.f32.mrf.mxu0
        %v3344 = vadd.f32 0.0, %v3343
        %v3345 = vpop.f32.mrf.mxu0
        %v3346 = vadd.f32 0.0, %v3345
        %3347 = vmatmul.bf16.gmra.mxu0 %v3305
        %v3348 = vpop.f32.mrf.mxu0
        %v3349 = vadd.f32 0.0, %v3348
        %v3350 = vpop.f32.mrf.mxu0
        %v3351 = vadd.f32 0.0, %v3350
        %3352 = vmatmul.bf16.gmra.mxu0 %v3308
        %v3353 = vpop.f32.mrf.mxu0
        %v3354 = vadd.f32 0.0, %v3353
        %v3355 = vpop.f32.mrf.mxu0
        %v3356 = vadd.f32 0.0, %v3355
        %3357 = vmatmul.bf16.gmra.mxu0 %v3311
        %v3358 = vpop.f32.mrf.mxu0
        %v3359 = vadd.f32 0.0, %v3358
        %v3360 = vpop.f32.mrf.mxu0
        %v3361 = vadd.f32 0.0, %v3360
        %3362 = vmatmul.bf16.gmra.mxu0 %v3314
        %v3363 = vpop.f32.mrf.mxu0
        %v3364 = vadd.f32 0.0, %v3363
        %v3365 = vpop.f32.mrf.mxu0
        %v3366 = vadd.f32 0.0, %v3365
        %3367 = vdwg.mxu0
        %3368 = vmax.xlane.f32.xlu0 %v3329
        %v3369 = vpop.xlane.xlu0 %3368
        %3370 = vmax.xlane.f32.xlu0 %v3331
        %v3371 = vpop.xlane.xlu0 %3370
        %3372 = vmax.xlane.f32.xlu0 %v3334
        %v3373 = vpop.xlane.xlu0 %3372
        %3374 = vmax.xlane.f32.xlu0 %v3336
        %v3375 = vpop.xlane.xlu0 %3374
        %3376 = vmax.xlane.f32.xlu0 %v3339
        %v3377 = vpop.xlane.xlu0 %3376
        %3378 = vmax.xlane.f32.xlu0 %v3341
        %v3379 = vpop.xlane.xlu0 %3378
        %3380 = vmax.xlane.f32.xlu0 %v3344
        %v3381 = vpop.xlane.xlu0 %3380
        %3382 = vmax.xlane.f32.xlu0 %v3346
        %v3383 = vpop.xlane.xlu0 %3382
        %3384 = vmax.xlane.f32.xlu0 %v3349
        %v3385 = vpop.xlane.xlu0 %3384
        %3386 = vmax.xlane.f32.xlu0 %v3351
        %v3387 = vpop.xlane.xlu0 %3386
        %3388 = vmax.xlane.f32.xlu0 %v3354
        %v3389 = vpop.xlane.xlu0 %3388
        %3390 = vmax.xlane.f32.xlu0 %v3356
        %v3391 = vpop.xlane.xlu0 %3390
        %3392 = vmax.xlane.f32.xlu0 %v3359
        %v3393 = vpop.xlane.xlu0 %3392
        %3394 = vmax.xlane.f32.xlu0 %v3361
        %v3395 = vpop.xlane.xlu0 %3394
        %3396 = vmax.xlane.f32.xlu0 %v3364
        %v3397 = vpop.xlane.xlu0 %3396
        %3398 = vmax.xlane.f32.xlu0 %v3366
        %v3399 = vpop.xlane.xlu0 %3398
        %v3400 = vsub.f32 %v3329, %v3369
        %v3401 = vsub.f32 %v3331, %v3371
        %v3402 = vsub.f32 %v3334, %v3373
        %v3403 = vsub.f32 %v3336, %v3375
        %v3404 = vsub.f32 %v3339, %v3377
        %v3405 = vsub.f32 %v3341, %v3379
        %v3406 = vsub.f32 %v3344, %v3381
        %v3407 = vsub.f32 %v3346, %v3383
        %v3408 = vsub.f32 %v3349, %v3385
        %v3409 = vsub.f32 %v3351, %v3387
        %v3410 = vsub.f32 %v3354, %v3389
        %v3411 = vsub.f32 %v3356, %v3391
        %v3412 = vsub.f32 %v3359, %v3393
        %v3413 = vsub.f32 %v3361, %v3395
        %v3414 = vsub.f32 %v3364, %v3397
        %v3415 = vsub.f32 %v3366, %v3399
        %v3416 = vmul.f32 %v3400, 1.442695
        %v3417 = vpow.pop %v3416
        %v3418 = vmul.f32 %v3401, 1.442695
        %v3419 = vpow.pop %v3418
        %v3420 = vmul.f32 %v3402, 1.442695
        %v3421 = vpow.pop %v3420
        %v3422 = vmul.f32 %v3403, 1.442695
        %v3423 = vpow.pop %v3422
        %v3424 = vmul.f32 %v3404, 1.442695
        %v3425 = vpow.pop %v3424
        %v3426 = vmul.f32 %v3405, 1.442695
        %v3427 = vpow.pop %v3426
        %v3428 = vmul.f32 %v3406, 1.442695
        %v3429 = vpow.pop %v3428
        %v3430 = vmul.f32 %v3407, 1.442695
        %v3431 = vpow.pop %v3430
        %v3432 = vmul.f32 %v3408, 1.442695
        %v3433 = vpow.pop %v3432
        %v3434 = vmul.f32 %v3409, 1.442695
        %v3435 = vpow.pop %v3434
        %v3436 = vmul.f32 %v3410, 1.442695
        %v3437 = vpow.pop %v3436
        %v3438 = vmul.f32 %v3411, 1.442695
        %v3439 = vpow.pop %v3438
        %v3440 = vmul.f32 %v3412, 1.442695
        %v3441 = vpow.pop %v3440
        %v3442 = vmul.f32 %v3413, 1.442695
        %v3443 = vpow.pop %v3442
        %v3444 = vmul.f32 %v3414, 1.442695
        %v3445 = vpow.pop %v3444
        %v3446 = vmul.f32 %v3415, 1.442695
        %v3447 = vpow.pop %v3446
        %3448 = vadd.xlane.f32.xlu0 %v3417
        %v3449 = vpop.xlane.xlu0 %3448
        %3450 = vadd.xlane.f32.xlu0 %v3419
        %v3451 = vpop.xlane.xlu0 %3450
        %3452 = vadd.xlane.f32.xlu0 %v3421
        %v3453 = vpop.xlane.xlu0 %3452
        %3454 = vadd.xlane.f32.xlu0 %v3423
        %v3455 = vpop.xlane.xlu0 %3454
        %3456 = vadd.xlane.f32.xlu0 %v3425
        %v3457 = vpop.xlane.xlu0 %3456
        %3458 = vadd.xlane.f32.xlu0 %v3427
        %v3459 = vpop.xlane.xlu0 %3458
        %3460 = vadd.xlane.f32.xlu0 %v3429
        %v3461 = vpop.xlane.xlu0 %3460
        %3462 = vadd.xlane.f32.xlu0 %v3431
        %v3463 = vpop.xlane.xlu0 %3462
        %3464 = vadd.xlane.f32.xlu0 %v3433
        %v3465 = vpop.xlane.xlu0 %3464
        %3466 = vadd.xlane.f32.xlu0 %v3435
        %v3467 = vpop.xlane.xlu0 %3466
        %3468 = vadd.xlane.f32.xlu0 %v3437
        %v3469 = vpop.xlane.xlu0 %3468
        %3470 = vadd.xlane.f32.xlu0 %v3439
        %v3471 = vpop.xlane.xlu0 %3470
        %3472 = vadd.xlane.f32.xlu0 %v3441
        %v3473 = vpop.xlane.xlu0 %3472
        %3474 = vadd.xlane.f32.xlu0 %v3443
        %v3475 = vpop.xlane.xlu0 %3474
        %3476 = vadd.xlane.f32.xlu0 %v3445
        %v3477 = vpop.xlane.xlu0 %3476
        %3478 = vadd.xlane.f32.xlu0 %v3447
        %v3479 = vpop.xlane.xlu0 %3478
        %v3480 = vrcp.pop %v3449
        %v3481 = vrcp.pop %v3451
        %v3482 = vrcp.pop %v3453
        %v3483 = vrcp.pop %v3455
        %v3484 = vrcp.pop %v3457
        %v3485 = vrcp.pop %v3459
        %v3486 = vrcp.pop %v3461
        %v3487 = vrcp.pop %v3463
        %v3488 = vrcp.pop %v3465
        %v3489 = vrcp.pop %v3467
        %v3490 = vrcp.pop %v3469
        %v3491 = vrcp.pop %v3471
        %v3492 = vrcp.pop %v3473
        %v3493 = vrcp.pop %v3475
        %v3494 = vrcp.pop %v3477
        %v3495 = vrcp.pop %v3479
        %v3496 = vmul.f32 %v3417, %v3480
        %v3497 = vmul.f32 %v3419, %v3481
        %v3498 = vmul.f32 %v3421, %v3482
        %v3499 = vmul.f32 %v3423, %v3483
        %v3500 = vmul.f32 %v3425, %v3484
        %v3501 = vmul.f32 %v3427, %v3485
        %v3502 = vmul.f32 %v3429, %v3486
        %v3503 = vmul.f32 %v3431, %v3487
        %v3504 = vmul.f32 %v3433, %v3488
        %v3505 = vmul.f32 %v3435, %v3489
        %v3506 = vmul.f32 %v3437, %v3490
        %v3507 = vmul.f32 %v3439, %v3491
        %v3508 = vmul.f32 %v3441, %v3492
        %v3509 = vmul.f32 %v3443, %v3493
        %v3510 = vmul.f32 %v3445, %v3494
        %v3511 = vmul.f32 %v3447, %v3495
        %v3512 = vpack.c.bf16 %v1679, %v1679
        %v3513 = vpack.c.bf16 %v3497, %v3496
        %v3514 = vpack.c.bf16 %v3499, %v3498
        %v3515 = vpack.c.bf16 %v3501, %v3500
        %v3516 = vpack.c.bf16 %v3503, %v3502
        %v3517 = vpack.c.bf16 %v3505, %v3504
        %v3518 = vpack.c.bf16 %v3507, %v3506
        %v3519 = vpack.c.bf16 %v3509, %v3508
        %v3520 = vpack.c.bf16 %v3511, %v3510
        %3521 = vmatpush.bf16.xpose.msra.mxu0 %v3520
        %3522 = vmatpush.bf16.xpose.msra.mxu0 %v3519
        %3523 = vmatpush.bf16.xpose.msra.mxu0 %v3518
        %3524 = vmatpush.bf16.xpose.msra.mxu0 %v3517
        %3525 = vmatpush.bf16.xpose.msra.mxu0 %v3516
        %3526 = vmatpush.bf16.xpose.msra.mxu0 %v3515
        %3527 = vmatpush.bf16.xpose.msra.mxu0 %v3514
        %3528 = vmatpush.bf16.xpose.msra.mxu0 %v3513
        %3529 = vmatmul.bf16.gmra.mxu0 %v3512
        %v3530 = vpop.f32.mrf.mxu0
        %v3531 = vadd.f32 0.0, %v3530
        %v3532 = vpop.f32.mrf.mxu0
        %3533 = vdwg.mxu0
        %v3535 = vunpack.c.l.b16 %v1688
        %v3536 = vpack.c.b16 %v3535, %v3535
        %v3537 = vrot.slane %v3536, 2
        %3539 = vxpose.xlu0.c.b16.start [1/8] %v3537, 128
        %3540 = vxpose.xlu0.c.b16.cont [2/8] 0, 128
        %3541 = vxpose.xlu0.c.b16.cont [3/8] 0, 128
        %3542 = vxpose.xlu0.c.b16.cont [4/8] 0, 128
        %3543 = vxpose.xlu0.c.b16.cont [5/8] 0, 128
        %3544 = vxpose.xlu0.c.b16.cont [6/8] 0, 128
        %3545 = vxpose.xlu0.c.b16.cont [7/8] 0, 128
        %3546 = vxpose.xlu0.c.b16.end [8/8] 0, 128
        %v3547 = vpop.trf.xlu0
        %v3548 = vpop.trf.xlu0
        %v3549 = vpop.trf.xlu0
        %v3550 = vpop.trf.xlu0
        %v3551 = vpop.trf.xlu0
        %v3552 = vpop.trf.xlu0
        %v3553 = vpop.trf.xlu0
        %v3554 = vpop.trf.xlu0
        %v3556 = vunpack.c.l.b16 %v1692
        %v3557 = vpack.c.b16 %v3556, %v3556
        %v3558 = vrot.slane %v3557, 2
        %v3560 = vsel %vm1709, %v3547, 0
        %v3563 = vsel %vm1709, %v3548, 0
        %v3566 = vsel %vm1709, %v3549, 0
        %v3569 = vsel %vm1709, %v3550, 0
        %v3572 = vsel %vm1709, %v3551, 0
        %v3575 = vsel %vm1709, %v3552, 0
        %v3578 = vsel %vm1709, %v3553, 0
        %v3581 = vsel %vm1709, %v3554, 0
        %v3584 = vsel %vm1734, %v3558, 0
        %3586 = vmatpush.bf16.msra.mxu0 0
        %3587 = vmatpush.bf16.msra.mxu0 0
        %3588 = vmatpush.bf16.msra.mxu0 0
        %3589 = vmatpush.bf16.msra.mxu0 0
        %3590 = vmatpush.bf16.msra.mxu0 0
        %3591 = vmatpush.bf16.msra.mxu0 0
        %3592 = vmatpush.bf16.msra.mxu0 0
        %3593 = vmatpush.bf16.msra.mxu0 %v3584
        %3594 = vmatmul.bf16.gmra.mxu0 %v3560
        %v3595 = vpop.f32.mrf.mxu0
        %v3596 = vadd.f32 0.0, %v3595
        %v3597 = vpop.f32.mrf.mxu0
        %v3598 = vadd.f32 0.0, %v3597
        %3599 = vmatmul.bf16.gmra.mxu0 %v3563
        %v3600 = vpop.f32.mrf.mxu0
        %v3601 = vadd.f32 0.0, %v3600
        %v3602 = vpop.f32.mrf.mxu0
        %v3603 = vadd.f32 0.0, %v3602
        %3604 = vmatmul.bf16.gmra.mxu0 %v3566
        %v3605 = vpop.f32.mrf.mxu0
        %v3606 = vadd.f32 0.0, %v3605
        %v3607 = vpop.f32.mrf.mxu0
        %v3608 = vadd.f32 0.0, %v3607
        %3609 = vmatmul.bf16.gmra.mxu0 %v3569
        %v3610 = vpop.f32.mrf.mxu0
        %v3611 = vadd.f32 0.0, %v3610
        %v3612 = vpop.f32.mrf.mxu0
        %v3613 = vadd.f32 0.0, %v3612
        %3614 = vmatmul.bf16.gmra.mxu0 %v3572
        %v3615 = vpop.f32.mrf.mxu0
        %v3616 = vadd.f32 0.0, %v3615
        %v3617 = vpop.f32.mrf.mxu0
        %v3618 = vadd.f32 0.0, %v3617
        %3619 = vmatmul.bf16.gmra.mxu0 %v3575
        %v3620 = vpop.f32.mrf.mxu0
        %v3621 = vadd.f32 0.0, %v3620
        %v3622 = vpop.f32.mrf.mxu0
        %v3623 = vadd.f32 0.0, %v3622
        %3624 = vmatmul.bf16.gmra.mxu0 %v3578
        %v3625 = vpop.f32.mrf.mxu0
        %v3626 = vadd.f32 0.0, %v3625
        %v3627 = vpop.f32.mrf.mxu0
        %v3628 = vadd.f32 0.0, %v3627
        %3629 = vmatmul.bf16.gmra.mxu0 %v3581
        %v3630 = vpop.f32.mrf.mxu0
        %v3631 = vadd.f32 0.0, %v3630
        %v3632 = vpop.f32.mrf.mxu0
        %v3633 = vadd.f32 0.0, %v3632
        %3634 = vdwg.mxu0
        %3635 = vmax.xlane.f32.xlu0 %v3596
        %v3636 = vpop.xlane.xlu0 %3635
        %3637 = vmax.xlane.f32.xlu0 %v3598
        %v3638 = vpop.xlane.xlu0 %3637
        %3639 = vmax.xlane.f32.xlu0 %v3601
        %v3640 = vpop.xlane.xlu0 %3639
        %3641 = vmax.xlane.f32.xlu0 %v3603
        %v3642 = vpop.xlane.xlu0 %3641
        %3643 = vmax.xlane.f32.xlu0 %v3606
        %v3644 = vpop.xlane.xlu0 %3643
        %3645 = vmax.xlane.f32.xlu0 %v3608
        %v3646 = vpop.xlane.xlu0 %3645
        %3647 = vmax.xlane.f32.xlu0 %v3611
        %v3648 = vpop.xlane.xlu0 %3647
        %3649 = vmax.xlane.f32.xlu0 %v3613
        %v3650 = vpop.xlane.xlu0 %3649
        %3651 = vmax.xlane.f32.xlu0 %v3616
        %v3652 = vpop.xlane.xlu0 %3651
        %3653 = vmax.xlane.f32.xlu0 %v3618
        %v3654 = vpop.xlane.xlu0 %3653
        %3655 = vmax.xlane.f32.xlu0 %v3621
        %v3656 = vpop.xlane.xlu0 %3655
        %3657 = vmax.xlane.f32.xlu0 %v3623
        %v3658 = vpop.xlane.xlu0 %3657
        %3659 = vmax.xlane.f32.xlu0 %v3626
        %v3660 = vpop.xlane.xlu0 %3659
        %3661 = vmax.xlane.f32.xlu0 %v3628
        %v3662 = vpop.xlane.xlu0 %3661
        %3663 = vmax.xlane.f32.xlu0 %v3631
        %v3664 = vpop.xlane.xlu0 %3663
        %3665 = vmax.xlane.f32.xlu0 %v3633
        %v3666 = vpop.xlane.xlu0 %3665
        %v3667 = vsub.f32 %v3596, %v3636
        %v3668 = vsub.f32 %v3598, %v3638
        %v3669 = vsub.f32 %v3601, %v3640
        %v3670 = vsub.f32 %v3603, %v3642
        %v3671 = vsub.f32 %v3606, %v3644
        %v3672 = vsub.f32 %v3608, %v3646
        %v3673 = vsub.f32 %v3611, %v3648
        %v3674 = vsub.f32 %v3613, %v3650
        %v3675 = vsub.f32 %v3616, %v3652
        %v3676 = vsub.f32 %v3618, %v3654
        %v3677 = vsub.f32 %v3621, %v3656
        %v3678 = vsub.f32 %v3623, %v3658
        %v3679 = vsub.f32 %v3626, %v3660
        %v3680 = vsub.f32 %v3628, %v3662
        %v3681 = vsub.f32 %v3631, %v3664
        %v3682 = vsub.f32 %v3633, %v3666
        %v3683 = vmul.f32 %v3667, 1.442695
        %v3684 = vpow.pop %v3683
        %v3685 = vmul.f32 %v3668, 1.442695
        %v3686 = vpow.pop %v3685
        %v3687 = vmul.f32 %v3669, 1.442695
        %v3688 = vpow.pop %v3687
        %v3689 = vmul.f32 %v3670, 1.442695
        %v3690 = vpow.pop %v3689
        %v3691 = vmul.f32 %v3671, 1.442695
        %v3692 = vpow.pop %v3691
        %v3693 = vmul.f32 %v3672, 1.442695
        %v3694 = vpow.pop %v3693
        %v3695 = vmul.f32 %v3673, 1.442695
        %v3696 = vpow.pop %v3695
        %v3697 = vmul.f32 %v3674, 1.442695
        %v3698 = vpow.pop %v3697
        %v3699 = vmul.f32 %v3675, 1.442695
        %v3700 = vpow.pop %v3699
        %v3701 = vmul.f32 %v3676, 1.442695
        %v3702 = vpow.pop %v3701
        %v3703 = vmul.f32 %v3677, 1.442695
        %v3704 = vpow.pop %v3703
        %v3705 = vmul.f32 %v3678, 1.442695
        %v3706 = vpow.pop %v3705
        %v3707 = vmul.f32 %v3679, 1.442695
        %v3708 = vpow.pop %v3707
        %v3709 = vmul.f32 %v3680, 1.442695
        %v3710 = vpow.pop %v3709
        %v3711 = vmul.f32 %v3681, 1.442695
        %v3712 = vpow.pop %v3711
        %v3713 = vmul.f32 %v3682, 1.442695
        %v3714 = vpow.pop %v3713
        %3715 = vadd.xlane.f32.xlu0 %v3684
        %v3716 = vpop.xlane.xlu0 %3715
        %3717 = vadd.xlane.f32.xlu0 %v3686
        %v3718 = vpop.xlane.xlu0 %3717
        %3719 = vadd.xlane.f32.xlu0 %v3688
        %v3720 = vpop.xlane.xlu0 %3719
        %3721 = vadd.xlane.f32.xlu0 %v3690
        %v3722 = vpop.xlane.xlu0 %3721
        %3723 = vadd.xlane.f32.xlu0 %v3692
        %v3724 = vpop.xlane.xlu0 %3723
        %3725 = vadd.xlane.f32.xlu0 %v3694
        %v3726 = vpop.xlane.xlu0 %3725
        %3727 = vadd.xlane.f32.xlu0 %v3696
        %v3728 = vpop.xlane.xlu0 %3727
        %3729 = vadd.xlane.f32.xlu0 %v3698
        %v3730 = vpop.xlane.xlu0 %3729
        %3731 = vadd.xlane.f32.xlu0 %v3700
        %v3732 = vpop.xlane.xlu0 %3731
        %3733 = vadd.xlane.f32.xlu0 %v3702
        %v3734 = vpop.xlane.xlu0 %3733
        %3735 = vadd.xlane.f32.xlu0 %v3704
        %v3736 = vpop.xlane.xlu0 %3735
        %3737 = vadd.xlane.f32.xlu0 %v3706
        %v3738 = vpop.xlane.xlu0 %3737
        %3739 = vadd.xlane.f32.xlu0 %v3708
        %v3740 = vpop.xlane.xlu0 %3739
        %3741 = vadd.xlane.f32.xlu0 %v3710
        %v3742 = vpop.xlane.xlu0 %3741
        %3743 = vadd.xlane.f32.xlu0 %v3712
        %v3744 = vpop.xlane.xlu0 %3743
        %3745 = vadd.xlane.f32.xlu0 %v3714
        %v3746 = vpop.xlane.xlu0 %3745
        %v3747 = vrcp.pop %v3716
        %v3748 = vrcp.pop %v3718
        %v3749 = vrcp.pop %v3720
        %v3750 = vrcp.pop %v3722
        %v3751 = vrcp.pop %v3724
        %v3752 = vrcp.pop %v3726
        %v3753 = vrcp.pop %v3728
        %v3754 = vrcp.pop %v3730
        %v3755 = vrcp.pop %v3732
        %v3756 = vrcp.pop %v3734
        %v3757 = vrcp.pop %v3736
        %v3758 = vrcp.pop %v3738
        %v3759 = vrcp.pop %v3740
        %v3760 = vrcp.pop %v3742
        %v3761 = vrcp.pop %v3744
        %v3762 = vrcp.pop %v3746
        %v3763 = vmul.f32 %v3684, %v3747
        %v3764 = vmul.f32 %v3686, %v3748
        %v3765 = vmul.f32 %v3688, %v3749
        %v3766 = vmul.f32 %v3690, %v3750
        %v3767 = vmul.f32 %v3692, %v3751
        %v3768 = vmul.f32 %v3694, %v3752
        %v3769 = vmul.f32 %v3696, %v3753
        %v3770 = vmul.f32 %v3698, %v3754
        %v3771 = vmul.f32 %v3700, %v3755
        %v3772 = vmul.f32 %v3702, %v3756
        %v3773 = vmul.f32 %v3704, %v3757
        %v3774 = vmul.f32 %v3706, %v3758
        %v3775 = vmul.f32 %v3708, %v3759
        %v3776 = vmul.f32 %v3710, %v3760
        %v3777 = vmul.f32 %v3712, %v3761
        %v3778 = vmul.f32 %v3714, %v3762
        %v3779 = vpack.c.bf16 %v3764, %v3763
        %v3780 = vpack.c.bf16 %v3766, %v3765
        %v3781 = vpack.c.bf16 %v3768, %v3767
        %v3782 = vpack.c.bf16 %v3770, %v3769
        %v3783 = vpack.c.bf16 %v3772, %v3771
        %v3784 = vpack.c.bf16 %v3774, %v3773
        %v3785 = vpack.c.bf16 %v3776, %v3775
        %v3786 = vpack.c.bf16 %v3778, %v3777
        %v3788 = vrot.slane %v3512, 2
        %3790 = vmatpush.bf16.xpose.msra.mxu0 %v3786
        %3791 = vmatpush.bf16.xpose.msra.mxu0 %v3785
        %3792 = vmatpush.bf16.xpose.msra.mxu0 %v3784
        %3793 = vmatpush.bf16.xpose.msra.mxu0 %v3783
        %3794 = vmatpush.bf16.xpose.msra.mxu0 %v3782
        %3795 = vmatpush.bf16.xpose.msra.mxu0 %v3781
        %3796 = vmatpush.bf16.xpose.msra.mxu0 %v3780
        %3797 = vmatpush.bf16.xpose.msra.mxu0 %v3779
        %3798 = vmatmul.bf16.gmra.mxu0 %v3788
        %v3799 = vpop.f32.mrf.mxu0
        %v3800 = vadd.f32 0.0, %v3799
        %v3801 = vpop.f32.mrf.mxu0
        %3802 = vdwg.mxu0
        %v3804 = vrot.slane %v2219, 4
        %v3807 = vrot.slane %v2746, 4
        %v3810 = vrot.slane %v3273, 4
        %v3813 = vrot.slane %v3800, 4
        %vm3815 = vcmask 1043456
        %v3816 = vsel %vm3815, %v1950, %v3804
        %v3817 = vsel %vm3815, %v2477, %v3807
        %v3818 = vsel %vm3815, %v3004, %v3810
        %v3819 = vsel %vm3815, %v3531, %v3813
        %3820 = vrot.lane.b32.xlu0 %v1672, 17
        %v3821 = vpop.permute.xlu0 %3820
        %3822 = vrot.lane.b32.xlu0 %v1674, 17
        %v3823 = vpop.permute.xlu0 %3822
        %3824 = vrot.lane.b32.xlu0 %v1677, 17
        %v3825 = vpop.permute.xlu0 %3824
        %3826 = vrot.lane.b32.xlu0 %v1679, 17
        %v3827 = vpop.permute.xlu0 %3826
        %v3828 = vld [vmem:[#allocation4] sm:$0xff]
        %v3829 = vld [vmem:[#allocation4 + $0x8] sm:$0xff]
        %v3830 = vld [vmem:[#allocation4 + $0x10] sm:$0xff]
        %v3831 = vld [vmem:[#allocation4 + $0x18] sm:$0xff]
        %3833 = vset.pattern.permute.xlu0 0
        %3834 = vperm.xlu0 %3833, %v3828
        %v3835 = vpop.permute.xlu0 %3834
        %3838 = vset.pattern.permute.xlu0 0
        %3839 = vperm.xlu0 %3838, %v3829
        %v3840 = vpop.permute.xlu0 %3839
        %3843 = vset.pattern.permute.xlu0 0
        %3844 = vperm.xlu0 %3843, %v3830
        %v3845 = vpop.permute.xlu0 %3844
        %3848 = vset.pattern.permute.xlu0 0
        %3849 = vperm.xlu0 %3848, %v3831
        %v3850 = vpop.permute.xlu0 %3849
        %v3852 = vmul.f32 %v3821, %v3835
        %v3853 = vmul.f32 %v3823, %v3840
        %v3854 = vmul.f32 %v3825, %v3845
        %v3855 = vmul.f32 %v3827, %v3850
        %v3856 = vmul.f32 %v3852, %v509
        %v3857 = vmul.f32 %v3853, %v509
        %v3858 = vmul.f32 %v3854, %v509
        %v3859 = vmul.f32 %v3855, %v509
        %3860 = vrot.lane.b32.xlu0 %v1672, 16
        %v3861 = vpop.permute.xlu0 %3860
        %3862 = vrot.lane.b32.xlu0 %v1674, 16
        %v3863 = vpop.permute.xlu0 %3862
        %3864 = vrot.lane.b32.xlu0 %v1677, 16
        %v3865 = vpop.permute.xlu0 %3864
        %3866 = vrot.lane.b32.xlu0 %v1679, 16
        %v3867 = vpop.permute.xlu0 %3866
        %s3868 = scalar_lea.vmem [#allocation4], 32
        %v3869 = vld [vmem:[%s3868] sm:$0xff]
        %v3870 = vld [vmem:[%s3868 + $0x8] sm:$0xff]
        %v3871 = vld [vmem:[%s3868 + $0x10] sm:$0xff]
        %v3872 = vld [vmem:[%s3868 + $0x18] sm:$0xff]
        %3874 = vset.pattern.permute.xlu0 0
        %3875 = vperm.xlu0 %3874, %v3869
        %v3876 = vpop.permute.xlu0 %3875
        %3879 = vset.pattern.permute.xlu0 0
        %3880 = vperm.xlu0 %3879, %v3870
        %v3881 = vpop.permute.xlu0 %3880
        %3884 = vset.pattern.permute.xlu0 0
        %3885 = vperm.xlu0 %3884, %v3871
        %v3886 = vpop.permute.xlu0 %3885
        %3889 = vset.pattern.permute.xlu0 0
        %3890 = vperm.xlu0 %3889, %v3872
        %v3891 = vpop.permute.xlu0 %3890
        %v3893 = vmul.f32 %v3861, %v3876
        %v3894 = vmul.f32 %v3863, %v3881
        %v3895 = vmul.f32 %v3865, %v3886
        %v3896 = vmul.f32 %v3867, %v3891
        %v3897 = vmul.f32 %v3893, %v555
        %v3898 = vmul.f32 %v3894, %v555
        %v3899 = vmul.f32 %v3895, %v555
        %v3900 = vmul.f32 %v3896, %v555
        %v3901 = vadd.f32 %v3856, %v3897
        %v3902 = vadd.f32 %v3857, %v3898
        %v3903 = vadd.f32 %v3858, %v3899
        %v3904 = vadd.f32 %v3859, %v3900
        %3905 = vrot.lane.b32.xlu0 %v1672, 15
        %v3906 = vpop.permute.xlu0 %3905
        %3907 = vrot.lane.b32.xlu0 %v1674, 15
        %v3908 = vpop.permute.xlu0 %3907
        %3909 = vrot.lane.b32.xlu0 %v1677, 15
        %v3910 = vpop.permute.xlu0 %3909
        %3911 = vrot.lane.b32.xlu0 %v1679, 15
        %v3912 = vpop.permute.xlu0 %3911
        %s3913 = scalar_lea.vmem [#allocation4], 64
        %v3914 = vld [vmem:[%s3913] sm:$0xff]
        %v3915 = vld [vmem:[%s3913 + $0x8] sm:$0xff]
        %v3916 = vld [vmem:[%s3913 + $0x10] sm:$0xff]
        %v3917 = vld [vmem:[%s3913 + $0x18] sm:$0xff]
        %3919 = vset.pattern.permute.xlu0 0
        %3920 = vperm.xlu0 %3919, %v3914
        %v3921 = vpop.permute.xlu0 %3920
        %3924 = vset.pattern.permute.xlu0 0
        %3925 = vperm.xlu0 %3924, %v3915
        %v3926 = vpop.permute.xlu0 %3925
        %3929 = vset.pattern.permute.xlu0 0
        %3930 = vperm.xlu0 %3929, %v3916
        %v3931 = vpop.permute.xlu0 %3930
        %3934 = vset.pattern.permute.xlu0 0
        %3935 = vperm.xlu0 %3934, %v3917
        %v3936 = vpop.permute.xlu0 %3935
        %v3938 = vmul.f32 %v3906, %v3921
        %v3939 = vmul.f32 %v3908, %v3926
        %v3940 = vmul.f32 %v3910, %v3931
        %v3941 = vmul.f32 %v3912, %v3936
        %v3942 = vmul.f32 %v3938, %v605
        %v3943 = vmul.f32 %v3939, %v605
        %v3944 = vmul.f32 %v3940, %v605
        %v3945 = vmul.f32 %v3941, %v605
        %v3946 = vadd.f32 %v3901, %v3942
        %v3947 = vadd.f32 %v3902, %v3943
        %v3948 = vadd.f32 %v3903, %v3944
        %v3949 = vadd.f32 %v3904, %v3945
        %3950 = vrot.lane.b32.xlu0 %v1672, 1
        %v3951 = vpop.permute.xlu0 %3950
        %3952 = vrot.lane.b32.xlu0 %v1674, 1
        %v3953 = vpop.permute.xlu0 %3952
        %3954 = vrot.lane.b32.xlu0 %v1677, 1
        %v3955 = vpop.permute.xlu0 %3954
        %3956 = vrot.lane.b32.xlu0 %v1679, 1
        %v3957 = vpop.permute.xlu0 %3956
        %s3958 = scalar_lea.vmem [#allocation4], 96
        %v3959 = vld [vmem:[%s3958] sm:$0xff]
        %v3960 = vld [vmem:[%s3958 + $0x8] sm:$0xff]
        %v3961 = vld [vmem:[%s3958 + $0x10] sm:$0xff]
        %v3962 = vld [vmem:[%s3958 + $0x18] sm:$0xff]
        %3964 = vset.pattern.permute.xlu0 0
        %3965 = vperm.xlu0 %3964, %v3959
        %v3966 = vpop.permute.xlu0 %3965
        %3969 = vset.pattern.permute.xlu0 0
        %3970 = vperm.xlu0 %3969, %v3960
        %v3971 = vpop.permute.xlu0 %3970
        %3974 = vset.pattern.permute.xlu0 0
        %3975 = vperm.xlu0 %3974, %v3961
        %v3976 = vpop.permute.xlu0 %3975
        %3979 = vset.pattern.permute.xlu0 0
        %3980 = vperm.xlu0 %3979, %v3962
        %v3981 = vpop.permute.xlu0 %3980
        %v3983 = vmul.f32 %v3951, %v3966
        %v3984 = vmul.f32 %v3953, %v3971
        %v3985 = vmul.f32 %v3955, %v3976
        %v3986 = vmul.f32 %v3957, %v3981
        %v3987 = vmul.f32 %v3983, %v655
        %v3988 = vmul.f32 %v3984, %v655
        %v3989 = vmul.f32 %v3985, %v655
        %v3990 = vmul.f32 %v3986, %v655
        %v3991 = vadd.f32 %v3946, %v3987
        %v3992 = vadd.f32 %v3947, %v3988
        %v3993 = vadd.f32 %v3948, %v3989
        %v3994 = vadd.f32 %v3949, %v3990
        %s3995 = scalar_lea.vmem [#allocation4], 128
        %v3996 = vld [vmem:[%s3995] sm:$0xff]
        %v3997 = vld [vmem:[%s3995 + $0x8] sm:$0xff]
        %v3998 = vld [vmem:[%s3995 + $0x10] sm:$0xff]
        %v3999 = vld [vmem:[%s3995 + $0x18] sm:$0xff]
        %4001 = vset.pattern.permute.xlu0 0
        %4002 = vperm.xlu0 %4001, %v3996
        %v4003 = vpop.permute.xlu0 %4002
        %4006 = vset.pattern.permute.xlu0 0
        %4007 = vperm.xlu0 %4006, %v3997
        %v4008 = vpop.permute.xlu0 %4007
        %4011 = vset.pattern.permute.xlu0 0
        %4012 = vperm.xlu0 %4011, %v3998
        %v4013 = vpop.permute.xlu0 %4012
        %4016 = vset.pattern.permute.xlu0 0
        %4017 = vperm.xlu0 %4016, %v3999
        %v4018 = vpop.permute.xlu0 %4017
        %v4020 = vmul.f32 %v1672, %v4003
        %v4021 = vmul.f32 %v1674, %v4008
        %v4022 = vmul.f32 %v1677, %v4013
        %v4023 = vmul.f32 %v1679, %v4018
        %v4024 = vmul.f32 %v4020, %v697
        %v4025 = vmul.f32 %v4021, %v697
        %v4026 = vmul.f32 %v4022, %v697
        %v4027 = vmul.f32 %v4023, %v697
        %v4028 = vadd.f32 %v3991, %v4024
        %v4029 = vadd.f32 %v3992, %v4025
        %v4030 = vadd.f32 %v3993, %v4026
        %v4031 = vadd.f32 %v3994, %v4027
        %4032 = vrot.lane.b32.xlu0 %v1672, 127
        %v4033 = vpop.permute.xlu0 %4032
        %4034 = vrot.lane.b32.xlu0 %v1674, 127
        %v4035 = vpop.permute.xlu0 %4034
        %4036 = vrot.lane.b32.xlu0 %v1677, 127
        %v4037 = vpop.permute.xlu0 %4036
        %4038 = vrot.lane.b32.xlu0 %v1679, 127
        %v4039 = vpop.permute.xlu0 %4038
        %s4040 = scalar_lea.vmem [#allocation4], 160
        %v4041 = vld [vmem:[%s4040] sm:$0xff]
        %v4042 = vld [vmem:[%s4040 + $0x8] sm:$0xff]
        %v4043 = vld [vmem:[%s4040 + $0x10] sm:$0xff]
        %v4044 = vld [vmem:[%s4040 + $0x18] sm:$0xff]
        %4046 = vset.pattern.permute.xlu0 0
        %4047 = vperm.xlu0 %4046, %v4041
        %v4048 = vpop.permute.xlu0 %4047
        %4051 = vset.pattern.permute.xlu0 0
        %4052 = vperm.xlu0 %4051, %v4042
        %v4053 = vpop.permute.xlu0 %4052
        %4056 = vset.pattern.permute.xlu0 0
        %4057 = vperm.xlu0 %4056, %v4043
        %v4058 = vpop.permute.xlu0 %4057
        %4061 = vset.pattern.permute.xlu0 0
        %4062 = vperm.xlu0 %4061, %v4044
        %v4063 = vpop.permute.xlu0 %4062
        %v4065 = vmul.f32 %v4033, %v4048
        %v4066 = vmul.f32 %v4035, %v4053
        %v4067 = vmul.f32 %v4037, %v4058
        %v4068 = vmul.f32 %v4039, %v4063
        %v4069 = vmul.f32 %v4065, %v747
        %v4070 = vmul.f32 %v4066, %v747
        %v4071 = vmul.f32 %v4067, %v747
        %v4072 = vmul.f32 %v4068, %v747
        %v4073 = vadd.f32 %v4028, %v4069
        %v4074 = vadd.f32 %v4029, %v4070
        %v4075 = vadd.f32 %v4030, %v4071
        %v4076 = vadd.f32 %v4031, %v4072
        %4077 = vrot.lane.b32.xlu0 %v1672, 113
        %v4078 = vpop.permute.xlu0 %4077
        %4079 = vrot.lane.b32.xlu0 %v1674, 113
        %v4080 = vpop.permute.xlu0 %4079
        %4081 = vrot.lane.b32.xlu0 %v1677, 113
        %v4082 = vpop.permute.xlu0 %4081
        %4083 = vrot.lane.b32.xlu0 %v1679, 113
        %v4084 = vpop.permute.xlu0 %4083
        %s4085 = scalar_lea.vmem [#allocation4], 192
        %v4086 = vld [vmem:[%s4085] sm:$0xff]
        %v4087 = vld [vmem:[%s4085 + $0x8] sm:$0xff]
        %v4088 = vld [vmem:[%s4085 + $0x10] sm:$0xff]
        %v4089 = vld [vmem:[%s4085 + $0x18] sm:$0xff]
        %4091 = vset.pattern.permute.xlu0 0
        %4092 = vperm.xlu0 %4091, %v4086
        %v4093 = vpop.permute.xlu0 %4092
        %4096 = vset.pattern.permute.xlu0 0
        %4097 = vperm.xlu0 %4096, %v4087
        %v4098 = vpop.permute.xlu0 %4097
        %4101 = vset.pattern.permute.xlu0 0
        %4102 = vperm.xlu0 %4101, %v4088
        %v4103 = vpop.permute.xlu0 %4102
        %4106 = vset.pattern.permute.xlu0 0
        %4107 = vperm.xlu0 %4106, %v4089
        %v4108 = vpop.permute.xlu0 %4107
        %v4110 = vmul.f32 %v4078, %v4093
        %v4111 = vmul.f32 %v4080, %v4098
        %v4112 = vmul.f32 %v4082, %v4103
        %v4113 = vmul.f32 %v4084, %v4108
        %v4114 = vmul.f32 %v4110, %v797
        %v4115 = vmul.f32 %v4111, %v797
        %v4116 = vmul.f32 %v4112, %v797
        %v4117 = vmul.f32 %v4113, %v797
        %v4118 = vadd.f32 %v4073, %v4114
        %v4119 = vadd.f32 %v4074, %v4115
        %v4120 = vadd.f32 %v4075, %v4116
        %v4121 = vadd.f32 %v4076, %v4117
        %4122 = vrot.lane.b32.xlu0 %v1672, 112
        %v4123 = vpop.permute.xlu0 %4122
        %4124 = vrot.lane.b32.xlu0 %v1674, 112
        %v4125 = vpop.permute.xlu0 %4124
        %4126 = vrot.lane.b32.xlu0 %v1677, 112
        %v4127 = vpop.permute.xlu0 %4126
        %4128 = vrot.lane.b32.xlu0 %v1679, 112
        %v4129 = vpop.permute.xlu0 %4128
        %s4130 = scalar_lea.vmem [#allocation4], 224
        %v4131 = vld [vmem:[%s4130] sm:$0xff]
        %v4132 = vld [vmem:[%s4130 + $0x8] sm:$0xff]
        %v4133 = vld [vmem:[%s4130 + $0x10] sm:$0xff]
        %v4134 = vld [vmem:[%s4130 + $0x18] sm:$0xff]
        %4136 = vset.pattern.permute.xlu0 0
        %4137 = vperm.xlu0 %4136, %v4131
        %v4138 = vpop.permute.xlu0 %4137
        %4141 = vset.pattern.permute.xlu0 0
        %4142 = vperm.xlu0 %4141, %v4132
        %v4143 = vpop.permute.xlu0 %4142
        %4146 = vset.pattern.permute.xlu0 0
        %4147 = vperm.xlu0 %4146, %v4133
        %v4148 = vpop.permute.xlu0 %4147
        %4151 = vset.pattern.permute.xlu0 0
        %4152 = vperm.xlu0 %4151, %v4134
        %v4153 = vpop.permute.xlu0 %4152
        %v4155 = vmul.f32 %v4123, %v4138
        %v4156 = vmul.f32 %v4125, %v4143
        %v4157 = vmul.f32 %v4127, %v4148
        %v4158 = vmul.f32 %v4129, %v4153
        %v4159 = vmul.f32 %v4155, %v847
        %v4160 = vmul.f32 %v4156, %v847
        %v4161 = vmul.f32 %v4157, %v847
        %v4162 = vmul.f32 %v4158, %v847
        %v4163 = vadd.f32 %v4118, %v4159
        %v4164 = vadd.f32 %v4119, %v4160
        %v4165 = vadd.f32 %v4120, %v4161
        %v4166 = vadd.f32 %v4121, %v4162
        %4167 = vrot.lane.b32.xlu0 %v1672, 111
        %v4168 = vpop.permute.xlu0 %4167
        %4169 = vrot.lane.b32.xlu0 %v1674, 111
        %v4170 = vpop.permute.xlu0 %4169
        %4171 = vrot.lane.b32.xlu0 %v1677, 111
        %v4172 = vpop.permute.xlu0 %4171
        %4173 = vrot.lane.b32.xlu0 %v1679, 111
        %v4174 = vpop.permute.xlu0 %4173
        %s4175 = scalar_lea.vmem [#allocation4], 256
        %v4176 = vld [vmem:[%s4175] sm:$0xff]
        %v4177 = vld [vmem:[%s4175 + $0x8] sm:$0xff]
        %v4178 = vld [vmem:[%s4175 + $0x10] sm:$0xff]
        %v4179 = vld [vmem:[%s4175 + $0x18] sm:$0xff]
        %4181 = vset.pattern.permute.xlu0 0
        %4182 = vperm.xlu0 %4181, %v4176
        %v4183 = vpop.permute.xlu0 %4182
        %4186 = vset.pattern.permute.xlu0 0
        %4187 = vperm.xlu0 %4186, %v4177
        %v4188 = vpop.permute.xlu0 %4187
        %4191 = vset.pattern.permute.xlu0 0
        %4192 = vperm.xlu0 %4191, %v4178
        %v4193 = vpop.permute.xlu0 %4192
        %4196 = vset.pattern.permute.xlu0 0
        %4197 = vperm.xlu0 %4196, %v4179
        %v4198 = vpop.permute.xlu0 %4197
        %v4200 = vmul.f32 %v4168, %v4183
        %v4201 = vmul.f32 %v4170, %v4188
        %v4202 = vmul.f32 %v4172, %v4193
        %v4203 = vmul.f32 %v4174, %v4198
        %v4204 = vmul.f32 %v4200, %v897
        %v4205 = vmul.f32 %v4201, %v897
        %v4206 = vmul.f32 %v4202, %v897
        %v4207 = vmul.f32 %v4203, %v897
        %v4208 = vadd.f32 %v4163, %v4204
        %v4209 = vadd.f32 %v4164, %v4205
        %v4210 = vadd.f32 %v4165, %v4206
        %v4211 = vadd.f32 %v4166, %v4207
        %4213 = vset.pattern.permute.xlu0 0
        %4214 = vperm.xlu0 %4213, %v463
        %v4215 = vpop.permute.xlu0 %4214
        %4218 = vset.pattern.permute.xlu0 0
        %4219 = vperm.xlu0 %4218, %v464
        %v4220 = vpop.permute.xlu0 %4219
        %4223 = vset.pattern.permute.xlu0 0
        %4224 = vperm.xlu0 %4223, %v465
        %v4225 = vpop.permute.xlu0 %4224
        %4228 = vset.pattern.permute.xlu0 0
        %4229 = vperm.xlu0 %4228, %v466
        %v4230 = vpop.permute.xlu0 %4229
        %v4232 = vadd.f32 %v4208, %v4215
        %v4233 = vadd.f32 %v4209, %v4220
        %v4234 = vadd.f32 %v4210, %v4225
        %v4235 = vadd.f32 %v4211, %v4230
        %v4236 = vadd.f32 %v3816, %v4232
        %v4237 = vadd.f32 %v3817, %v4233
        %v4238 = vadd.f32 %v3818, %v4234
        %v4239 = vadd.f32 %v3819, %v4235
        %v4240 = vpack.c.bf16 %v4237, %v4236
        %v4241 = vpack.c.bf16 %v4239, %v4238
        %v4242 = vld [vmem:[%s8] sm:$0xf]
        %v4243 = vld [vmem:[%s8 + $0x4] sm:$0xf]
        %v4244 = vld [vmem:[%s8 + $0x8] sm:$0xf]
        %v4245 = vld [vmem:[%s8 + $0xc] sm:$0xf]
        %4247 = vset.pattern.permute.xlu0 0
        %4248 = vperm.xlu0 %4247, %v467
        %v4249 = vpop.permute.xlu0 %4248
        %4252 = vset.pattern.permute.xlu0 0
        %4253 = vperm.xlu0 %4252, %v468
        %v4254 = vpop.permute.xlu0 %4253
        %4257 = vset.pattern.permute.xlu0 0
        %4258 = vperm.xlu0 %4257, %v469
        %v4259 = vpop.permute.xlu0 %4258
        %4262 = vset.pattern.permute.xlu0 0
        %4263 = vperm.xlu0 %4262, %v470
        %v4264 = vpop.permute.xlu0 %4263
        %v4270 = vunpack.c.l.b16 %v4242
        %v4271 = vunpack.c.l.b16 %v4243
        %v4272 = vunpack.c.l.b16 %v4244
        %v4273 = vunpack.c.l.b16 %v4245
        %v4274 = vpack.c.b16 %v4271, %v4270
        %v4275 = vpack.c.b16 %v4273, %v4272
        %v4277 = vsel %vm1623, %v4274, 0
        %v4280 = vsel %vm1623, %v4275, 0
        %4282 = vmatpush.bf16.msra.mxu0 0
        %4283 = vmatpush.bf16.msra.mxu0 0
        %4284 = vmatpush.bf16.msra.mxu0 0
        %4285 = vmatpush.bf16.msra.mxu0 0
        %4286 = vmatpush.bf16.msra.mxu0 0
        %4287 = vmatpush.bf16.msra.mxu0 0
        %4288 = vmatpush.bf16.msra.mxu0 %v4241
        %4289 = vmatpush.bf16.msra.mxu0 %v4240
        %4290 = vmatmul.bf16.gmra.mxu0 %v4277
        %v4291 = vpop.f32.mrf.mxu0
        %v4292 = vadd.f32 %v4249, %v4291
        %v4293 = vpop.f32.mrf.mxu0
        %v4294 = vadd.f32 %v4254, %v4293
        %4295 = vmatmul.bf16.gmra.mxu0 %v4280
        %v4296 = vpop.f32.mrf.mxu0
        %v4297 = vadd.f32 %v4259, %v4296
        %v4298 = vpop.f32.mrf.mxu0
        %v4299 = vadd.f32 %v4264, %v4298
        %4300 = vdwg.mxu0
        %v4301 = vadd.f32 %v4292, %v431
        %v4302 = vadd.f32 %v4294, %v432
        %v4303 = vadd.f32 %v4297, %v433
        %v4304 = vadd.f32 %v4299, %v434
        %v4305 = vmul.f32 %v4301, 0.5
        %v4306 = vmul.f32 %v4302, 0.5
        %v4307 = vmul.f32 %v4303, 0.5
        %v4308 = vmul.f32 %v4304, 0.5
        %v4309 = vmul.f32 %v4301, 0.044715
        %v4310 = vmul.f32 %v4302, 0.044715
        %v4311 = vmul.f32 %v4303, 0.044715
        %v4312 = vmul.f32 %v4304, 0.044715
        %v4313 = vmul.f32 %v4309, %v4301
        %v4314 = vmul.f32 %v4310, %v4302
        %v4315 = vmul.f32 %v4311, %v4303
        %v4316 = vmul.f32 %v4312, %v4304
        %v4317 = vmul.f32 %v4313, %v4301
        %v4318 = vmul.f32 %v4314, %v4302
        %v4319 = vmul.f32 %v4315, %v4303
        %v4320 = vmul.f32 %v4316, %v4304
        %v4321 = vadd.f32 %v4301, %v4317
        %v4322 = vadd.f32 %v4302, %v4318
        %v4323 = vadd.f32 %v4303, %v4319
        %v4324 = vadd.f32 %v4304, %v4320
        %v4325 = vmul.f32 %v4321, 0.7978846
        %v4326 = vmul.f32 %v4322, 0.7978846
        %v4327 = vmul.f32 %v4323, 0.7978846
        %v4328 = vmul.f32 %v4324, 0.7978846
        %v4329 = vtanh.pop %v4325
        %v4330 = vtanh.pop %v4326
        %v4331 = vtanh.pop %v4327
        %v4332 = vtanh.pop %v4328
        %v4333 = vadd.f32 %v4329, 1.0
        %v4334 = vadd.f32 %v4330, 1.0
        %v4335 = vadd.f32 %v4331, 1.0
        %v4336 = vadd.f32 %v4332, 1.0
        %v4337 = vmul.f32 %v4305, %v4333
        %v4338 = vmul.f32 %v4306, %v4334
        %v4339 = vmul.f32 %v4307, %v4335
        %v4340 = vmul.f32 %v4308, %v4336
        %4341 = vst [vmem:[%s429] sm:$0xff] %v4337
        %4342 = vst [vmem:[%s429 + $0x8] sm:$0xff] %v4338
        %4343 = vst [vmem:[%s429 + $0x10] sm:$0xff] %v4339
        %4344 = vst [vmem:[%s429 + $0x18] sm:$0xff] %v4340
        %p4345 = scmp.lt.s32.totalorder %s23, 1
        %s4346 = scalar_select %p4345, %s23, 1
        %s4347 = smul.addr %s4346, 4
        %s4348 = smul.addr %s4347, 8
        %s4349 = scalar_lea.vmem %s10, %s4348
        // Predicated region
        $region73: #{_lambda_.1} parent=59 // pred_check
          %p4350 = pneg %p261
        $region74: #{_lambda_.1} parent=59 // pred_check_branch
          %4352 = sbr.rel (%p4350) target = $region76
        $region75: #{_lambda_.1} parent=59 // pred_region
          _
        $region76: #{_lambda_.1} parent=59 // pred_fallthru
          _
      $region60: #{_lambda_.1} parent=5 // pred_fallthru
        _
      %p4353 = scmp.le.s32.totalorder 2, %s18
      // Predicated region
      $region77: #{_lambda_.1} parent=5 // pred_check
        %p4354 = pneg %p4353
      $region78: #{_lambda_.1} parent=5 // pred_check_branch
        %4356 = sbr.rel (%p4354) target = $region80
      $region79: #{_lambda_.1} parent=5 // pred_region
        %s4357 = ssub.s32 %s18, 2
        // Predicated region
        $region81: #{_lambda_.1} parent=79 // pred_check
          %p4358 = pneg %p267
        $region82: #{_lambda_.1} parent=79 // pred_check_branch
          %4360 = sbr.rel (%p4358) target = $region84
        $region83: #{_lambda_.1} parent=79 // pred_region
          %p4361 = scmp.lt.s32.totalorder %s24, 1
          %s4362 = scalar_select %p4361, %s24, 1
          %s4363 = smul.addr %s4362, 4
          %s4364 = smul.addr %s4363, 8
          %s4365 = scalar_lea.vmem %s10, %s4364
        $region84: #{_lambda_.1} parent=79 // pred_fallthru
          _
      $region80: #{_lambda_.1} parent=5 // pred_fallthru
        _
    $region6: #{_lambda_.1} parent=1 // loop_footer
      %s22 = sadd.s32 1, %s18
    $region7: #{_lambda_.1} parent=1 // loop_footer_branch
      %17 = sbr.rel target = $region3
    $region8: #{_lambda_.1} parent=1 // loop_exit
      _
    %4366 = vsyncpa [#allocation3], 1
    %s4367 = scalar_lea.sflag [#allocation3], 1
    %4368 = vsyncpa %s4367, 1
    %4369 = vsyncpa [#allocation5], 1

</llo_original>
